<compile_context>
chip_gen: v6e
topology: v6e:2x2x1
jax: 0.10.0
libtpu: 0.0.40
codegen_flags: <defaults>
</compile_context>

<pallas_src>
import functools
import math

import jax
import jax.numpy as jnp
from jax.experimental import pallas as pl
from jax.experimental.pallas import tpu as pltpu

# ----------------------------- config ---------------------------------------
HIDDEN = 512          # DiagnosticGate(input_dim=512) fixes the fused hidden size
PATCH = 8
IMG_CH = 3
IMG_HW = 32
NUM_PATCHES = (IMG_HW // PATCH) ** 2          # 16 image tokens
PATCH_DIM = IMG_CH * PATCH * PATCH            # 192
PATCH_K = 256                                 # K padded to 256 (zero rows)
VOCAB = 100
EMB_DIM = 128
SEQ_LEN = 8
NUM_CLASSES = 16
CLASS_PAD = 128                               # lane-dense classifier output slab

# packed-weight row offsets inside the (896, 512) slab
_W512_ROWS = PATCH_K + EMB_DIM + HIDDEN       # 896
# packed-bias lane offsets (all multiples of 128)
_O_BI, _O_BT, _O_BQ = 0, 512, 1024
_O_BKV, _O_BOG, _O_BC = 1536, 2560, 3584
BIAS_LEN = 3 * HIDDEN + 2 * (2 * HIDDEN) + CLASS_PAD   # 3712


def _gelu(x):
    # tanh-approximate GELU on the EUP path.
    # TODO(synk): PyTorch nn.GELU defaults to the exact erf form; outputs may
    # differ by ~1e-3 unless the reference uses approximate='tanh'.
    c = math.sqrt(2.0 / math.pi)
    return 0.5 * x * (1.0 + jnp.tanh(c * (x + 0.044715 * x * x * x)))


# --------------------- fully fused forward kernel ----------------------------
def _clinical_vqa_kernel(patch_ref, tok_ref, w512_ref, w1024_ref, wc_ref, b_ref,
                         out_ref, *, bt, n_img, n_txt):
    def mm(x, w, b):
        # bf16 MXU operands, f32 accumulation, f32 elementwise afterwards.
        y = jnp.dot(x.astype(jnp.bfloat16), w, preferred_element_type=jnp.float32)
        return y + b

    # Static, tile-aligned slices of the packed weight slabs / bias vector.
    wi  = w512_ref[0:PATCH_K, :]                         # (256, 512) patch embed
    wt  = w512_ref[PATCH_K:PATCH_K + EMB_DIM, :]         # (128, 512) text proj
    wq  = w512_ref[PATCH_K + EMB_DIM:_W512_ROWS, :]      # (512, 512) query
    wkv = w1024_ref[0:HIDDEN, :]                         # (512, 1024) fused K|V
    wog = w1024_ref[HIDDEN:2 * HIDDEN, :]                # (512, 1024) fused O|O@G
    wc  = wc_ref[...]                                    # (512, 128)  classifier

    bi  = b_ref[:, _O_BI:_O_BI + HIDDEN]
    btx = b_ref[:, _O_BT:_O_BT + HIDDEN]
    bq  = b_ref[:, _O_BQ:_O_BQ + HIDDEN]
    bkv = b_ref[:, _O_BKV:_O_BKV + 2 * HIDDEN]
    bog = b_ref[:, _O_BOG:_O_BOG + 2 * HIDDEN]
    bc  = b_ref[:, _O_BC:_O_BC + CLASS_PAD]

    # --- MedicalImageEncoder: patch embedding + GELU ------ (bt*Ni, 512)
    img = _gelu(mm(patch_ref[...], wi, bi))
    # --- ClinicalTextEncoder: projection + tanh ----------- (bt*Lt, 512)
    txt = jnp.tanh(mm(tok_ref[...], wt, btx))

    # --- MedicalCrossAttention projections (micro-batch folded into M) -------
    q  = mm(img, wq, bq)                                 # (bt*Ni, 512)
    kv = mm(txt, wkv, bkv)                               # (bt*Lt, 1024) fused K/V
    k, v = kv[:, :HIDDEN], kv[:, HIDDEN:]

    qb = q.reshape(bt, n_img, HIDDEN).astype(jnp.bfloat16)
    kb = k.reshape(bt, n_txt, HIDDEN).astype(jnp.bfloat16)
    vb = v.reshape(bt, n_txt, HIDDEN).astype(jnp.bfloat16)

    # scaled dot-product attention: image tokens attend to text tokens
    # TODO(synk): single-head attention assumed, scale = 1/sqrt(512).
    scale = 1.0 / math.sqrt(HIDDEN)
    s = jnp.einsum("bqd,bkd->bqk", qb, kb,
                   preferred_element_type=jnp.float32) * scale   # (bt, Ni, Lt)
    s = s - jnp.max(s, axis=-1, keepdims=True)
    p = jnp.exp(s)
    p = p / jnp.sum(p, axis=-1, keepdims=True)                   # exact softmax
    ctx = jnp.einsum("bqk,bkd->bqd", p.astype(jnp.bfloat16), vb,
                     preferred_element_type=jnp.float32)         # (bt, Ni, 512)

    # --- fused output projection + DiagnosticGate logit ----------------------
    # [fused | gate_logit] = ctx @ [Wo | Wo@Wg] + [bo | bo@Wg + bg]
    fg = mm(ctx.reshape(bt * n_img, HIDDEN), wog, bog)           # (bt*Ni, 1024)
    fused, gate_logit = fg[:, :HIDDEN], fg[:, HIDDEN:]
    gated = fused * jax.nn.sigmoid(gate_logit)                   # (bt*Ni, 512)

    # --- ClinicalClassifier: per-token linear, then mean over image tokens ---
    # mean(x @ W + b) over tokens == mean(x) @ W + b  (linearity), but with a
    # full M = bt*16 GEMM and a 128-lane pool instead of an M = bt GEMM.
    logits_tok = mm(gated, wc, bc)                               # (bt*Ni, 128)
    logits = jnp.mean(logits_tok.reshape(bt, n_img, CLASS_PAD), axis=1)
    out_ref[...] = logits.reshape(1, bt, CLASS_PAD).astype(out_ref.dtype)


def _cost_estimate(b):
    mm2 = lambda m, k, n: 2 * m * k * n
    m_img, m_txt = b * NUM_PATCHES, b * SEQ_LEN
    flops = (mm2(m_img, PATCH_K, HIDDEN)              # patch embed
             + mm2(m_txt, EMB_DIM, HIDDEN)            # text proj
             + mm2(m_img, HIDDEN, HIDDEN)             # Q
             + mm2(m_txt, HIDDEN, 2 * HIDDEN)         # fused K/V
             + 2 * mm2(m_img, HIDDEN, SEQ_LEN)        # scores + ctx
             + mm2(m_img, HIDDEN, 2 * HIDDEN)         # fused O | gate
             + mm2(m_img, HIDDEN, CLASS_PAD))         # classifier
    transcendentals = (2 * m_img * HIDDEN             # gelu-tanh + sigmoid
                       + m_txt * HIDDEN               # tanh
                       + m_img * SEQ_LEN)             # exp
    weight_bytes = (2 * (_W512_ROWS * HIDDEN + (2 * HIDDEN) * (2 * HIDDEN)
                         + HIDDEN * CLASS_PAD) + 4 * BIAS_LEN)
    act_bytes = 4 * (m_img * PATCH_K + m_txt * EMB_DIM + b * CLASS_PAD)
    return pl.CostEstimate(flops=flops, transcendentals=transcendentals,
                           bytes_accessed=weight_bytes + act_bytes)


# ------------------------------ parameters -----------------------------------
def init_params(key):
    ks = jax.random.split(key, 16)

    def w(k, shape, fan_in):
        return jax.random.normal(k, shape, jnp.float32) / math.sqrt(fan_in)

    def bvec(k, n):
        return 0.02 * jax.random.normal(k, (n,), jnp.float32)

    # ----- raw f32 parameters (PyTorch-module equivalents) -----
    img_w = w(ks[0], (PATCH_DIM, HIDDEN), PATCH_DIM)      # patch-embed linear
    img_b = bvec(ks[1], HIDDEN)
    emb   = 0.02 * jax.random.normal(ks[2], (VOCAB, EMB_DIM), jnp.float32)
    txt_w = w(ks[3], (EMB_DIM, HIDDEN), EMB_DIM)
    txt_b = bvec(ks[4], HIDDEN)
    wq, bq = w(ks[5], (HIDDEN, HIDDEN), HIDDEN), bvec(ks[6], HIDDEN)
    wk = w(ks[7], (HIDDEN, HIDDEN), HIDDEN)
    wv = w(ks[8], (HIDDEN, HIDDEN), HIDDEN)
    bk, bv_ = bvec(ks[9], HIDDEN), bvec(ks[10], HIDDEN)
    wo, bo = w(ks[11], (HIDDEN, HIDDEN), HIDDEN), bvec(ks[12], HIDDEN)
    wg, bg = w(ks[13], (HIDDEN, HIDDEN), HIDDEN), bvec(ks[14], HIDDEN)
    wc = w(ks[15], (HIDDEN, NUM_CLASSES), HIDDEN)
    bc = jnp.zeros((NUM_CLASSES,), jnp.float32)

    # ----- kernel-facing packing (done once, offline, in f32 then cast) -----
    # K->512 weights stacked along K: [img_w (zero-padded to 256) ; txt_w ; wq]
    img_w_pad = jnp.zeros((PATCH_K, HIDDEN), jnp.float32).at[:PATCH_DIM].set(img_w)
    w512 = jnp.concatenate([img_w_pad, txt_w, wq], axis=0).astype(jnp.bfloat16)

    # 512->1024 weights stacked along K: [K|V fused ; O | O@G fused]
    wkv = jnp.concatenate([wk, wv], axis=1)                      # (512, 1024)
    wog = jnp.concatenate([wo, wo @ wg], axis=1)                 # (512, 1024)
    w1024 = jnp.concatenate([wkv, wog], axis=0).astype(jnp.bfloat16)

    wc_pad = (jnp.zeros((HIDDEN, CLASS_PAD), jnp.float32)
              .at[:, :NUM_CLASSES].set(wc).astype(jnp.bfloat16))

    bkv = jnp.concatenate([bk, bv_])
    bog = jnp.concatenate([bo, bo @ wg + bg])                    # composed gate bias
    bc_pad = jnp.zeros((CLASS_PAD,), jnp.float32).at[:NUM_CLASSES].set(bc)
    bias = jnp.concatenate([img_b, txt_b, bq, bkv, bog, bc_pad]).reshape(1, BIAS_LEN)

    return {"emb": emb, "w512": w512, "w1024": w1024,
            "wc_pad": wc_pad, "bias": bias}


# ------------------------------ full model -----------------------------------
def clinical_vqa_forward(images, input_ids, params, *, max_microbatch=16):
    B = images.shape[0]
    bt = B if B <= max_microbatch else max_microbatch
    num_steps = -(-B // bt)
    b_pad = num_steps * bt

    # --- glue: NCHW patchify (channel-major patch flattening, Conv2d-style),
    #           zero-pad K 192 -> 256 and batch -> b_pad -----------------------
    hp = IMG_HW // PATCH
    patches = images.reshape(B, IMG_CH, hp, PATCH, hp, PATCH)
    patches = patches.transpose(0, 2, 4, 1, 3, 5).reshape(B, NUM_PATCHES, PATCH_DIM)
    patches = jnp.pad(patches, ((0, b_pad - B), (0, 0), (0, PATCH_K - PATCH_DIM)))
    patches = patches.reshape(b_pad * NUM_PATCHES, PATCH_K)

    # --- glue: token embedding gather ----------------------------------------
    tok_emb = jnp.take(params["emb"], input_ids, axis=0)          # (B, L, E)
    tok_emb = jnp.pad(tok_emb, ((0, b_pad - B), (0, 0), (0, 0)))
    tok_emb = tok_emb.reshape(b_pad * SEQ_LEN, EMB_DIM)

    # --- single fused Pallas kernel over a (micro-)batch grid -----------------
    # Weights use constant index_maps -> fetched once, VMEM-resident across the
    # grid; activations stream through the pipeline per step; batch axis is
    # "parallel" so it shards across both TensorCores on v7x.
    # TODO(synk): torch.utils.checkpoint.checkpoint is a memory/recompute trick
    # with no forward-semantics effect; intentionally not replicated.
    kernel = functools.partial(_clinical_vqa_kernel, bt=bt,
                               n_img=NUM_PATCHES, n_txt=SEQ_LEN)

    grid_spec = pltpu.PrefetchScalarGridSpec(
        num_scalar_prefetch=0,
        grid=(num_steps,),
        in_specs=[
            pl.BlockSpec((bt * NUM_PATCHES, PATCH_K), lambda i: (i, 0)),
            pl.BlockSpec((bt * SEQ_LEN, EMB_DIM), lambda i: (i, 0)),
            pl.BlockSpec((_W512_ROWS, HIDDEN), lambda i: (0, 0)),      # resident
            pl.BlockSpec((2 * HIDDEN, 2 * HIDDEN), lambda i: (0, 0)),  # resident
            pl.BlockSpec((HIDDEN, CLASS_PAD), lambda i: (0, 0)),       # resident
            pl.BlockSpec((1, BIAS_LEN), lambda i: (0, 0)),             # resident
        ],
        out_specs=pl.BlockSpec((1, bt, CLASS_PAD), lambda i: (i, 0, 0)),
    )

    logits_pad = pl.pallas_call(
        kernel,
        grid_spec=grid_spec,
        out_shape=jax.ShapeDtypeStruct((num_steps, bt, CLASS_PAD), jnp.float32),
        compiler_params=pltpu.CompilerParams(dimension_semantics=("parallel",)),
        cost_estimate=_cost_estimate(b_pad),
    )(patches, tok_emb, params["w512"], params["w1024"],
      params["wc_pad"], params["bias"])

    return logits_pad.reshape(b_pad, CLASS_PAD)[:B, :NUM_CLASSES]


if __name__ == "__main__":
    key = jax.random.PRNGKey(0)
    k_img, k_ids, k_par = jax.random.split(key, 3)

    images = jax.random.normal(k_img, (2, IMG_CH, IMG_HW, IMG_HW), jnp.float32)
    input_ids = jax.random.randint(k_ids, (2, SEQ_LEN), 0, VOCAB, jnp.int32)
    params = init_params(k_par)

    logits = clinical_vqa_forward(images, input_ids, params)
    jax.block_until_ready(logits)
    assert logits.shape == (2, NUM_CLASSES) and logits.dtype == jnp.float32
    assert bool(jnp.all(jnp.isfinite(logits)))
    print("KERNEL_OK")
</pallas_src>

<mosaic_0001>
module attributes {stable_mosaic.version = 11 : i64} {
  func.func @_clinical_vqa_kernel(%arg0: i32, %arg1: memref<32x256xf32, #tpu.memory_space<vmem>>, %arg2: memref<16x128xf32, #tpu.memory_space<vmem>>, %arg3: memref<896x512xbf16, #tpu.memory_space<vmem>>, %arg4: memref<1024x1024xbf16, #tpu.memory_space<vmem>>, %arg5: memref<512x128xbf16, #tpu.memory_space<vmem>>, %arg6: memref<1x3712xf32, #tpu.memory_space<vmem>>, %arg7: memref<1x2x128xf32, #tpu.memory_space<vmem>>) attributes {dimension_semantics = [#tpu.dimension_semantics<parallel>], iteration_bounds = array<i64: 1>, scalar_prefetch = 0 : i64, scratch_operands = 0 : i64, tpu.core_type = #tpu.core_type<tc>, window_params = [{transform_indices = @transform_0, window_bounds = array<i64: 32, 256>}, {transform_indices = @transform_1, window_bounds = array<i64: 16, 128>}, {pipeline_mode = #tpu.pipeline_mode<synchronous>, transform_indices = @transform_2, window_bounds = array<i64: 896, 512>}, {pipeline_mode = #tpu.pipeline_mode<synchronous>, transform_indices = @transform_3, window_bounds = array<i64: 1024, 1024>}, {pipeline_mode = #tpu.pipeline_mode<synchronous>, transform_indices = @transform_4, window_bounds = array<i64: 512, 128>}, {pipeline_mode = #tpu.pipeline_mode<synchronous>, transform_indices = @transform_5, window_bounds = array<i64: 1, 3712>}, {transform_indices = @transform_6, window_bounds = array<i64: 1, 2, 128>}]} {
    %c0 = arith.constant 0 : index
    %c0_0 = arith.constant 0 : index
    %0 = vector.load %arg3[%c0, %c0_0] : memref<896x512xbf16, #tpu.memory_space<vmem>>, vector<256x512xbf16>
    %c256 = arith.constant 256 : index
    %c0_1 = arith.constant 0 : index
    %1 = vector.load %arg3[%c256, %c0_1] : memref<896x512xbf16, #tpu.memory_space<vmem>>, vector<128x512xbf16>
    %c384 = arith.constant 384 : index
    %c0_2 = arith.constant 0 : index
    %2 = vector.load %arg3[%c384, %c0_2] : memref<896x512xbf16, #tpu.memory_space<vmem>>, vector<512x512xbf16>
    %c0_3 = arith.constant 0 : index
    %c0_4 = arith.constant 0 : index
    %3 = vector.load %arg4[%c0_3, %c0_4] : memref<1024x1024xbf16, #tpu.memory_space<vmem>>, vector<512x1024xbf16>
    %c512 = arith.constant 512 : index
    %c0_5 = arith.constant 0 : index
    %4 = vector.load %arg4[%c512, %c0_5] : memref<1024x1024xbf16, #tpu.memory_space<vmem>>, vector<512x1024xbf16>
    %c0_6 = arith.constant 0 : index
    %c0_7 = arith.constant 0 : index
    %5 = vector.load %arg5[%c0_6, %c0_7] : memref<512x128xbf16, #tpu.memory_space<vmem>>, vector<512x128xbf16>
    %c0_8 = arith.constant 0 : index
    %c0_9 = arith.constant 0 : index
    %6 = vector.load %arg6[%c0_8, %c0_9] : memref<1x3712xf32, #tpu.memory_space<vmem>>, vector<1x512xf32>
    %c0_10 = arith.constant 0 : index
    %c512_11 = arith.constant 512 : index
    %7 = vector.load %arg6[%c0_10, %c512_11] : memref<1x3712xf32, #tpu.memory_space<vmem>>, vector<1x512xf32>
    %c0_12 = arith.constant 0 : index
    %c1024 = arith.constant 1024 : index
    %8 = vector.load %arg6[%c0_12, %c1024] : memref<1x3712xf32, #tpu.memory_space<vmem>>, vector<1x512xf32>
    %c0_13 = arith.constant 0 : index
    %c1536 = arith.constant 1536 : index
    %9 = vector.load %arg6[%c0_13, %c1536] : memref<1x3712xf32, #tpu.memory_space<vmem>>, vector<1x1024xf32>
    %c0_14 = arith.constant 0 : index
    %c2560 = arith.constant 2560 : index
    %10 = vector.load %arg6[%c0_14, %c2560] : memref<1x3712xf32, #tpu.memory_space<vmem>>, vector<1x1024xf32>
    %c0_15 = arith.constant 0 : index
    %c3584 = arith.constant 3584 : index
    %11 = vector.load %arg6[%c0_15, %c3584] : memref<1x3712xf32, #tpu.memory_space<vmem>>, vector<1x128xf32>
    %c0_16 = arith.constant 0 : index
    %c0_17 = arith.constant 0 : index
    %12 = vector.load %arg1[%c0_16, %c0_17] : memref<32x256xf32, #tpu.memory_space<vmem>>, vector<32x256xf32>
    %13 = arith.truncf %12 : vector<32x256xf32> to vector<32x256xbf16>
    %cst = arith.constant dense<0.000000e+00> : vector<32x512xf32>
    %14 = tpu.matmul %13, %0, %cst {dimension_numbers = #tpu.dot_dimension_numbers<[1], [0], [0], [1], [0, 0, 1, 1], [], []>} : vector<32x256xbf16>, vector<256x512xbf16>, vector<32x512xf32> -> vector<32x512xf32>
    %15 = vector.broadcast %6 : vector<1x512xf32> to vector<32x512xf32>
    %16 = arith.addf %14, %15 : vector<32x512xf32>
    %cst_18 = arith.constant 5.000000e-01 : f32
    %17 = vector.broadcast %cst_18 : f32 to vector<32x512xf32>
    %18 = arith.mulf %17, %16 : vector<32x512xf32>
    %cst_19 = arith.constant 4.471500e-02 : f32
    %19 = vector.broadcast %cst_19 : f32 to vector<32x512xf32>
    %20 = arith.mulf %19, %16 : vector<32x512xf32>
    %21 = arith.mulf %20, %16 : vector<32x512xf32>
    %22 = arith.mulf %21, %16 : vector<32x512xf32>
    %23 = arith.addf %16, %22 : vector<32x512xf32>
    %cst_20 = arith.constant 0.797884583 : f32
    %24 = vector.broadcast %cst_20 : f32 to vector<32x512xf32>
    %25 = arith.mulf %24, %23 : vector<32x512xf32>
    %26 = math.tanh %25 : vector<32x512xf32>
    %cst_21 = arith.constant 1.000000e+00 : f32
    %27 = vector.broadcast %cst_21 : f32 to vector<32x512xf32>
    %28 = arith.addf %27, %26 : vector<32x512xf32>
    %29 = arith.mulf %18, %28 : vector<32x512xf32>
    %c0_22 = arith.constant 0 : index
    %c0_23 = arith.constant 0 : index
    %30 = vector.load %arg2[%c0_22, %c0_23] : memref<16x128xf32, #tpu.memory_space<vmem>>, vector<16x128xf32>
    %31 = arith.truncf %30 : vector<16x128xf32> to vector<16x128xbf16>
    %cst_24 = arith.constant dense<0.000000e+00> : vector<16x512xf32>
    %32 = tpu.matmul %31, %1, %cst_24 {dimension_numbers = #tpu.dot_dimension_numbers<[1], [0], [0], [1], [0, 0, 1, 1], [], []>} : vector<16x128xbf16>, vector<128x512xbf16>, vector<16x512xf32> -> vector<16x512xf32>
    %33 = vector.broadcast %7 : vector<1x512xf32> to vector<16x512xf32>
    %34 = arith.addf %32, %33 : vector<16x512xf32>
    %35 = math.tanh %34 : vector<16x512xf32>
    %36 = arith.truncf %29 : vector<32x512xf32> to vector<32x512xbf16>
    %cst_25 = arith.constant dense<0.000000e+00> : vector<32x512xf32>
    %37 = tpu.matmul %36, %2, %cst_25 {dimension_numbers = #tpu.dot_dimension_numbers<[1], [0], [0], [1], [0, 0, 1, 1], [], []>} : vector<32x512xbf16>, vector<512x512xbf16>, vector<32x512xf32> -> vector<32x512xf32>
    %38 = vector.broadcast %8 : vector<1x512xf32> to vector<32x512xf32>
    %39 = arith.addf %37, %38 : vector<32x512xf32>
    %40 = arith.truncf %35 : vector<16x512xf32> to vector<16x512xbf16>
    %cst_26 = arith.constant dense<0.000000e+00> : vector<16x1024xf32>
    %41 = tpu.matmul %40, %3, %cst_26 {dimension_numbers = #tpu.dot_dimension_numbers<[1], [0], [0], [1], [0, 0, 1, 1], [], []>} : vector<16x512xbf16>, vector<512x1024xbf16>, vector<16x1024xf32> -> vector<16x1024xf32>
    %42 = vector.broadcast %9 : vector<1x1024xf32> to vector<16x1024xf32>
    %43 = arith.addf %41, %42 : vector<16x1024xf32>
    %44 = vector.extract_strided_slice %43 {offsets = [0, 0], sizes = [16, 512], strides = [1, 1]} : vector<16x1024xf32> to vector<16x512xf32>
    %45 = vector.extract_strided_slice %43 {offsets = [0, 512], sizes = [16, 512], strides = [1, 1]} : vector<16x1024xf32> to vector<16x512xf32>
    %46 = vector.shape_cast %39 : vector<32x512xf32> to vector<2x16x512xf32>
    %47 = arith.truncf %46 : vector<2x16x512xf32> to vector<2x16x512xbf16>
    %48 = vector.shape_cast %44 : vector<16x512xf32> to vector<2x8x512xf32>
    %49 = arith.truncf %48 : vector<2x8x512xf32> to vector<2x8x512xbf16>
    %50 = vector.shape_cast %45 : vector<16x512xf32> to vector<2x8x512xf32>
    %51 = arith.truncf %50 : vector<2x8x512xf32> to vector<2x8x512xbf16>
    "tpu.trace_start"() <{level = 10 : i32, message = "bqd,bkd->bqk"}> : () -> ()
    %cst_27 = arith.constant dense<0.000000e+00> : vector<2x16x8xf32>
    %52 = tpu.matmul %47, %49, %cst_27 {dimension_numbers = #tpu.dot_dimension_numbers<[2], [2], [1], [1], [0, 0, 0, 1, 1, 1], [0], [0]>} : vector<2x16x512xbf16>, vector<2x8x512xbf16>, vector<2x16x8xf32> -> vector<2x16x8xf32>
    "tpu.trace_stop"() : () -> ()
    %cst_28 = arith.constant 0.0441941731 : f32
    %53 = vector.broadcast %cst_28 : f32 to vector<2x16x8xf32>
    %54 = arith.mulf %52, %53 : vector<2x16x8xf32>
    %cst_29 = arith.constant dense<0xFF800000> : vector<2x16xf32>
    %55 = vector.multi_reduction <maximumf>, %54, %cst_29 [2] : vector<2x16x8xf32> to vector<2x16xf32>
    %56 = vector.shape_cast %55 : vector<2x16xf32> to vector<2x16x1xf32>
    %57 = vector.broadcast %56 : vector<2x16x1xf32> to vector<2x16x8xf32>
    %58 = arith.subf %54, %57 : vector<2x16x8xf32>
    %59 = math.exp %58 : vector<2x16x8xf32>
    %cst_30 = arith.constant dense<0.000000e+00> : vector<2x16xf32>
    %60 = vector.multi_reduction <add>, %59, %cst_30 [2] : vector<2x16x8xf32> to vector<2x16xf32>
    %61 = vector.shape_cast %60 : vector<2x16xf32> to vector<2x16x1xf32>
    %62 = vector.broadcast %61 : vector<2x16x1xf32> to vector<2x16x8xf32>
    %63 = arith.divf %59, %62 : vector<2x16x8xf32>
    %64 = arith.truncf %63 : vector<2x16x8xf32> to vector<2x16x8xbf16>
    "tpu.trace_start"() <{level = 10 : i32, message = "bqk,bkd->bqd"}> : () -> ()
    %cst_31 = arith.constant dense<0.000000e+00> : vector<2x16x512xf32>
    %65 = tpu.matmul %64, %51, %cst_31 {dimension_numbers = #tpu.dot_dimension_numbers<[2], [1], [1], [2], [0, 0, 0, 1, 1, 2], [0], [0]>} : vector<2x16x8xbf16>, vector<2x8x512xbf16>, vector<2x16x512xf32> -> vector<2x16x512xf32>
    "tpu.trace_stop"() : () -> ()
    %66 = vector.shape_cast %65 : vector<2x16x512xf32> to vector<32x512xf32>
    %67 = arith.truncf %66 : vector<32x512xf32> to vector<32x512xbf16>
    %cst_32 = arith.constant dense<0.000000e+00> : vector<32x1024xf32>
    %68 = tpu.matmul %67, %4, %cst_32 {dimension_numbers = #tpu.dot_dimension_numbers<[1], [0], [0], [1], [0, 0, 1, 1], [], []>} : vector<32x512xbf16>, vector<512x1024xbf16>, vector<32x1024xf32> -> vector<32x1024xf32>
    %69 = vector.broadcast %10 : vector<1x1024xf32> to vector<32x1024xf32>
    %70 = arith.addf %68, %69 : vector<32x1024xf32>
    %71 = vector.extract_strided_slice %70 {offsets = [0, 0], sizes = [32, 512], strides = [1, 1]} : vector<32x1024xf32> to vector<32x512xf32>
    %72 = vector.extract_strided_slice %70 {offsets = [0, 512], sizes = [32, 512], strides = [1, 1]} : vector<32x1024xf32> to vector<32x512xf32>
    %73 = arith.negf %72 : vector<32x512xf32>
    %74 = math.exp %73 : vector<32x512xf32>
    %cst_33 = arith.constant 1.000000e+00 : f32
    %75 = vector.broadcast %cst_33 : f32 to vector<32x512xf32>
    %76 = arith.addf %75, %74 : vector<32x512xf32>
    %77 = arith.divf %75, %76 : vector<32x512xf32>
    %78 = arith.mulf %71, %77 : vector<32x512xf32>
    %79 = arith.truncf %78 : vector<32x512xf32> to vector<32x512xbf16>
    %cst_34 = arith.constant dense<0.000000e+00> : vector<32x128xf32>
    %80 = tpu.matmul %79, %5, %cst_34 {dimension_numbers = #tpu.dot_dimension_numbers<[1], [0], [0], [1], [0, 0, 1, 1], [], []>} : vector<32x512xbf16>, vector<512x128xbf16>, vector<32x128xf32> -> vector<32x128xf32>
    %81 = vector.broadcast %11 : vector<1x128xf32> to vector<32x128xf32>
    %82 = arith.addf %80, %81 : vector<32x128xf32>
    %83 = vector.shape_cast %82 : vector<32x128xf32> to vector<2x16x128xf32>
    %cst_35 = arith.constant dense<0.000000e+00> : vector<2x128xf32>
    %84 = vector.multi_reduction <add>, %83, %cst_35 [1] : vector<2x16x128xf32> to vector<2x128xf32>
    %cst_36 = arith.constant 1.600000e+01 : f32
    %85 = vector.broadcast %cst_36 : f32 to vector<2x128xf32>
    %86 = arith.divf %84, %85 : vector<2x128xf32>
    %87 = vector.shape_cast %86 : vector<2x128xf32> to vector<1x2x128xf32>
    %c0_37 = arith.constant 0 : index
    %c0_38 = arith.constant 0 : index
    %c0_39 = arith.constant 0 : index
    %88 = vector.load %arg7[%c0_37, %c0_38, %c0_39] : memref<1x2x128xf32, #tpu.memory_space<vmem>>, vector<1x2x128xf32>
    tpu.vector_store %arg7[%c0_37, %c0_38, %c0_39], %87 {strides = array<i32>} : memref<1x2x128xf32, #tpu.memory_space<vmem>>, vector<1x2x128xf32>,
    return
  }
  func.func @transform_0(%arg0: i32) -> (i32, i32) {
    %c0_i32 = arith.constant 0 : i32
    %c0_i32_0 = arith.constant 0 : i32
    return %arg0, %c0_i32 : i32, i32
  }
  func.func @transform_1(%arg0: i32) -> (i32, i32) {
    %c0_i32 = arith.constant 0 : i32
    %c0_i32_0 = arith.constant 0 : i32
    return %arg0, %c0_i32 : i32, i32
  }
  func.func @transform_2(%arg0: i32) -> (i32, i32) {
    %c0_i32 = arith.constant 0 : i32
    %c0_i32_0 = arith.constant 0 : i32
    %c0_i32_1 = arith.constant 0 : i32
    return %c0_i32, %c0_i32_0 : i32, i32
  }
  func.func @transform_3(%arg0: i32) -> (i32, i32) {
    %c0_i32 = arith.constant 0 : i32
    %c0_i32_0 = arith.constant 0 : i32
    %c0_i32_1 = arith.constant 0 : i32
    return %c0_i32, %c0_i32_0 : i32, i32
  }
  func.func @transform_4(%arg0: i32) -> (i32, i32) {
    %c0_i32 = arith.constant 0 : i32
    %c0_i32_0 = arith.constant 0 : i32
    %c0_i32_1 = arith.constant 0 : i32
    return %c0_i32, %c0_i32_0 : i32, i32
  }
  func.func @transform_5(%arg0: i32) -> (i32, i32) {
    %c0_i32 = arith.constant 0 : i32
    %c0_i32_0 = arith.constant 0 : i32
    %c0_i32_1 = arith.constant 0 : i32
    return %c0_i32, %c0_i32_0 : i32, i32
  }
  func.func @transform_6(%arg0: i32) -> (i32, i32, i32) {
    %c0_i32 = arith.constant 0 : i32
    %c0_i32_0 = arith.constant 0 : i32
    %c0_i32_1 = arith.constant 0 : i32
    return %arg0, %c0_i32, %c0_i32_0 : i32, i32, i32
  }
}

</mosaic_0001>

<llo_original>
// kernel: tpu_custom_call.1
$region0: #{tpu_custom_call.1}
  #allocation0 [shape = 'u32[]', space=smem, size = 0x4, offset = 0x4, fixed_abs, tag = 'smem constant byte address 0x4 - core index']
  #allocation1 [shape = 'u32[144,128]{1,0:T(1,128)}', space=vmem, size = 0x12000, scoped, tag = 'internal scratch']
  %s0 = inlined_call_operand.hbm [shape: f32[32,256], index: 0, kind: input, shape index: {}]
  %s1 = inlined_call_operand.hbm [shape: f32[16,128], index: 1, kind: input, shape index: {}]
  %s2 = inlined_call_operand.hbm [shape: bf16[896,512], index: 2, kind: input, shape index: {}]
  %s3 = inlined_call_operand.hbm [shape: bf16[1024,1024], index: 3, kind: input, shape index: {}]
  %s4 = inlined_call_operand.hbm [shape: bf16[512,128], index: 4, kind: input, shape index: {}]
  %s5 = inlined_call_operand.hbm [shape: f32[1,3712], index: 5, kind: input, shape index: {}]
  %s6 = inlined_call_operand.hbm [shape: f32[1,2,128], index: 6, kind: output, shape index: {}]
  %s7 = sld [smem:[#allocation0]]
  $region58: #{tpu_custom_call.1} parent=0
    _
  %s9 = ssub.s32 1, %s7
  %s10 = scalar_select 0, %s9, %s7
  $region1: #{tpu_custom_call.1} parent=0
    #allocation2 [shape = 'u8[32768]{0}', space=vmem, size = 0x8000, scoped, tag = 'input window, operand 0, single buffered']
    #allocation3 [shape = 's32[1]{0}', space=sflag, size = 0x4, scoped, tag = 'scoped memory for tpu_custom_call.1']
    #allocation4 [shape = 's32[1]{0}', space=sflag, size = 0x4, scoped, tag = 'scoped memory for tpu_custom_call.1']
    #allocation5 [shape = 'u8[8192]{0}', space=vmem, size = 0x2000, scoped, tag = 'input window, operand 1, single buffered']
    #allocation6 [shape = 's32[1]{0}', space=sflag, size = 0x4, scoped, tag = 'scoped memory for tpu_custom_call.1']
    #allocation7 [shape = 'u8[917504]{0}', space=vmem, size = 0xe0000, scoped, tag = 'input window, operand 2, single buffered']
    #allocation8 [shape = 'u8[2097152]{0}', space=vmem, size = 0x200000, scoped, tag = 'input window, operand 3, single buffered']
    #allocation9 [shape = 's32[1]{0}', space=sflag, size = 0x4, scoped, tag = 'scoped memory for tpu_custom_call.1']
    #allocation10 [shape = 'u8[131072]{0}', space=vmem, size = 0x20000, scoped, tag = 'input window, operand 4, single buffered']
    #allocation11 [shape = 'u8[14848]{0}', space=vmem, size = 0x3c00, scoped, tag = 'input window, operand 5, single buffered']
    #allocation12 [shape = 's32[1]{0}', space=sflag, size = 0x4, scoped, tag = 'scoped memory for tpu_custom_call.1']
    #allocation13 [shape = 'u8[1024]{0}', space=vmem, size = 0x400, scoped, tag = 'output window, operand 0, single buffered']
    %11 = vsyncpa [#allocation3], 0
    %12 = vsyncpa [#allocation6], 0
    %13 = vsyncpa [#allocation9], 0
    %14 = vsyncpa [#allocation12], 0
    %15 = vsyncpa [#allocation4], 0
    // Predicated region
    $region2: #{tpu_custom_call.1} parent=1 // pred_check
      _
    $region3: #{tpu_custom_call.1} parent=1 // pred_check_branch
      %17 = sbr.rel (0) target = $region5
    $region4: #{tpu_custom_call.1} parent=1 // pred_region
      %s19 = ssub.s32 1024, 1024
      %20 = vsyncadd [#allocation3], %s19
      %s21 = sshll.u32 [#allocation2], 4
      %s22 = int_to_ptr.vmem [resolvable:$true] %s21
      %27 = dma.hbm_to_vmem [thread:$0]  %s0, 1024, %s22, [#allocation3], 256, 256, 16
    $region5: #{tpu_custom_call.1} parent=1 // pred_fallthru
      _
    // Predicated region
    $region6: #{tpu_custom_call.1} parent=1 // pred_check
      _
    $region7: #{tpu_custom_call.1} parent=1 // pred_check_branch
      %29 = sbr.rel (0) target = $region9
    $region8: #{tpu_custom_call.1} parent=1 // pred_region
      %s31 = ssub.s32 256, 256
      %32 = vsyncadd [#allocation6], %s31
      %s33 = sshll.u32 [#allocation5], 4
      %s34 = int_to_ptr.vmem [resolvable:$true] %s33
      %39 = dma.hbm_to_vmem [thread:$0]  %s1, 256, %s34, [#allocation6], 128, 128, 8
    $region9: #{tpu_custom_call.1} parent=1 // pred_fallthru
      _
    // Predicated region
    $region10: #{tpu_custom_call.1} parent=1 // pred_check
      _
    $region11: #{tpu_custom_call.1} parent=1 // pred_check_branch
      %41 = sbr.rel (0) target = $region13
    $region12: #{tpu_custom_call.1} parent=1 // pred_region
      %s43 = ssub.s32 28672, 28672
      %44 = vsyncadd [#allocation6], %s43
      %s45 = sshll.u32 [#allocation7], 4
      %s46 = int_to_ptr.vmem [resolvable:$true] %s45
      %51 = dma.hbm_to_vmem [thread:$0]  %s2, 28672, %s46, [#allocation6], 256, 256, 16
    $region13: #{tpu_custom_call.1} parent=1 // pred_fallthru
      _
    // Predicated region
    $region14: #{tpu_custom_call.1} parent=1 // pred_check
      _
    $region15: #{tpu_custom_call.1} parent=1 // pred_check_branch
      %53 = sbr.rel (0) target = $region17
    $region16: #{tpu_custom_call.1} parent=1 // pred_region
      %s55 = ssub.s32 65536, 65536
      %56 = vsyncadd [#allocation9], %s55
      %s57 = sshll.u32 [#allocation8], 4
      %s58 = int_to_ptr.vmem [resolvable:$true] %s57
      %63 = dma.hbm_to_vmem [thread:$0]  %s3, 65536, %s58, [#allocation9], 512, 512, 32
    $region17: #{tpu_custom_call.1} parent=1 // pred_fallthru
      _
    // Predicated region
    $region18: #{tpu_custom_call.1} parent=1 // pred_check
      _
    $region19: #{tpu_custom_call.1} parent=1 // pred_check_branch
      %65 = sbr.rel (0) target = $region21
    $region20: #{tpu_custom_call.1} parent=1 // pred_region
      %s67 = ssub.s32 4096, 4096
      %68 = vsyncadd [#allocation9], %s67
      %s69 = sshll.u32 [#allocation10], 4
      %s70 = int_to_ptr.vmem [resolvable:$true] %s69
      %75 = dma.hbm_to_vmem [thread:$0]  %s4, 4096, %s70, [#allocation9], 64, 64, 4
    $region21: #{tpu_custom_call.1} parent=1 // pred_fallthru
      _
    // Predicated region
    $region22: #{tpu_custom_call.1} parent=1 // pred_check
      _
    $region23: #{tpu_custom_call.1} parent=1 // pred_check_branch
      %77 = sbr.rel (0) target = $region25
    $region24: #{tpu_custom_call.1} parent=1 // pred_region
      %s79 = ssub.s32 464, 464
      %80 = vsyncadd [#allocation12], %s79
      %s82 = sshll.u32 [#allocation11], 4
      %s83 = int_to_ptr.vmem [resolvable:$true] %s82
      %85 = dma.hbm_to_vmem [thread:$0]  %s5, 464, %s83, [#allocation12]
    $region25: #{tpu_custom_call.1} parent=1 // pred_fallthru
      _
    // Predicated region
    $region26: #{tpu_custom_call.1} parent=1 // pred_check
      _
    $region27: #{tpu_custom_call.1} parent=1 // pred_check_branch
      %87 = sbr.rel (0) target = $region29
    $region28: #{tpu_custom_call.1} parent=1 // pred_region
      %88 = dma.done [#allocation3], 1024
    $region29: #{tpu_custom_call.1} parent=1 // pred_fallthru
      _
    // Predicated region
    $region30: #{tpu_custom_call.1} parent=1 // pred_check
      _
    $region31: #{tpu_custom_call.1} parent=1 // pred_check_branch
      %90 = sbr.rel (0) target = $region33
    $region32: #{tpu_custom_call.1} parent=1 // pred_region
      %91 = dma.done [#allocation6], 256
    $region33: #{tpu_custom_call.1} parent=1 // pred_fallthru
      _
    // Predicated region
    $region34: #{tpu_custom_call.1} parent=1 // pred_check
      _
    $region35: #{tpu_custom_call.1} parent=1 // pred_check_branch
      %93 = sbr.rel (0) target = $region37
    $region36: #{tpu_custom_call.1} parent=1 // pred_region
      %94 = dma.done [#allocation6], 28672
    $region37: #{tpu_custom_call.1} parent=1 // pred_fallthru
      _
    // Predicated region
    $region38: #{tpu_custom_call.1} parent=1 // pred_check
      _
    $region39: #{tpu_custom_call.1} parent=1 // pred_check_branch
      %96 = sbr.rel (0) target = $region41
    $region40: #{tpu_custom_call.1} parent=1 // pred_region
      %97 = dma.done [#allocation9], 65536
    $region41: #{tpu_custom_call.1} parent=1 // pred_fallthru
      _
    // Predicated region
    $region42: #{tpu_custom_call.1} parent=1 // pred_check
      _
    $region43: #{tpu_custom_call.1} parent=1 // pred_check_branch
      %99 = sbr.rel (0) target = $region45
    $region44: #{tpu_custom_call.1} parent=1 // pred_region
      %100 = dma.done [#allocation9], 4096
    $region45: #{tpu_custom_call.1} parent=1 // pred_fallthru
      _
    // Predicated region
    $region46: #{tpu_custom_call.1} parent=1 // pred_check
      _
    $region47: #{tpu_custom_call.1} parent=1 // pred_check_branch
      %102 = sbr.rel (0) target = $region49
    $region48: #{tpu_custom_call.1} parent=1 // pred_region
      %103 = dma.done [#allocation12], 464
    $region49: #{tpu_custom_call.1} parent=1 // pred_fallthru
      _
    %v105 = vld [vmem:[#allocation7] sm:$0xff]
    %v106 = vld [vmem:[#allocation7 + $0x8] sm:$0xff]
    %v107 = vld [vmem:[#allocation7 + $0x10] sm:$0xff]
    %v108 = vld [vmem:[#allocation7 + $0x18] sm:$0xff]
    %v109 = vld [vmem:[#allocation7 + $0x20] sm:$0xff]
    %v110 = vld [vmem:[#allocation7 + $0x28] sm:$0xff]
    %v111 = vld [vmem:[#allocation7 + $0x30] sm:$0xff]
    %v112 = vld [vmem:[#allocation7 + $0x38] sm:$0xff]
    %v113 = vld [vmem:[#allocation7 + $0x40] sm:$0xff]
    %v114 = vld [vmem:[#allocation7 + $0x48] sm:$0xff]
    %v115 = vld [vmem:[#allocation7 + $0x50] sm:$0xff]
    %v116 = vld [vmem:[#allocation7 + $0x58] sm:$0xff]
    %v117 = vld [vmem:[#allocation7 + $0x60] sm:$0xff]
    %v118 = vld [vmem:[#allocation7 + $0x68] sm:$0xff]
    %v119 = vld [vmem:[#allocation7 + $0x70] sm:$0xff]
    %v120 = vld [vmem:[#allocation7 + $0x78] sm:$0xff]
    %v121 = vld [vmem:[#allocation7 + $0x80] sm:$0xff]
    %v122 = vld [vmem:[#allocation7 + $0x88] sm:$0xff]
    %v123 = vld [vmem:[#allocation7 + $0x90] sm:$0xff]
    %v124 = vld [vmem:[#allocation7 + $0x98] sm:$0xff]
    %v125 = vld [vmem:[#allocation7 + $0xa0] sm:$0xff]
    %v126 = vld [vmem:[#allocation7 + $0xa8] sm:$0xff]
    %v127 = vld [vmem:[#allocation7 + $0xb0] sm:$0xff]
    %v128 = vld [vmem:[#allocation7 + $0xb8] sm:$0xff]
    %v129 = vld [vmem:[#allocation7 + $0xc0] sm:$0xff]
    %v130 = vld [vmem:[#allocation7 + $0xc8] sm:$0xff]
    %v131 = vld [vmem:[#allocation7 + $0xd0] sm:$0xff]
    %v132 = vld [vmem:[#allocation7 + $0xd8] sm:$0xff]
    %v133 = vld [vmem:[#allocation7 + $0xe0] sm:$0xff]
    %v134 = vld [vmem:[#allocation7 + $0xe8] sm:$0xff]
    %v135 = vld [vmem:[#allocation7 + $0xf0] sm:$0xff]
    %v136 = vld [vmem:[#allocation7 + $0xf8] sm:$0xff]
    %v137 = vld [vmem:[#allocation7 + $0x100] sm:$0xff]
    %v138 = vld [vmem:[#allocation7 + $0x108] sm:$0xff]
    %v139 = vld [vmem:[#allocation7 + $0x110] sm:$0xff]
    %v140 = vld [vmem:[#allocation7 + $0x118] sm:$0xff]
    %v141 = vld [vmem:[#allocation7 + $0x120] sm:$0xff]
    %v142 = vld [vmem:[#allocation7 + $0x128] sm:$0xff]
    %v143 = vld [vmem:[#allocation7 + $0x130] sm:$0xff]
    %v144 = vld [vmem:[#allocation7 + $0x138] sm:$0xff]
    %v145 = vld [vmem:[#allocation7 + $0x140] sm:$0xff]
    %v146 = vld [vmem:[#allocation7 + $0x148] sm:$0xff]
    %v147 = vld [vmem:[#allocation7 + $0x150] sm:$0xff]
    %v148 = vld [vmem:[#allocation7 + $0x158] sm:$0xff]
    %v149 = vld [vmem:[#allocation7 + $0x160] sm:$0xff]
    %v150 = vld [vmem:[#allocation7 + $0x168] sm:$0xff]
    %v151 = vld [vmem:[#allocation7 + $0x170] sm:$0xff]
    %v152 = vld [vmem:[#allocation7 + $0x178] sm:$0xff]
    %v153 = vld [vmem:[#allocation7 + $0x180] sm:$0xff]
    %v154 = vld [vmem:[#allocation7 + $0x188] sm:$0xff]
    %v155 = vld [vmem:[#allocation7 + $0x190] sm:$0xff]
    %v156 = vld [vmem:[#allocation7 + $0x198] sm:$0xff]
    %v157 = vld [vmem:[#allocation7 + $0x1a0] sm:$0xff]
    %v158 = vld [vmem:[#allocation7 + $0x1a8] sm:$0xff]
    %v159 = vld [vmem:[#allocation7 + $0x1b0] sm:$0xff]
    %v160 = vld [vmem:[#allocation7 + $0x1b8] sm:$0xff]
    %v161 = vld [vmem:[#allocation7 + $0x1c0] sm:$0xff]
    %v162 = vld [vmem:[#allocation7 + $0x1c8] sm:$0xff]
    %v163 = vld [vmem:[#allocation7 + $0x1d0] sm:$0xff]
    %v164 = vld [vmem:[#allocation7 + $0x1d8] sm:$0xff]
    %v165 = vld [vmem:[#allocation7 + $0x1e0] sm:$0xff]
    %v166 = vld [vmem:[#allocation7 + $0x1e8] sm:$0xff]
    %v167 = vld [vmem:[#allocation7 + $0x1f0] sm:$0xff]
    %v168 = vld [vmem:[#allocation7 + $0x1f8] sm:$0xff]
    %v169 = vld [vmem:[#allocation7 + $0x200] sm:$0xff]
    %v170 = vld [vmem:[#allocation7 + $0x208] sm:$0xff]
    %v171 = vld [vmem:[#allocation7 + $0x210] sm:$0xff]
    %v172 = vld [vmem:[#allocation7 + $0x218] sm:$0xff]
    %v173 = vld [vmem:[#allocation7 + $0x220] sm:$0xff]
    %v174 = vld [vmem:[#allocation7 + $0x228] sm:$0xff]
    %v175 = vld [vmem:[#allocation7 + $0x230] sm:$0xff]
    %v176 = vld [vmem:[#allocation7 + $0x238] sm:$0xff]
    %v177 = vld [vmem:[#allocation7 + $0x240] sm:$0xff]
    %v178 = vld [vmem:[#allocation7 + $0x248] sm:$0xff]
    %v179 = vld [vmem:[#allocation7 + $0x250] sm:$0xff]
    %v180 = vld [vmem:[#allocation7 + $0x258] sm:$0xff]
    %v181 = vld [vmem:[#allocation7 + $0x260] sm:$0xff]
    %v182 = vld [vmem:[#allocation7 + $0x268] sm:$0xff]
    %v183 = vld [vmem:[#allocation7 + $0x270] sm:$0xff]
    %v184 = vld [vmem:[#allocation7 + $0x278] sm:$0xff]
    %v185 = vld [vmem:[#allocation7 + $0x280] sm:$0xff]
    %v186 = vld [vmem:[#allocation7 + $0x288] sm:$0xff]
    %v187 = vld [vmem:[#allocation7 + $0x290] sm:$0xff]
    %v188 = vld [vmem:[#allocation7 + $0x298] sm:$0xff]
    %v189 = vld [vmem:[#allocation7 + $0x2a0] sm:$0xff]
    %v190 = vld [vmem:[#allocation7 + $0x2a8] sm:$0xff]
    %v191 = vld [vmem:[#allocation7 + $0x2b0] sm:$0xff]
    %v192 = vld [vmem:[#allocation7 + $0x2b8] sm:$0xff]
    %v193 = vld [vmem:[#allocation7 + $0x2c0] sm:$0xff]
    %v194 = vld [vmem:[#allocation7 + $0x2c8] sm:$0xff]
    %v195 = vld [vmem:[#allocation7 + $0x2d0] sm:$0xff]
    %v196 = vld [vmem:[#allocation7 + $0x2d8] sm:$0xff]
    %v197 = vld [vmem:[#allocation7 + $0x2e0] sm:$0xff]
    %v198 = vld [vmem:[#allocation7 + $0x2e8] sm:$0xff]
    %v199 = vld [vmem:[#allocation7 + $0x2f0] sm:$0xff]
    %v200 = vld [vmem:[#allocation7 + $0x2f8] sm:$0xff]
    %v201 = vld [vmem:[#allocation7 + $0x300] sm:$0xff]
    %v202 = vld [vmem:[#allocation7 + $0x308] sm:$0xff]
    %v203 = vld [vmem:[#allocation7 + $0x310] sm:$0xff]
    %v204 = vld [vmem:[#allocation7 + $0x318] sm:$0xff]
    %v205 = vld [vmem:[#allocation7 + $0x320] sm:$0xff]
    %v206 = vld [vmem:[#allocation7 + $0x328] sm:$0xff]
    %v207 = vld [vmem:[#allocation7 + $0x330] sm:$0xff]
    %v208 = vld [vmem:[#allocation7 + $0x338] sm:$0xff]
    %v209 = vld [vmem:[#allocation7 + $0x340] sm:$0xff]
    %v210 = vld [vmem:[#allocation7 + $0x348] sm:$0xff]
    %v211 = vld [vmem:[#allocation7 + $0x350] sm:$0xff]
    %v212 = vld [vmem:[#allocation7 + $0x358] sm:$0xff]
    %v213 = vld [vmem:[#allocation7 + $0x360] sm:$0xff]
    %v214 = vld [vmem:[#allocation7 + $0x368] sm:$0xff]
    %v215 = vld [vmem:[#allocation7 + $0x370] sm:$0xff]
    %v216 = vld [vmem:[#allocation7 + $0x378] sm:$0xff]
    %v217 = vld [vmem:[#allocation7 + $0x380] sm:$0xff]
    %v218 = vld [vmem:[#allocation7 + $0x388] sm:$0xff]
    %v219 = vld [vmem:[#allocation7 + $0x390] sm:$0xff]
    %v220 = vld [vmem:[#allocation7 + $0x398] sm:$0xff]
    %v221 = vld [vmem:[#allocation7 + $0x3a0] sm:$0xff]
    %v222 = vld [vmem:[#allocation7 + $0x3a8] sm:$0xff]
    %v223 = vld [vmem:[#allocation7 + $0x3b0] sm:$0xff]
    %v224 = vld [vmem:[#allocation7 + $0x3b8] sm:$0xff]
    %v225 = vld [vmem:[#allocation7 + $0x3c0] sm:$0xff]
    %v226 = vld [vmem:[#allocation7 + $0x3c8] sm:$0xff]
    %v227 = vld [vmem:[#allocation7 + $0x3d0] sm:$0xff]
    %v228 = vld [vmem:[#allocation7 + $0x3d8] sm:$0xff]
    %v229 = vld [vmem:[#allocation7 + $0x3e0] sm:$0xff]
    %v230 = vld [vmem:[#allocation7 + $0x3e8] sm:$0xff]
    %v231 = vld [vmem:[#allocation7 + $0x3f0] sm:$0xff]
    %v232 = vld [vmem:[#allocation7 + $0x3f8] sm:$0xff]
    %v233 = vld [vmem:[#allocation7 + $0x400] sm:$0xff]
    %v234 = vld [vmem:[#allocation7 + $0x408] sm:$0xff]
    %v235 = vld [vmem:[#allocation7 + $0x410] sm:$0xff]
    %v236 = vld [vmem:[#allocation7 + $0x418] sm:$0xff]
    %v237 = vld [vmem:[#allocation7 + $0x420] sm:$0xff]
    %v238 = vld [vmem:[#allocation7 + $0x428] sm:$0xff]
    %v239 = vld [vmem:[#allocation7 + $0x430] sm:$0xff]
    %v240 = vld [vmem:[#allocation7 + $0x438] sm:$0xff]
    %v241 = vld [vmem:[#allocation7 + $0x440] sm:$0xff]
    %v242 = vld [vmem:[#allocation7 + $0x448] sm:$0xff]
    %v243 = vld [vmem:[#allocation7 + $0x450] sm:$0xff]
    %v244 = vld [vmem:[#allocation7 + $0x458] sm:$0xff]
    %v245 = vld [vmem:[#allocation7 + $0x460] sm:$0xff]
    %v246 = vld [vmem:[#allocation7 + $0x468] sm:$0xff]
    %v247 = vld [vmem:[#allocation7 + $0x470] sm:$0xff]
    %v248 = vld [vmem:[#allocation7 + $0x478] sm:$0xff]
    %v249 = vld [vmem:[#allocation7 + $0x480] sm:$0xff]
    %v250 = vld [vmem:[#allocation7 + $0x488] sm:$0xff]
    %v251 = vld [vmem:[#allocation7 + $0x490] sm:$0xff]
    %v252 = vld [vmem:[#allocation7 + $0x498] sm:$0xff]
    %v253 = vld [vmem:[#allocation7 + $0x4a0] sm:$0xff]
    %v254 = vld [vmem:[#allocation7 + $0x4a8] sm:$0xff]
    %v255 = vld [vmem:[#allocation7 + $0x4b0] sm:$0xff]
    %v256 = vld [vmem:[#allocation7 + $0x4b8] sm:$0xff]
    %v257 = vld [vmem:[#allocation7 + $0x4c0] sm:$0xff]
    %v258 = vld [vmem:[#allocation7 + $0x4c8] sm:$0xff]
    %v259 = vld [vmem:[#allocation7 + $0x4d0] sm:$0xff]
    %v260 = vld [vmem:[#allocation7 + $0x4d8] sm:$0xff]
    %v261 = vld [vmem:[#allocation7 + $0x4e0] sm:$0xff]
    %v262 = vld [vmem:[#allocation7 + $0x4e8] sm:$0xff]
    %v263 = vld [vmem:[#allocation7 + $0x4f0] sm:$0xff]
    %v264 = vld [vmem:[#allocation7 + $0x4f8] sm:$0xff]
    %v265 = vld [vmem:[#allocation7 + $0x500] sm:$0xff]
    %v266 = vld [vmem:[#allocation7 + $0x508] sm:$0xff]
    %v267 = vld [vmem:[#allocation7 + $0x510] sm:$0xff]
    %v268 = vld [vmem:[#allocation7 + $0x518] sm:$0xff]
    %v269 = vld [vmem:[#allocation7 + $0x520] sm:$0xff]
    %v270 = vld [vmem:[#allocation7 + $0x528] sm:$0xff]
    %v271 = vld [vmem:[#allocation7 + $0x530] sm:$0xff]
    %v272 = vld [vmem:[#allocation7 + $0x538] sm:$0xff]
    %v273 = vld [vmem:[#allocation7 + $0x540] sm:$0xff]
    %v274 = vld [vmem:[#allocation7 + $0x548] sm:$0xff]
    %v275 = vld [vmem:[#allocation7 + $0x550] sm:$0xff]
    %v276 = vld [vmem:[#allocation7 + $0x558] sm:$0xff]
    %v277 = vld [vmem:[#allocation7 + $0x560] sm:$0xff]
    %v278 = vld [vmem:[#allocation7 + $0x568] sm:$0xff]
    %v279 = vld [vmem:[#allocation7 + $0x570] sm:$0xff]
    %v280 = vld [vmem:[#allocation7 + $0x578] sm:$0xff]
    %v281 = vld [vmem:[#allocation7 + $0x580] sm:$0xff]
    %v282 = vld [vmem:[#allocation7 + $0x588] sm:$0xff]
    %v283 = vld [vmem:[#allocation7 + $0x590] sm:$0xff]
    %v284 = vld [vmem:[#allocation7 + $0x598] sm:$0xff]
    %v285 = vld [vmem:[#allocation7 + $0x5a0] sm:$0xff]
    %v286 = vld [vmem:[#allocation7 + $0x5a8] sm:$0xff]
    %v287 = vld [vmem:[#allocation7 + $0x5b0] sm:$0xff]
    %v288 = vld [vmem:[#allocation7 + $0x5b8] sm:$0xff]
    %v289 = vld [vmem:[#allocation7 + $0x5c0] sm:$0xff]
    %v290 = vld [vmem:[#allocation7 + $0x5c8] sm:$0xff]
    %v291 = vld [vmem:[#allocation7 + $0x5d0] sm:$0xff]
    %v292 = vld [vmem:[#allocation7 + $0x5d8] sm:$0xff]
    %v293 = vld [vmem:[#allocation7 + $0x5e0] sm:$0xff]
    %v294 = vld [vmem:[#allocation7 + $0x5e8] sm:$0xff]
    %v295 = vld [vmem:[#allocation7 + $0x5f0] sm:$0xff]
    %v296 = vld [vmem:[#allocation7 + $0x5f8] sm:$0xff]
    %v297 = vld [vmem:[#allocation7 + $0x600] sm:$0xff]
    %v298 = vld [vmem:[#allocation7 + $0x608] sm:$0xff]
    %v299 = vld [vmem:[#allocation7 + $0x610] sm:$0xff]
    %v300 = vld [vmem:[#allocation7 + $0x618] sm:$0xff]
    %v301 = vld [vmem:[#allocation7 + $0x620] sm:$0xff]
    %v302 = vld [vmem:[#allocation7 + $0x628] sm:$0xff]
    %v303 = vld [vmem:[#allocation7 + $0x630] sm:$0xff]
    %v304 = vld [vmem:[#allocation7 + $0x638] sm:$0xff]
    %v305 = vld [vmem:[#allocation7 + $0x640] sm:$0xff]
    %v306 = vld [vmem:[#allocation7 + $0x648] sm:$0xff]
    %v307 = vld [vmem:[#allocation7 + $0x650] sm:$0xff]
    %v308 = vld [vmem:[#allocation7 + $0x658] sm:$0xff]
    %v309 = vld [vmem:[#allocation7 + $0x660] sm:$0xff]
    %v310 = vld [vmem:[#allocation7 + $0x668] sm:$0xff]
    %v311 = vld [vmem:[#allocation7 + $0x670] sm:$0xff]
    %v312 = vld [vmem:[#allocation7 + $0x678] sm:$0xff]
    %v313 = vld [vmem:[#allocation7 + $0x680] sm:$0xff]
    %v314 = vld [vmem:[#allocation7 + $0x688] sm:$0xff]
    %v315 = vld [vmem:[#allocation7 + $0x690] sm:$0xff]
    %v316 = vld [vmem:[#allocation7 + $0x698] sm:$0xff]
    %v317 = vld [vmem:[#allocation7 + $0x6a0] sm:$0xff]
    %v318 = vld [vmem:[#allocation7 + $0x6a8] sm:$0xff]
    %v319 = vld [vmem:[#allocation7 + $0x6b0] sm:$0xff]
    %v320 = vld [vmem:[#allocation7 + $0x6b8] sm:$0xff]
    %v321 = vld [vmem:[#allocation7 + $0x6c0] sm:$0xff]
    %v322 = vld [vmem:[#allocation7 + $0x6c8] sm:$0xff]
    %v323 = vld [vmem:[#allocation7 + $0x6d0] sm:$0xff]
    %v324 = vld [vmem:[#allocation7 + $0x6d8] sm:$0xff]
    %v325 = vld [vmem:[#allocation7 + $0x6e0] sm:$0xff]
    %v326 = vld [vmem:[#allocation7 + $0x6e8] sm:$0xff]
    %v327 = vld [vmem:[#allocation7 + $0x6f0] sm:$0xff]
    %v328 = vld [vmem:[#allocation7 + $0x6f8] sm:$0xff]
    %v329 = vld [vmem:[#allocation8] sm:$0xff]
    %v330 = vld [vmem:[#allocation8 + $0x8] sm:$0xff]
    %v331 = vld [vmem:[#allocation8 + $0x10] sm:$0xff]
    %v332 = vld [vmem:[#allocation8 + $0x18] sm:$0xff]
    %v333 = vld [vmem:[#allocation8 + $0x20] sm:$0xff]
    %v334 = vld [vmem:[#allocation8 + $0x28] sm:$0xff]
    %v335 = vld [vmem:[#allocation8 + $0x30] sm:$0xff]
    %v336 = vld [vmem:[#allocation8 + $0x38] sm:$0xff]
    %v337 = vld [vmem:[#allocation8 + $0x40] sm:$0xff]
    %v338 = vld [vmem:[#allocation8 + $0x48] sm:$0xff]
    %v339 = vld [vmem:[#allocation8 + $0x50] sm:$0xff]
    %v340 = vld [vmem:[#allocation8 + $0x58] sm:$0xff]
    %v341 = vld [vmem:[#allocation8 + $0x60] sm:$0xff]
    %v342 = vld [vmem:[#allocation8 + $0x68] sm:$0xff]
    %v343 = vld [vmem:[#allocation8 + $0x70] sm:$0xff]
    %v344 = vld [vmem:[#allocation8 + $0x78] sm:$0xff]
    %v345 = vld [vmem:[#allocation8 + $0x80] sm:$0xff]
    %v346 = vld [vmem:[#allocation8 + $0x88] sm:$0xff]
    %v347 = vld [vmem:[#allocation8 + $0x90] sm:$0xff]
    %v348 = vld [vmem:[#allocation8 + $0x98] sm:$0xff]
    %v349 = vld [vmem:[#allocation8 + $0xa0] sm:$0xff]
    %v350 = vld [vmem:[#allocation8 + $0xa8] sm:$0xff]
    %v351 = vld [vmem:[#allocation8 + $0xb0] sm:$0xff]
    %v352 = vld [vmem:[#allocation8 + $0xb8] sm:$0xff]
    %v353 = vld [vmem:[#allocation8 + $0xc0] sm:$0xff]
    %v354 = vld [vmem:[#allocation8 + $0xc8] sm:$0xff]
    %v355 = vld [vmem:[#allocation8 + $0xd0] sm:$0xff]
    %v356 = vld [vmem:[#allocation8 + $0xd8] sm:$0xff]
    %v357 = vld [vmem:[#allocation8 + $0xe0] sm:$0xff]
    %v358 = vld [vmem:[#allocation8 + $0xe8] sm:$0xff]
    %v359 = vld [vmem:[#allocation8 + $0xf0] sm:$0xff]
    %v360 = vld [vmem:[#allocation8 + $0xf8] sm:$0xff]
    %v361 = vld [vmem:[#allocation8 + $0x100] sm:$0xff]
    %v362 = vld [vmem:[#allocation8 + $0x108] sm:$0xff]
    %v363 = vld [vmem:[#allocation8 + $0x110] sm:$0xff]
    %v364 = vld [vmem:[#allocation8 + $0x118] sm:$0xff]
    %v365 = vld [vmem:[#allocation8 + $0x120] sm:$0xff]
    %v366 = vld [vmem:[#allocation8 + $0x128] sm:$0xff]
    %v367 = vld [vmem:[#allocation8 + $0x130] sm:$0xff]
    %v368 = vld [vmem:[#allocation8 + $0x138] sm:$0xff]
    %v369 = vld [vmem:[#allocation8 + $0x140] sm:$0xff]
    %v370 = vld [vmem:[#allocation8 + $0x148] sm:$0xff]
    %v371 = vld [vmem:[#allocation8 + $0x150] sm:$0xff]
    %v372 = vld [vmem:[#allocation8 + $0x158] sm:$0xff]
    %v373 = vld [vmem:[#allocation8 + $0x160] sm:$0xff]
    %v374 = vld [vmem:[#allocation8 + $0x168] sm:$0xff]
    %v375 = vld [vmem:[#allocation8 + $0x170] sm:$0xff]
    %v376 = vld [vmem:[#allocation8 + $0x178] sm:$0xff]
    %v377 = vld [vmem:[#allocation8 + $0x180] sm:$0xff]
    %v378 = vld [vmem:[#allocation8 + $0x188] sm:$0xff]
    %v379 = vld [vmem:[#allocation8 + $0x190] sm:$0xff]
    %v380 = vld [vmem:[#allocation8 + $0x198] sm:$0xff]
    %v381 = vld [vmem:[#allocation8 + $0x1a0] sm:$0xff]
    %v382 = vld [vmem:[#allocation8 + $0x1a8] sm:$0xff]
    %v383 = vld [vmem:[#allocation8 + $0x1b0] sm:$0xff]
    %v384 = vld [vmem:[#allocation8 + $0x1b8] sm:$0xff]
    %v385 = vld [vmem:[#allocation8 + $0x1c0] sm:$0xff]
    %v386 = vld [vmem:[#allocation8 + $0x1c8] sm:$0xff]
    %v387 = vld [vmem:[#allocation8 + $0x1d0] sm:$0xff]
    %v388 = vld [vmem:[#allocation8 + $0x1d8] sm:$0xff]
    %v389 = vld [vmem:[#allocation8 + $0x1e0] sm:$0xff]
    %v390 = vld [vmem:[#allocation8 + $0x1e8] sm:$0xff]
    %v391 = vld [vmem:[#allocation8 + $0x1f0] sm:$0xff]
    %v392 = vld [vmem:[#allocation8 + $0x1f8] sm:$0xff]
    %v393 = vld [vmem:[#allocation8 + $0x200] sm:$0xff]
    %v394 = vld [vmem:[#allocation8 + $0x208] sm:$0xff]
    %v395 = vld [vmem:[#allocation8 + $0x210] sm:$0xff]
    %v396 = vld [vmem:[#allocation8 + $0x218] sm:$0xff]
    %v397 = vld [vmem:[#allocation8 + $0x220] sm:$0xff]
    %v398 = vld [vmem:[#allocation8 + $0x228] sm:$0xff]
    %v399 = vld [vmem:[#allocation8 + $0x230] sm:$0xff]
    %v400 = vld [vmem:[#allocation8 + $0x238] sm:$0xff]
    %v401 = vld [vmem:[#allocation8 + $0x240] sm:$0xff]
    %v402 = vld [vmem:[#allocation8 + $0x248] sm:$0xff]
    %v403 = vld [vmem:[#allocation8 + $0x250] sm:$0xff]
    %v404 = vld [vmem:[#allocation8 + $0x258] sm:$0xff]
    %v405 = vld [vmem:[#allocation8 + $0x260] sm:$0xff]
    %v406 = vld [vmem:[#allocation8 + $0x268] sm:$0xff]
    %v407 = vld [vmem:[#allocation8 + $0x270] sm:$0xff]
    %v408 = vld [vmem:[#allocation8 + $0x278] sm:$0xff]
    %v409 = vld [vmem:[#allocation8 + $0x280] sm:$0xff]
    %v410 = vld [vmem:[#allocation8 + $0x288] sm:$0xff]
    %v411 = vld [vmem:[#allocation8 + $0x290] sm:$0xff]
    %v412 = vld [vmem:[#allocation8 + $0x298] sm:$0xff]
    %v413 = vld [vmem:[#allocation8 + $0x2a0] sm:$0xff]
    %v414 = vld [vmem:[#allocation8 + $0x2a8] sm:$0xff]
    %v415 = vld [vmem:[#allocation8 + $0x2b0] sm:$0xff]
    %v416 = vld [vmem:[#allocation8 + $0x2b8] sm:$0xff]
    %v417 = vld [vmem:[#allocation8 + $0x2c0] sm:$0xff]
    %v418 = vld [vmem:[#allocation8 + $0x2c8] sm:$0xff]
    %v419 = vld [vmem:[#allocation8 + $0x2d0] sm:$0xff]
    %v420 = vld [vmem:[#allocation8 + $0x2d8] sm:$0xff]
    %v421 = vld [vmem:[#allocation8 + $0x2e0] sm:$0xff]
    %v422 = vld [vmem:[#allocation8 + $0x2e8] sm:$0xff]
    %v423 = vld [vmem:[#allocation8 + $0x2f0] sm:$0xff]
    %v424 = vld [vmem:[#allocation8 + $0x2f8] sm:$0xff]
    %v425 = vld [vmem:[#allocation8 + $0x300] sm:$0xff]
    %v426 = vld [vmem:[#allocation8 + $0x308] sm:$0xff]
    %v427 = vld [vmem:[#allocation8 + $0x310] sm:$0xff]
    %v428 = vld [vmem:[#allocation8 + $0x318] sm:$0xff]
    %v429 = vld [vmem:[#allocation8 + $0x320] sm:$0xff]
    %v430 = vld [vmem:[#allocation8 + $0x328] sm:$0xff]
    %v431 = vld [vmem:[#allocation8 + $0x330] sm:$0xff]
    %v432 = vld [vmem:[#allocation8 + $0x338] sm:$0xff]
    %v433 = vld [vmem:[#allocation8 + $0x340] sm:$0xff]
    %v434 = vld [vmem:[#allocation8 + $0x348] sm:$0xff]
    %v435 = vld [vmem:[#allocation8 + $0x350] sm:$0xff]
    %v436 = vld [vmem:[#allocation8 + $0x358] sm:$0xff]
    %v437 = vld [vmem:[#allocation8 + $0x360] sm:$0xff]
    %v438 = vld [vmem:[#allocation8 + $0x368] sm:$0xff]
    %v439 = vld [vmem:[#allocation8 + $0x370] sm:$0xff]
    %v440 = vld [vmem:[#allocation8 + $0x378] sm:$0xff]
    %v441 = vld [vmem:[#allocation8 + $0x380] sm:$0xff]
    %v442 = vld [vmem:[#allocation8 + $0x388] sm:$0xff]
    %v443 = vld [vmem:[#allocation8 + $0x390] sm:$0xff]
    %v444 = vld [vmem:[#allocation8 + $0x398] sm:$0xff]
    %v445 = vld [vmem:[#allocation8 + $0x3a0] sm:$0xff]
    %v446 = vld [vmem:[#allocation8 + $0x3a8] sm:$0xff]
    %v447 = vld [vmem:[#allocation8 + $0x3b0] sm:$0xff]
    %v448 = vld [vmem:[#allocation8 + $0x3b8] sm:$0xff]
    %v449 = vld [vmem:[#allocation8 + $0x3c0] sm:$0xff]
    %v450 = vld [vmem:[#allocation8 + $0x3c8] sm:$0xff]
    %v451 = vld [vmem:[#allocation8 + $0x3d0] sm:$0xff]
    %v452 = vld [vmem:[#allocation8 + $0x3d8] sm:$0xff]
    %v453 = vld [vmem:[#allocation8 + $0x3e0] sm:$0xff]
    %v454 = vld [vmem:[#allocation8 + $0x3e8] sm:$0xff]
    %v455 = vld [vmem:[#allocation8 + $0x3f0] sm:$0xff]
    %v456 = vld [vmem:[#allocation8 + $0x3f8] sm:$0xff]
    %v457 = vld [vmem:[#allocation8 + $0x400] sm:$0xff]
    %v458 = vld [vmem:[#allocation8 + $0x408] sm:$0xff]
    %v459 = vld [vmem:[#allocation8 + $0x410] sm:$0xff]
    %v460 = vld [vmem:[#allocation8 + $0x418] sm:$0xff]
    %v461 = vld [vmem:[#allocation8 + $0x420] sm:$0xff]
    %v462 = vld [vmem:[#allocation8 + $0x428] sm:$0xff]
    %v463 = vld [vmem:[#allocation8 + $0x430] sm:$0xff]
    %v464 = vld [vmem:[#allocation8 + $0x438] sm:$0xff]
    %v465 = vld [vmem:[#allocation8 + $0x440] sm:$0xff]
    %v466 = vld [vmem:[#allocation8 + $0x448] sm:$0xff]
    %v467 = vld [vmem:[#allocation8 + $0x450] sm:$0xff]
    %v468 = vld [vmem:[#allocation8 + $0x458] sm:$0xff]
    %v469 = vld [vmem:[#allocation8 + $0x460] sm:$0xff]
    %v470 = vld [vmem:[#allocation8 + $0x468] sm:$0xff]
    %v471 = vld [vmem:[#allocation8 + $0x470] sm:$0xff]
    %v472 = vld [vmem:[#allocation8 + $0x478] sm:$0xff]
    %v473 = vld [vmem:[#allocation8 + $0x480] sm:$0xff]
    %v474 = vld [vmem:[#allocation8 + $0x488] sm:$0xff]
    %v475 = vld [vmem:[#allocation8 + $0x490] sm:$0xff]
    %v476 = vld [vmem:[#allocation8 + $0x498] sm:$0xff]
    %v477 = vld [vmem:[#allocation8 + $0x4a0] sm:$0xff]
    %v478 = vld [vmem:[#allocation8 + $0x4a8] sm:$0xff]
    %v479 = vld [vmem:[#allocation8 + $0x4b0] sm:$0xff]
    %v480 = vld [vmem:[#allocation8 + $0x4b8] sm:$0xff]
    %v481 = vld [vmem:[#allocation8 + $0x4c0] sm:$0xff]
    %v482 = vld [vmem:[#allocation8 + $0x4c8] sm:$0xff]
    %v483 = vld [vmem:[#allocation8 + $0x4d0] sm:$0xff]
    %v484 = vld [vmem:[#allocation8 + $0x4d8] sm:$0xff]
    %v485 = vld [vmem:[#allocation8 + $0x4e0] sm:$0xff]
    %v486 = vld [vmem:[#allocation8 + $0x4e8] sm:$0xff]
    %v487 = vld [vmem:[#allocation8 + $0x4f0] sm:$0xff]
    %v488 = vld [vmem:[#allocation8 + $0x4f8] sm:$0xff]
    %v489 = vld [vmem:[#allocation8 + $0x500] sm:$0xff]
    %v490 = vld [vmem:[#allocation8 + $0x508] sm:$0xff]
    %v491 = vld [vmem:[#allocation8 + $0x510] sm:$0xff]
    %v492 = vld [vmem:[#allocation8 + $0x518] sm:$0xff]
    %v493 = vld [vmem:[#allocation8 + $0x520] sm:$0xff]
    %v494 = vld [vmem:[#allocation8 + $0x528] sm:$0xff]
    %v495 = vld [vmem:[#allocation8 + $0x530] sm:$0xff]
    %v496 = vld [vmem:[#allocation8 + $0x538] sm:$0xff]
    %v497 = vld [vmem:[#allocation8 + $0x540] sm:$0xff]
    %v498 = vld [vmem:[#allocation8 + $0x548] sm:$0xff]
    %v499 = vld [vmem:[#allocation8 + $0x550] sm:$0xff]
    %v500 = vld [vmem:[#allocation8 + $0x558] sm:$0xff]
    %v501 = vld [vmem:[#allocation8 + $0x560] sm:$0xff]
    %v502 = vld [vmem:[#allocation8 + $0x568] sm:$0xff]
    %v503 = vld [vmem:[#allocation8 + $0x570] sm:$0xff]
    %v504 = vld [vmem:[#allocation8 + $0x578] sm:$0xff]
    %v505 = vld [vmem:[#allocation8 + $0x580] sm:$0xff]
    %v506 = vld [vmem:[#allocation8 + $0x588] sm:$0xff]
    %v507 = vld [vmem:[#allocation8 + $0x590] sm:$0xff]
    %v508 = vld [vmem:[#allocation8 + $0x598] sm:$0xff]
    %v509 = vld [vmem:[#allocation8 + $0x5a0] sm:$0xff]
    %v510 = vld [vmem:[#allocation8 + $0x5a8] sm:$0xff]
    %v511 = vld [vmem:[#allocation8 + $0x5b0] sm:$0xff]
    %v512 = vld [vmem:[#allocation8 + $0x5b8] sm:$0xff]
    %v513 = vld [vmem:[#allocation8 + $0x5c0] sm:$0xff]
    %v514 = vld [vmem:[#allocation8 + $0x5c8] sm:$0xff]
    %v515 = vld [vmem:[#allocation8 + $0x5d0] sm:$0xff]
    %v516 = vld [vmem:[#allocation8 + $0x5d8] sm:$0xff]
    %v517 = vld [vmem:[#allocation8 + $0x5e0] sm:$0xff]
    %v518 = vld [vmem:[#allocation8 + $0x5e8] sm:$0xff]
    %v519 = vld [vmem:[#allocation8 + $0x5f0] sm:$0xff]
    %v520 = vld [vmem:[#allocation8 + $0x5f8] sm:$0xff]
    %v521 = vld [vmem:[#allocation8 + $0x600] sm:$0xff]
    %v522 = vld [vmem:[#allocation8 + $0x608] sm:$0xff]
    %v523 = vld [vmem:[#allocation8 + $0x610] sm:$0xff]
    %v524 = vld [vmem:[#allocation8 + $0x618] sm:$0xff]
    %v525 = vld [vmem:[#allocation8 + $0x620] sm:$0xff]
    %v526 = vld [vmem:[#allocation8 + $0x628] sm:$0xff]
    %v527 = vld [vmem:[#allocation8 + $0x630] sm:$0xff]
    %v528 = vld [vmem:[#allocation8 + $0x638] sm:$0xff]
    %v529 = vld [vmem:[#allocation8 + $0x640] sm:$0xff]
    %v530 = vld [vmem:[#allocation8 + $0x648] sm:$0xff]
    %v531 = vld [vmem:[#allocation8 + $0x650] sm:$0xff]
    %v532 = vld [vmem:[#allocation8 + $0x658] sm:$0xff]
    %v533 = vld [vmem:[#allocation8 + $0x660] sm:$0xff]
    %v534 = vld [vmem:[#allocation8 + $0x668] sm:$0xff]
    %v535 = vld [vmem:[#allocation8 + $0x670] sm:$0xff]
    %v536 = vld [vmem:[#allocation8 + $0x678] sm:$0xff]
    %v537 = vld [vmem:[#allocation8 + $0x680] sm:$0xff]
    %v538 = vld [vmem:[#allocation8 + $0x688] sm:$0xff]
    %v539 = vld [vmem:[#allocation8 + $0x690] sm:$0xff]
    %v540 = vld [vmem:[#allocation8 + $0x698] sm:$0xff]
    %v541 = vld [vmem:[#allocation8 + $0x6a0] sm:$0xff]
    %v542 = vld [vmem:[#allocation8 + $0x6a8] sm:$0xff]
    %v543 = vld [vmem:[#allocation8 + $0x6b0] sm:$0xff]
    %v544 = vld [vmem:[#allocation8 + $0x6b8] sm:$0xff]
    %v545 = vld [vmem:[#allocation8 + $0x6c0] sm:$0xff]
    %v546 = vld [vmem:[#allocation8 + $0x6c8] sm:$0xff]
    %v547 = vld [vmem:[#allocation8 + $0x6d0] sm:$0xff]
    %v548 = vld [vmem:[#allocation8 + $0x6d8] sm:$0xff]
    %v549 = vld [vmem:[#allocation8 + $0x6e0] sm:$0xff]
    %v550 = vld [vmem:[#allocation8 + $0x6e8] sm:$0xff]
    %v551 = vld [vmem:[#allocation8 + $0x6f0] sm:$0xff]
    %v552 = vld [vmem:[#allocation8 + $0x6f8] sm:$0xff]
    %v553 = vld [vmem:[#allocation8 + $0x700] sm:$0xff]
    %v554 = vld [vmem:[#allocation8 + $0x708] sm:$0xff]
    %v555 = vld [vmem:[#allocation8 + $0x710] sm:$0xff]
    %v556 = vld [vmem:[#allocation8 + $0x718] sm:$0xff]
    %v557 = vld [vmem:[#allocation8 + $0x720] sm:$0xff]
    %v558 = vld [vmem:[#allocation8 + $0x728] sm:$0xff]
    %v559 = vld [vmem:[#allocation8 + $0x730] sm:$0xff]
    %v560 = vld [vmem:[#allocation8 + $0x738] sm:$0xff]
    %v561 = vld [vmem:[#allocation8 + $0x740] sm:$0xff]
    %v562 = vld [vmem:[#allocation8 + $0x748] sm:$0xff]
    %v563 = vld [vmem:[#allocation8 + $0x750] sm:$0xff]
    %v564 = vld [vmem:[#allocation8 + $0x758] sm:$0xff]
    %v565 = vld [vmem:[#allocation8 + $0x760] sm:$0xff]
    %v566 = vld [vmem:[#allocation8 + $0x768] sm:$0xff]
    %v567 = vld [vmem:[#allocation8 + $0x770] sm:$0xff]
    %v568 = vld [vmem:[#allocation8 + $0x778] sm:$0xff]
    %v569 = vld [vmem:[#allocation8 + $0x780] sm:$0xff]
    %v570 = vld [vmem:[#allocation8 + $0x788] sm:$0xff]
    %v571 = vld [vmem:[#allocation8 + $0x790] sm:$0xff]
    %v572 = vld [vmem:[#allocation8 + $0x798] sm:$0xff]
    %v573 = vld [vmem:[#allocation8 + $0x7a0] sm:$0xff]
    %v574 = vld [vmem:[#allocation8 + $0x7a8] sm:$0xff]
    %v575 = vld [vmem:[#allocation8 + $0x7b0] sm:$0xff]
    %v576 = vld [vmem:[#allocation8 + $0x7b8] sm:$0xff]
    %v577 = vld [vmem:[#allocation8 + $0x7c0] sm:$0xff]
    %v578 = vld [vmem:[#allocation8 + $0x7c8] sm:$0xff]
    %v579 = vld [vmem:[#allocation8 + $0x7d0] sm:$0xff]
    %v580 = vld [vmem:[#allocation8 + $0x7d8] sm:$0xff]
    %v581 = vld [vmem:[#allocation8 + $0x7e0] sm:$0xff]
    %v582 = vld [vmem:[#allocation8 + $0x7e8] sm:$0xff]
    %v583 = vld [vmem:[#allocation8 + $0x7f0] sm:$0xff]
    %v584 = vld [vmem:[#allocation8 + $0x7f8] sm:$0xff]
    %v585 = vld [vmem:[#allocation8 + $0x800] sm:$0xff]
    %v586 = vld [vmem:[#allocation8 + $0x808] sm:$0xff]
    %v587 = vld [vmem:[#allocation8 + $0x810] sm:$0xff]
    %v588 = vld [vmem:[#allocation8 + $0x818] sm:$0xff]
    %v589 = vld [vmem:[#allocation8 + $0x820] sm:$0xff]
    %v590 = vld [vmem:[#allocation8 + $0x828] sm:$0xff]
    %v591 = vld [vmem:[#allocation8 + $0x830] sm:$0xff]
    %v592 = vld [vmem:[#allocation8 + $0x838] sm:$0xff]
    %v593 = vld [vmem:[#allocation8 + $0x840] sm:$0xff]
    %v594 = vld [vmem:[#allocation8 + $0x848] sm:$0xff]
    %v595 = vld [vmem:[#allocation8 + $0x850] sm:$0xff]
    %v596 = vld [vmem:[#allocation8 + $0x858] sm:$0xff]
    %v597 = vld [vmem:[#allocation8 + $0x860] sm:$0xff]
    %v598 = vld [vmem:[#allocation8 + $0x868] sm:$0xff]
    %v599 = vld [vmem:[#allocation8 + $0x870] sm:$0xff]
    %v600 = vld [vmem:[#allocation8 + $0x878] sm:$0xff]
    %v601 = vld [vmem:[#allocation8 + $0x880] sm:$0xff]
    %v602 = vld [vmem:[#allocation8 + $0x888] sm:$0xff]
    %v603 = vld [vmem:[#allocation8 + $0x890] sm:$0xff]
    %v604 = vld [vmem:[#allocation8 + $0x898] sm:$0xff]
    %v605 = vld [vmem:[#allocation8 + $0x8a0] sm:$0xff]
    %v606 = vld [vmem:[#allocation8 + $0x8a8] sm:$0xff]
    %v607 = vld [vmem:[#allocation8 + $0x8b0] sm:$0xff]
    %v608 = vld [vmem:[#allocation8 + $0x8b8] sm:$0xff]
    %v609 = vld [vmem:[#allocation8 + $0x8c0] sm:$0xff]
    %v610 = vld [vmem:[#allocation8 + $0x8c8] sm:$0xff]
    %v611 = vld [vmem:[#allocation8 + $0x8d0] sm:$0xff]
    %v612 = vld [vmem:[#allocation8 + $0x8d8] sm:$0xff]
    %v613 = vld [vmem:[#allocation8 + $0x8e0] sm:$0xff]
    %v614 = vld [vmem:[#allocation8 + $0x8e8] sm:$0xff]
    %v615 = vld [vmem:[#allocation8 + $0x8f0] sm:$0xff]
    %v616 = vld [vmem:[#allocation8 + $0x8f8] sm:$0xff]
    %v617 = vld [vmem:[#allocation8 + $0x900] sm:$0xff]
    %v618 = vld [vmem:[#allocation8 + $0x908] sm:$0xff]
    %v619 = vld [vmem:[#allocation8 + $0x910] sm:$0xff]
    %v620 = vld [vmem:[#allocation8 + $0x918] sm:$0xff]
    %v621 = vld [vmem:[#allocation8 + $0x920] sm:$0xff]
    %v622 = vld [vmem:[#allocation8 + $0x928] sm:$0xff]
    %v623 = vld [vmem:[#allocation8 + $0x930] sm:$0xff]
    %v624 = vld [vmem:[#allocation8 + $0x938] sm:$0xff]
    %v625 = vld [vmem:[#allocation8 + $0x940] sm:$0xff]
    %v626 = vld [vmem:[#allocation8 + $0x948] sm:$0xff]
    %v627 = vld [vmem:[#allocation8 + $0x950] sm:$0xff]
    %v628 = vld [vmem:[#allocation8 + $0x958] sm:$0xff]
    %v629 = vld [vmem:[#allocation8 + $0x960] sm:$0xff]
    %v630 = vld [vmem:[#allocation8 + $0x968] sm:$0xff]
    %v631 = vld [vmem:[#allocation8 + $0x970] sm:$0xff]
    %v632 = vld [vmem:[#allocation8 + $0x978] sm:$0xff]
    %v633 = vld [vmem:[#allocation8 + $0x980] sm:$0xff]
    %v634 = vld [vmem:[#allocation8 + $0x988] sm:$0xff]
    %v635 = vld [vmem:[#allocation8 + $0x990] sm:$0xff]
    %v636 = vld [vmem:[#allocation8 + $0x998] sm:$0xff]
    %v637 = vld [vmem:[#allocation8 + $0x9a0] sm:$0xff]
    %v638 = vld [vmem:[#allocation8 + $0x9a8] sm:$0xff]
    %v639 = vld [vmem:[#allocation8 + $0x9b0] sm:$0xff]
    %v640 = vld [vmem:[#allocation8 + $0x9b8] sm:$0xff]
    %v641 = vld [vmem:[#allocation8 + $0x9c0] sm:$0xff]
    %v642 = vld [vmem:[#allocation8 + $0x9c8] sm:$0xff]
    %v643 = vld [vmem:[#allocation8 + $0x9d0] sm:$0xff]
    %v644 = vld [vmem:[#allocation8 + $0x9d8] sm:$0xff]
    %v645 = vld [vmem:[#allocation8 + $0x9e0] sm:$0xff]
    %v646 = vld [vmem:[#allocation8 + $0x9e8] sm:$0xff]
    %v647 = vld [vmem:[#allocation8 + $0x9f0] sm:$0xff]
    %v648 = vld [vmem:[#allocation8 + $0x9f8] sm:$0xff]
    %v649 = vld [vmem:[#allocation8 + $0xa00] sm:$0xff]
    %v650 = vld [vmem:[#allocation8 + $0xa08] sm:$0xff]
    %v651 = vld [vmem:[#allocation8 + $0xa10] sm:$0xff]
    %v652 = vld [vmem:[#allocation8 + $0xa18] sm:$0xff]
    %v653 = vld [vmem:[#allocation8 + $0xa20] sm:$0xff]
    %v654 = vld [vmem:[#allocation8 + $0xa28] sm:$0xff]
    %v655 = vld [vmem:[#allocation8 + $0xa30] sm:$0xff]
    %v656 = vld [vmem:[#allocation8 + $0xa38] sm:$0xff]
    %v657 = vld [vmem:[#allocation8 + $0xa40] sm:$0xff]
    %v658 = vld [vmem:[#allocation8 + $0xa48] sm:$0xff]
    %v659 = vld [vmem:[#allocation8 + $0xa50] sm:$0xff]
    %v660 = vld [vmem:[#allocation8 + $0xa58] sm:$0xff]
    %v661 = vld [vmem:[#allocation8 + $0xa60] sm:$0xff]
    %v662 = vld [vmem:[#allocation8 + $0xa68] sm:$0xff]
    %v663 = vld [vmem:[#allocation8 + $0xa70] sm:$0xff]
    %v664 = vld [vmem:[#allocation8 + $0xa78] sm:$0xff]
    %v665 = vld [vmem:[#allocation8 + $0xa80] sm:$0xff]
    %v666 = vld [vmem:[#allocation8 + $0xa88] sm:$0xff]
    %v667 = vld [vmem:[#allocation8 + $0xa90] sm:$0xff]
    %v668 = vld [vmem:[#allocation8 + $0xa98] sm:$0xff]
    %v669 = vld [vmem:[#allocation8 + $0xaa0] sm:$0xff]
    %v670 = vld [vmem:[#allocation8 + $0xaa8] sm:$0xff]
    %v671 = vld [vmem:[#allocation8 + $0xab0] sm:$0xff]
    %v672 = vld [vmem:[#allocation8 + $0xab8] sm:$0xff]
    %v673 = vld [vmem:[#allocation8 + $0xac0] sm:$0xff]
    %v674 = vld [vmem:[#allocation8 + $0xac8] sm:$0xff]
    %v675 = vld [vmem:[#allocation8 + $0xad0] sm:$0xff]
    %v676 = vld [vmem:[#allocation8 + $0xad8] sm:$0xff]
    %v677 = vld [vmem:[#allocation8 + $0xae0] sm:$0xff]
    %v678 = vld [vmem:[#allocation8 + $0xae8] sm:$0xff]
    %v679 = vld [vmem:[#allocation8 + $0xaf0] sm:$0xff]
    %v680 = vld [vmem:[#allocation8 + $0xaf8] sm:$0xff]
    %v681 = vld [vmem:[#allocation8 + $0xb00] sm:$0xff]
    %v682 = vld [vmem:[#allocation8 + $0xb08] sm:$0xff]
    %v683 = vld [vmem:[#allocation8 + $0xb10] sm:$0xff]
    %v684 = vld [vmem:[#allocation8 + $0xb18] sm:$0xff]
    %v685 = vld [vmem:[#allocation8 + $0xb20] sm:$0xff]
    %v686 = vld [vmem:[#allocation8 + $0xb28] sm:$0xff]
    %v687 = vld [vmem:[#allocation8 + $0xb30] sm:$0xff]
    %v688 = vld [vmem:[#allocation8 + $0xb38] sm:$0xff]
    %v689 = vld [vmem:[#allocation8 + $0xb40] sm:$0xff]
    %v690 = vld [vmem:[#allocation8 + $0xb48] sm:$0xff]
    %v691 = vld [vmem:[#allocation8 + $0xb50] sm:$0xff]
    %v692 = vld [vmem:[#allocation8 + $0xb58] sm:$0xff]
    %v693 = vld [vmem:[#allocation8 + $0xb60] sm:$0xff]
    %v694 = vld [vmem:[#allocation8 + $0xb68] sm:$0xff]
    %v695 = vld [vmem:[#allocation8 + $0xb70] sm:$0xff]
    %v696 = vld [vmem:[#allocation8 + $0xb78] sm:$0xff]
    %v697 = vld [vmem:[#allocation8 + $0xb80] sm:$0xff]
    %v698 = vld [vmem:[#allocation8 + $0xb88] sm:$0xff]
    %v699 = vld [vmem:[#allocation8 + $0xb90] sm:$0xff]
    %v700 = vld [vmem:[#allocation8 + $0xb98] sm:$0xff]
    %v701 = vld [vmem:[#allocation8 + $0xba0] sm:$0xff]
    %v702 = vld [vmem:[#allocation8 + $0xba8] sm:$0xff]
    %v703 = vld [vmem:[#allocation8 + $0xbb0] sm:$0xff]
    %v704 = vld [vmem:[#allocation8 + $0xbb8] sm:$0xff]
    %v705 = vld [vmem:[#allocation8 + $0xbc0] sm:$0xff]
    %v706 = vld [vmem:[#allocation8 + $0xbc8] sm:$0xff]
    %v707 = vld [vmem:[#allocation8 + $0xbd0] sm:$0xff]
    %v708 = vld [vmem:[#allocation8 + $0xbd8] sm:$0xff]
    %v709 = vld [vmem:[#allocation8 + $0xbe0] sm:$0xff]
    %v710 = vld [vmem:[#allocation8 + $0xbe8] sm:$0xff]
    %v711 = vld [vmem:[#allocation8 + $0xbf0] sm:$0xff]
    %v712 = vld [vmem:[#allocation8 + $0xbf8] sm:$0xff]
    %v713 = vld [vmem:[#allocation8 + $0xc00] sm:$0xff]
    %v714 = vld [vmem:[#allocation8 + $0xc08] sm:$0xff]
    %v715 = vld [vmem:[#allocation8 + $0xc10] sm:$0xff]
    %v716 = vld [vmem:[#allocation8 + $0xc18] sm:$0xff]
    %v717 = vld [vmem:[#allocation8 + $0xc20] sm:$0xff]
    %v718 = vld [vmem:[#allocation8 + $0xc28] sm:$0xff]
    %v719 = vld [vmem:[#allocation8 + $0xc30] sm:$0xff]
    %v720 = vld [vmem:[#allocation8 + $0xc38] sm:$0xff]
    %v721 = vld [vmem:[#allocation8 + $0xc40] sm:$0xff]
    %v722 = vld [vmem:[#allocation8 + $0xc48] sm:$0xff]
    %v723 = vld [vmem:[#allocation8 + $0xc50] sm:$0xff]
    %v724 = vld [vmem:[#allocation8 + $0xc58] sm:$0xff]
    %v725 = vld [vmem:[#allocation8 + $0xc60] sm:$0xff]
    %v726 = vld [vmem:[#allocation8 + $0xc68] sm:$0xff]
    %v727 = vld [vmem:[#allocation8 + $0xc70] sm:$0xff]
    %v728 = vld [vmem:[#allocation8 + $0xc78] sm:$0xff]
    %v729 = vld [vmem:[#allocation8 + $0xc80] sm:$0xff]
    %v730 = vld [vmem:[#allocation8 + $0xc88] sm:$0xff]
    %v731 = vld [vmem:[#allocation8 + $0xc90] sm:$0xff]
    %v732 = vld [vmem:[#allocation8 + $0xc98] sm:$0xff]
    %v733 = vld [vmem:[#allocation8 + $0xca0] sm:$0xff]
    %v734 = vld [vmem:[#allocation8 + $0xca8] sm:$0xff]
    %v735 = vld [vmem:[#allocation8 + $0xcb0] sm:$0xff]
    %v736 = vld [vmem:[#allocation8 + $0xcb8] sm:$0xff]
    %v737 = vld [vmem:[#allocation8 + $0xcc0] sm:$0xff]
    %v738 = vld [vmem:[#allocation8 + $0xcc8] sm:$0xff]
    %v739 = vld [vmem:[#allocation8 + $0xcd0] sm:$0xff]
    %v740 = vld [vmem:[#allocation8 + $0xcd8] sm:$0xff]
    %v741 = vld [vmem:[#allocation8 + $0xce0] sm:$0xff]
    %v742 = vld [vmem:[#allocation8 + $0xce8] sm:$0xff]
    %v743 = vld [vmem:[#allocation8 + $0xcf0] sm:$0xff]
    %v744 = vld [vmem:[#allocation8 + $0xcf8] sm:$0xff]
    %v745 = vld [vmem:[#allocation8 + $0xd00] sm:$0xff]
    %v746 = vld [vmem:[#allocation8 + $0xd08] sm:$0xff]
    %v747 = vld [vmem:[#allocation8 + $0xd10] sm:$0xff]
    %v748 = vld [vmem:[#allocation8 + $0xd18] sm:$0xff]
    %v749 = vld [vmem:[#allocation8 + $0xd20] sm:$0xff]
    %v750 = vld [vmem:[#allocation8 + $0xd28] sm:$0xff]
    %v751 = vld [vmem:[#allocation8 + $0xd30] sm:$0xff]
    %v752 = vld [vmem:[#allocation8 + $0xd38] sm:$0xff]
    %v753 = vld [vmem:[#allocation8 + $0xd40] sm:$0xff]
    %v754 = vld [vmem:[#allocation8 + $0xd48] sm:$0xff]
    %v755 = vld [vmem:[#allocation8 + $0xd50] sm:$0xff]
    %v756 = vld [vmem:[#allocation8 + $0xd58] sm:$0xff]
    %v757 = vld [vmem:[#allocation8 + $0xd60] sm:$0xff]
    %v758 = vld [vmem:[#allocation8 + $0xd68] sm:$0xff]
    %v759 = vld [vmem:[#allocation8 + $0xd70] sm:$0xff]
    %v760 = vld [vmem:[#allocation8 + $0xd78] sm:$0xff]
    %v761 = vld [vmem:[#allocation8 + $0xd80] sm:$0xff]
    %v762 = vld [vmem:[#allocation8 + $0xd88] sm:$0xff]
    %v763 = vld [vmem:[#allocation8 + $0xd90] sm:$0xff]
    %v764 = vld [vmem:[#allocation8 + $0xd98] sm:$0xff]
    %v765 = vld [vmem:[#allocation8 + $0xda0] sm:$0xff]
    %v766 = vld [vmem:[#allocation8 + $0xda8] sm:$0xff]
    %v767 = vld [vmem:[#allocation8 + $0xdb0] sm:$0xff]
    %v768 = vld [vmem:[#allocation8 + $0xdb8] sm:$0xff]
    %v769 = vld [vmem:[#allocation8 + $0xdc0] sm:$0xff]
    %v770 = vld [vmem:[#allocation8 + $0xdc8] sm:$0xff]
    %v771 = vld [vmem:[#allocation8 + $0xdd0] sm:$0xff]
    %v772 = vld [vmem:[#allocation8 + $0xdd8] sm:$0xff]
    %v773 = vld [vmem:[#allocation8 + $0xde0] sm:$0xff]
    %v774 = vld [vmem:[#allocation8 + $0xde8] sm:$0xff]
    %v775 = vld [vmem:[#allocation8 + $0xdf0] sm:$0xff]
    %v776 = vld [vmem:[#allocation8 + $0xdf8] sm:$0xff]
    %v777 = vld [vmem:[#allocation8 + $0xe00] sm:$0xff]
    %v778 = vld [vmem:[#allocation8 + $0xe08] sm:$0xff]
    %v779 = vld [vmem:[#allocation8 + $0xe10] sm:$0xff]
    %v780 = vld [vmem:[#allocation8 + $0xe18] sm:$0xff]
    %v781 = vld [vmem:[#allocation8 + $0xe20] sm:$0xff]
    %v782 = vld [vmem:[#allocation8 + $0xe28] sm:$0xff]
    %v783 = vld [vmem:[#allocation8 + $0xe30] sm:$0xff]
    %v784 = vld [vmem:[#allocation8 + $0xe38] sm:$0xff]
    %v785 = vld [vmem:[#allocation8 + $0xe40] sm:$0xff]
    %v786 = vld [vmem:[#allocation8 + $0xe48] sm:$0xff]
    %v787 = vld [vmem:[#allocation8 + $0xe50] sm:$0xff]
    %v788 = vld [vmem:[#allocation8 + $0xe58] sm:$0xff]
    %v789 = vld [vmem:[#allocation8 + $0xe60] sm:$0xff]
    %v790 = vld [vmem:[#allocation8 + $0xe68] sm:$0xff]
    %v791 = vld [vmem:[#allocation8 + $0xe70] sm:$0xff]
    %v792 = vld [vmem:[#allocation8 + $0xe78] sm:$0xff]
    %v793 = vld [vmem:[#allocation8 + $0xe80] sm:$0xff]
    %v794 = vld [vmem:[#allocation8 + $0xe88] sm:$0xff]
    %v795 = vld [vmem:[#allocation8 + $0xe90] sm:$0xff]
    %v796 = vld [vmem:[#allocation8 + $0xe98] sm:$0xff]
    %v797 = vld [vmem:[#allocation8 + $0xea0] sm:$0xff]
    %v798 = vld [vmem:[#allocation8 + $0xea8] sm:$0xff]
    %v799 = vld [vmem:[#allocation8 + $0xeb0] sm:$0xff]
    %v800 = vld [vmem:[#allocation8 + $0xeb8] sm:$0xff]
    %v801 = vld [vmem:[#allocation8 + $0xec0] sm:$0xff]
    %v802 = vld [vmem:[#allocation8 + $0xec8] sm:$0xff]
    %v803 = vld [vmem:[#allocation8 + $0xed0] sm:$0xff]
    %v804 = vld [vmem:[#allocation8 + $0xed8] sm:$0xff]
    %v805 = vld [vmem:[#allocation8 + $0xee0] sm:$0xff]
    %v806 = vld [vmem:[#allocation8 + $0xee8] sm:$0xff]
    %v807 = vld [vmem:[#allocation8 + $0xef0] sm:$0xff]
    %v808 = vld [vmem:[#allocation8 + $0xef8] sm:$0xff]
    %v809 = vld [vmem:[#allocation8 + $0xf00] sm:$0xff]
    %v810 = vld [vmem:[#allocation8 + $0xf08] sm:$0xff]
    %v811 = vld [vmem:[#allocation8 + $0xf10] sm:$0xff]
    %v812 = vld [vmem:[#allocation8 + $0xf18] sm:$0xff]
    %v813 = vld [vmem:[#allocation8 + $0xf20] sm:$0xff]
    %v814 = vld [vmem:[#allocation8 + $0xf28] sm:$0xff]
    %v815 = vld [vmem:[#allocation8 + $0xf30] sm:$0xff]
    %v816 = vld [vmem:[#allocation8 + $0xf38] sm:$0xff]
    %v817 = vld [vmem:[#allocation8 + $0xf40] sm:$0xff]
    %v818 = vld [vmem:[#allocation8 + $0xf48] sm:$0xff]
    %v819 = vld [vmem:[#allocation8 + $0xf50] sm:$0xff]
    %v820 = vld [vmem:[#allocation8 + $0xf58] sm:$0xff]
    %v821 = vld [vmem:[#allocation8 + $0xf60] sm:$0xff]
    %v822 = vld [vmem:[#allocation8 + $0xf68] sm:$0xff]
    %v823 = vld [vmem:[#allocation8 + $0xf70] sm:$0xff]
    %v824 = vld [vmem:[#allocation8 + $0xf78] sm:$0xff]
    %v825 = vld [vmem:[#allocation8 + $0xf80] sm:$0xff]
    %v826 = vld [vmem:[#allocation8 + $0xf88] sm:$0xff]
    %v827 = vld [vmem:[#allocation8 + $0xf90] sm:$0xff]
    %v828 = vld [vmem:[#allocation8 + $0xf98] sm:$0xff]
    %v829 = vld [vmem:[#allocation8 + $0xfa0] sm:$0xff]
    %v830 = vld [vmem:[#allocation8 + $0xfa8] sm:$0xff]
    %v831 = vld [vmem:[#allocation8 + $0xfb0] sm:$0xff]
    %v832 = vld [vmem:[#allocation8 + $0xfb8] sm:$0xff]
    %v833 = vld [vmem:[#allocation8 + $0xfc0] sm:$0xff]
    %v834 = vld [vmem:[#allocation8 + $0xfc8] sm:$0xff]
    %v835 = vld [vmem:[#allocation8 + $0xfd0] sm:$0xff]
    %v836 = vld [vmem:[#allocation8 + $0xfd8] sm:$0xff]
    %v837 = vld [vmem:[#allocation8 + $0xfe0] sm:$0xff]
    %v838 = vld [vmem:[#allocation8 + $0xfe8] sm:$0xff]
    %v839 = vld [vmem:[#allocation8 + $0xff0] sm:$0xff]
    %v840 = vld [vmem:[#allocation8 + $0xff8] sm:$0xff]
    %v841 = vld [vmem:[#allocation10] sm:$0xf]
    %v842 = vld [vmem:[#allocation10 + $0x4] sm:$0xf]
    %v843 = vld [vmem:[#allocation10 + $0x8] sm:$0xf]
    %v844 = vld [vmem:[#allocation10 + $0xc] sm:$0xf]
    %v845 = vld [vmem:[#allocation10 + $0x10] sm:$0xf]
    %v846 = vld [vmem:[#allocation10 + $0x14] sm:$0xf]
    %v847 = vld [vmem:[#allocation10 + $0x18] sm:$0xf]
    %v848 = vld [vmem:[#allocation10 + $0x1c] sm:$0xf]
    %v849 = vld [vmem:[#allocation10 + $0x20] sm:$0xf]
    %v850 = vld [vmem:[#allocation10 + $0x24] sm:$0xf]
    %v851 = vld [vmem:[#allocation10 + $0x28] sm:$0xf]
    %v852 = vld [vmem:[#allocation10 + $0x2c] sm:$0xf]
    %v853 = vld [vmem:[#allocation10 + $0x30] sm:$0xf]
    %v854 = vld [vmem:[#allocation10 + $0x34] sm:$0xf]
    %v855 = vld [vmem:[#allocation10 + $0x38] sm:$0xf]
    %v856 = vld [vmem:[#allocation10 + $0x3c] sm:$0xf]
    %v857 = vld [vmem:[#allocation10 + $0x40] sm:$0xf]
    %v858 = vld [vmem:[#allocation10 + $0x44] sm:$0xf]
    %v859 = vld [vmem:[#allocation10 + $0x48] sm:$0xf]
    %v860 = vld [vmem:[#allocation10 + $0x4c] sm:$0xf]
    %v861 = vld [vmem:[#allocation10 + $0x50] sm:$0xf]
    %v862 = vld [vmem:[#allocation10 + $0x54] sm:$0xf]
    %v863 = vld [vmem:[#allocation10 + $0x58] sm:$0xf]
    %v864 = vld [vmem:[#allocation10 + $0x5c] sm:$0xf]
    %v865 = vld [vmem:[#allocation10 + $0x60] sm:$0xf]
    %v866 = vld [vmem:[#allocation10 + $0x64] sm:$0xf]
    %v867 = vld [vmem:[#allocation10 + $0x68] sm:$0xf]
    %v868 = vld [vmem:[#allocation10 + $0x6c] sm:$0xf]
    %v869 = vld [vmem:[#allocation10 + $0x70] sm:$0xf]
    %v870 = vld [vmem:[#allocation10 + $0x74] sm:$0xf]
    %v871 = vld [vmem:[#allocation10 + $0x78] sm:$0xf]
    %v872 = vld [vmem:[#allocation10 + $0x7c] sm:$0xf]
    %v873 = vld [vmem:[#allocation10 + $0x80] sm:$0xf]
    %v874 = vld [vmem:[#allocation10 + $0x84] sm:$0xf]
    %v875 = vld [vmem:[#allocation10 + $0x88] sm:$0xf]
    %v876 = vld [vmem:[#allocation10 + $0x8c] sm:$0xf]
    %v877 = vld [vmem:[#allocation10 + $0x90] sm:$0xf]
    %v878 = vld [vmem:[#allocation10 + $0x94] sm:$0xf]
    %v879 = vld [vmem:[#allocation10 + $0x98] sm:$0xf]
    %v880 = vld [vmem:[#allocation10 + $0x9c] sm:$0xf]
    %v881 = vld [vmem:[#allocation10 + $0xa0] sm:$0xf]
    %v882 = vld [vmem:[#allocation10 + $0xa4] sm:$0xf]
    %v883 = vld [vmem:[#allocation10 + $0xa8] sm:$0xf]
    %v884 = vld [vmem:[#allocation10 + $0xac] sm:$0xf]
    %v885 = vld [vmem:[#allocation10 + $0xb0] sm:$0xf]
    %v886 = vld [vmem:[#allocation10 + $0xb4] sm:$0xf]
    %v887 = vld [vmem:[#allocation10 + $0xb8] sm:$0xf]
    %v888 = vld [vmem:[#allocation10 + $0xbc] sm:$0xf]
    %v889 = vld [vmem:[#allocation10 + $0xc0] sm:$0xf]
    %v890 = vld [vmem:[#allocation10 + $0xc4] sm:$0xf]
    %v891 = vld [vmem:[#allocation10 + $0xc8] sm:$0xf]
    %v892 = vld [vmem:[#allocation10 + $0xcc] sm:$0xf]
    %v893 = vld [vmem:[#allocation10 + $0xd0] sm:$0xf]
    %v894 = vld [vmem:[#allocation10 + $0xd4] sm:$0xf]
    %v895 = vld [vmem:[#allocation10 + $0xd8] sm:$0xf]
    %v896 = vld [vmem:[#allocation10 + $0xdc] sm:$0xf]
    %v897 = vld [vmem:[#allocation10 + $0xe0] sm:$0xf]
    %v898 = vld [vmem:[#allocation10 + $0xe4] sm:$0xf]
    %v899 = vld [vmem:[#allocation10 + $0xe8] sm:$0xf]
    %v900 = vld [vmem:[#allocation10 + $0xec] sm:$0xf]
    %v901 = vld [vmem:[#allocation10 + $0xf0] sm:$0xf]
    %v902 = vld [vmem:[#allocation10 + $0xf4] sm:$0xf]
    %v903 = vld [vmem:[#allocation10 + $0xf8] sm:$0xf]
    %v904 = vld [vmem:[#allocation10 + $0xfc] sm:$0xf]
    %v905 = vld [vmem:[#allocation11] sm:$0xf]
    %v906 = vld [vmem:[#allocation11 + $0x4] sm:$0xf]
    %v907 = vld [vmem:[#allocation11 + $0x8] sm:$0xf]
    %v908 = vld [vmem:[#allocation11 + $0xc] sm:$0xff]
    %v909 = vld [vmem:[#allocation11 + $0x14] sm:$0xff]
    %v910 = vld [vmem:[#allocation11 + $0x1c] sm:$0x1]
    %v911 = vld [vmem:[#allocation2] sm:$0xff]
    %v912 = vld [vmem:[#allocation2 + $0x8] sm:$0xff]
    %v913 = vld [vmem:[#allocation2 + $0x10] sm:$0xff]
    %v914 = vld [vmem:[#allocation2 + $0x18] sm:$0xff]
    %v915 = vld [vmem:[#allocation2 + $0x20] sm:$0xff]
    %v916 = vld [vmem:[#allocation2 + $0x28] sm:$0xff]
    %v917 = vld [vmem:[#allocation2 + $0x30] sm:$0xff]
    %v918 = vld [vmem:[#allocation2 + $0x38] sm:$0xff]
    %v919 = vpack.c.bf16 %v913, %v911
    %v920 = vpack.c.bf16 %v914, %v912
    %v921 = vpack.c.bf16 %v917, %v915
    %v922 = vpack.c.bf16 %v918, %v916
    %v924 = vlaneseq
    %v925 = vshrl.u32 %v924, 7
    %v926 = vsub.s32 0, %v925
    %v927 = vrot.slane %v905, %v926
    %v928 = vlaneseq
    %v929 = vshrl.u32 %v928, 7
    %v930 = vsub.s32 1, %v929
    %v931 = vrot.slane %v905, %v930
    %v932 = vlaneseq
    %v933 = vshrl.u32 %v932, 7
    %v934 = vsub.s32 2, %v933
    %v935 = vrot.slane %v905, %v934
    %v936 = vlaneseq
    %v937 = vshrl.u32 %v936, 7
    %v938 = vsub.s32 3, %v937
    %v939 = vrot.slane %v905, %v938
    %v1008 = vunpack.c.l.b16 %v105
    %v1009 = vunpack.c.h.b16 %v105
    %v1010 = vunpack.c.l.b16 %v106
    %v1011 = vunpack.c.h.b16 %v106
    %v1012 = vunpack.c.l.b16 %v107
    %v1013 = vunpack.c.h.b16 %v107
    %v1014 = vunpack.c.l.b16 %v108
    %v1015 = vunpack.c.h.b16 %v108
    %v1016 = vunpack.c.l.b16 %v109
    %v1017 = vunpack.c.h.b16 %v109
    %v1018 = vunpack.c.l.b16 %v110
    %v1019 = vunpack.c.h.b16 %v110
    %v1020 = vunpack.c.l.b16 %v111
    %v1021 = vunpack.c.h.b16 %v111
    %v1022 = vunpack.c.l.b16 %v112
    %v1023 = vunpack.c.h.b16 %v112
    %v1024 = vunpack.c.l.b16 %v113
    %v1025 = vunpack.c.h.b16 %v113
    %v1026 = vunpack.c.l.b16 %v114
    %v1027 = vunpack.c.h.b16 %v114
    %v1028 = vunpack.c.l.b16 %v115
    %v1029 = vunpack.c.h.b16 %v115
    %v1030 = vunpack.c.l.b16 %v116
    %v1031 = vunpack.c.h.b16 %v116
    %v1032 = vunpack.c.l.b16 %v117
    %v1033 = vunpack.c.h.b16 %v117
    %v1034 = vunpack.c.l.b16 %v118
    %v1035 = vunpack.c.h.b16 %v118
    %v1036 = vunpack.c.l.b16 %v119
    %v1037 = vunpack.c.h.b16 %v119
    %v1038 = vunpack.c.l.b16 %v120
    %v1039 = vunpack.c.h.b16 %v120
    %v1040 = vunpack.c.l.b16 %v121
    %v1041 = vunpack.c.h.b16 %v121
    %v1042 = vunpack.c.l.b16 %v122
    %v1043 = vunpack.c.h.b16 %v122
    %v1044 = vunpack.c.l.b16 %v123
    %v1045 = vunpack.c.h.b16 %v123
    %v1046 = vunpack.c.l.b16 %v124
    %v1047 = vunpack.c.h.b16 %v124
    %v1048 = vunpack.c.l.b16 %v125
    %v1049 = vunpack.c.h.b16 %v125
    %v1050 = vunpack.c.l.b16 %v126
    %v1051 = vunpack.c.h.b16 %v126
    %v1052 = vunpack.c.l.b16 %v127
    %v1053 = vunpack.c.h.b16 %v127
    %v1054 = vunpack.c.l.b16 %v128
    %v1055 = vunpack.c.h.b16 %v128
    %v1056 = vunpack.c.l.b16 %v129
    %v1057 = vunpack.c.h.b16 %v129
    %v1058 = vunpack.c.l.b16 %v130
    %v1059 = vunpack.c.h.b16 %v130
    %v1060 = vunpack.c.l.b16 %v131
    %v1061 = vunpack.c.h.b16 %v131
    %v1062 = vunpack.c.l.b16 %v132
    %v1063 = vunpack.c.h.b16 %v132
    %v1064 = vunpack.c.l.b16 %v133
    %v1065 = vunpack.c.h.b16 %v133
    %v1066 = vunpack.c.l.b16 %v134
    %v1067 = vunpack.c.h.b16 %v134
    %v1068 = vunpack.c.l.b16 %v135
    %v1069 = vunpack.c.h.b16 %v135
    %v1070 = vunpack.c.l.b16 %v136
    %v1071 = vunpack.c.h.b16 %v136
    %v1072 = vunpack.c.l.b16 %v137
    %v1073 = vunpack.c.h.b16 %v137
    %v1074 = vunpack.c.l.b16 %v138
    %v1075 = vunpack.c.h.b16 %v138
    %v1076 = vunpack.c.l.b16 %v139
    %v1077 = vunpack.c.h.b16 %v139
    %v1078 = vunpack.c.l.b16 %v140
    %v1079 = vunpack.c.h.b16 %v140
    %v1080 = vunpack.c.l.b16 %v141
    %v1081 = vunpack.c.h.b16 %v141
    %v1082 = vunpack.c.l.b16 %v142
    %v1083 = vunpack.c.h.b16 %v142
    %v1084 = vunpack.c.l.b16 %v143
    %v1085 = vunpack.c.h.b16 %v143
    %v1086 = vunpack.c.l.b16 %v144
    %v1087 = vunpack.c.h.b16 %v144
    %v1088 = vunpack.c.l.b16 %v145
    %v1089 = vunpack.c.h.b16 %v145
    %v1090 = vunpack.c.l.b16 %v146
    %v1091 = vunpack.c.h.b16 %v146
    %v1092 = vunpack.c.l.b16 %v147
    %v1093 = vunpack.c.h.b16 %v147
    %v1094 = vunpack.c.l.b16 %v148
    %v1095 = vunpack.c.h.b16 %v148
    %v1096 = vunpack.c.l.b16 %v149
    %v1097 = vunpack.c.h.b16 %v149
    %v1098 = vunpack.c.l.b16 %v150
    %v1099 = vunpack.c.h.b16 %v150
    %v1100 = vunpack.c.l.b16 %v151
    %v1101 = vunpack.c.h.b16 %v151
    %v1102 = vunpack.c.l.b16 %v152
    %v1103 = vunpack.c.h.b16 %v152
    %v1104 = vunpack.c.l.b16 %v153
    %v1105 = vunpack.c.h.b16 %v153
    %v1106 = vunpack.c.l.b16 %v154
    %v1107 = vunpack.c.h.b16 %v154
    %v1108 = vunpack.c.l.b16 %v155
    %v1109 = vunpack.c.h.b16 %v155
    %v1110 = vunpack.c.l.b16 %v156
    %v1111 = vunpack.c.h.b16 %v156
    %v1112 = vunpack.c.l.b16 %v157
    %v1113 = vunpack.c.h.b16 %v157
    %v1114 = vunpack.c.l.b16 %v158
    %v1115 = vunpack.c.h.b16 %v158
    %v1116 = vunpack.c.l.b16 %v159
    %v1117 = vunpack.c.h.b16 %v159
    %v1118 = vunpack.c.l.b16 %v160
    %v1119 = vunpack.c.h.b16 %v160
    %v1120 = vunpack.c.l.b16 %v161
    %v1121 = vunpack.c.h.b16 %v161
    %v1122 = vunpack.c.l.b16 %v162
    %v1123 = vunpack.c.h.b16 %v162
    %v1124 = vunpack.c.l.b16 %v163
    %v1125 = vunpack.c.h.b16 %v163
    %v1126 = vunpack.c.l.b16 %v164
    %v1127 = vunpack.c.h.b16 %v164
    %v1128 = vunpack.c.l.b16 %v165
    %v1129 = vunpack.c.h.b16 %v165
    %v1130 = vunpack.c.l.b16 %v166
    %v1131 = vunpack.c.h.b16 %v166
    %v1132 = vunpack.c.l.b16 %v167
    %v1133 = vunpack.c.h.b16 %v167
    %v1134 = vunpack.c.l.b16 %v168
    %v1135 = vunpack.c.h.b16 %v168
    %v1136 = vpack.c.b16 %v1012, %v1008
    %v1137 = vpack.c.b16 %v1013, %v1009
    %v1138 = vpack.c.b16 %v1014, %v1010
    %v1139 = vpack.c.b16 %v1015, %v1011
    %v1140 = vpack.c.b16 %v1020, %v1016
    %v1141 = vpack.c.b16 %v1021, %v1017
    %v1142 = vpack.c.b16 %v1022, %v1018
    %v1143 = vpack.c.b16 %v1023, %v1019
    %v1144 = vpack.c.b16 %v1028, %v1024
    %v1145 = vpack.c.b16 %v1029, %v1025
    %v1146 = vpack.c.b16 %v1030, %v1026
    %v1147 = vpack.c.b16 %v1031, %v1027
    %v1148 = vpack.c.b16 %v1036, %v1032
    %v1149 = vpack.c.b16 %v1037, %v1033
    %v1150 = vpack.c.b16 %v1038, %v1034
    %v1151 = vpack.c.b16 %v1039, %v1035
    %v1152 = vpack.c.b16 %v1044, %v1040
    %v1153 = vpack.c.b16 %v1045, %v1041
    %v1154 = vpack.c.b16 %v1046, %v1042
    %v1155 = vpack.c.b16 %v1047, %v1043
    %v1156 = vpack.c.b16 %v1052, %v1048
    %v1157 = vpack.c.b16 %v1053, %v1049
    %v1158 = vpack.c.b16 %v1054, %v1050
    %v1159 = vpack.c.b16 %v1055, %v1051
    %v1160 = vpack.c.b16 %v1060, %v1056
    %v1161 = vpack.c.b16 %v1061, %v1057
    %v1162 = vpack.c.b16 %v1062, %v1058
    %v1163 = vpack.c.b16 %v1063, %v1059
    %v1164 = vpack.c.b16 %v1068, %v1064
    %v1165 = vpack.c.b16 %v1069, %v1065
    %v1166 = vpack.c.b16 %v1070, %v1066
    %v1167 = vpack.c.b16 %v1071, %v1067
    %v1168 = vpack.c.b16 %v1076, %v1072
    %v1169 = vpack.c.b16 %v1077, %v1073
    %v1170 = vpack.c.b16 %v1078, %v1074
    %v1171 = vpack.c.b16 %v1079, %v1075
    %v1172 = vpack.c.b16 %v1084, %v1080
    %v1173 = vpack.c.b16 %v1085, %v1081
    %v1174 = vpack.c.b16 %v1086, %v1082
    %v1175 = vpack.c.b16 %v1087, %v1083
    %v1176 = vpack.c.b16 %v1092, %v1088
    %v1177 = vpack.c.b16 %v1093, %v1089
    %v1178 = vpack.c.b16 %v1094, %v1090
    %v1179 = vpack.c.b16 %v1095, %v1091
    %v1180 = vpack.c.b16 %v1100, %v1096
    %v1181 = vpack.c.b16 %v1101, %v1097
    %v1182 = vpack.c.b16 %v1102, %v1098
    %v1183 = vpack.c.b16 %v1103, %v1099
    %v1184 = vpack.c.b16 %v1108, %v1104
    %v1185 = vpack.c.b16 %v1109, %v1105
    %v1186 = vpack.c.b16 %v1110, %v1106
    %v1187 = vpack.c.b16 %v1111, %v1107
    %v1188 = vpack.c.b16 %v1116, %v1112
    %v1189 = vpack.c.b16 %v1117, %v1113
    %v1190 = vpack.c.b16 %v1118, %v1114
    %v1191 = vpack.c.b16 %v1119, %v1115
    %v1192 = vpack.c.b16 %v1124, %v1120
    %v1193 = vpack.c.b16 %v1125, %v1121
    %v1194 = vpack.c.b16 %v1126, %v1122
    %v1195 = vpack.c.b16 %v1127, %v1123
    %v1196 = vpack.c.b16 %v1132, %v1128
    %v1197 = vpack.c.b16 %v1133, %v1129
    %v1198 = vpack.c.b16 %v1134, %v1130
    %v1199 = vpack.c.b16 %v1135, %v1131
    %1264 = vmatprep.subr.bf16.mxu0 %v1165
    %1265 = vmatpush1.bf16.msra.mxu0 %v1164
    %1266 = vmatprep.subr.bf16.mxu0 %v1161
    %1267 = vmatpush1.bf16.msra.mxu0 %v1160
    %1268 = vmatprep.subr.bf16.mxu0 %v1157
    %1269 = vmatpush1.bf16.msra.mxu0 %v1156
    %1270 = vmatprep.subr.bf16.mxu0 %v1153
    %1271 = vmatpush1.bf16.msra.mxu0 %v1152
    %1272 = vmatprep.subr.bf16.mxu0 %v1149
    %1273 = vmatpush1.bf16.msra.mxu0 %v1148
    %1274 = vmatprep.subr.bf16.mxu0 %v1145
    %1275 = vmatpush1.bf16.msra.mxu0 %v1144
    %1276 = vmatprep.subr.bf16.mxu0 %v1141
    %1277 = vmatpush1.bf16.msra.mxu0 %v1140
    %1278 = vmatprep.subr.bf16.mxu0 %v1137
    %1279 = vmatpush1.bf16.msra.mxu0 %v1136
    %1280 = vmatprep.subr.bf16.mxu0 %v1197
    %1281 = vmatpush2.bf16.msra.mxu0 %v1196
    %1282 = vmatprep.subr.bf16.mxu0 %v1193
    %1283 = vmatpush2.bf16.msra.mxu0 %v1192
    %1284 = vmatprep.subr.bf16.mxu0 %v1189
    %1285 = vmatpush2.bf16.msra.mxu0 %v1188
    %1286 = vmatprep.subr.bf16.mxu0 %v1185
    %1287 = vmatpush2.bf16.msra.mxu0 %v1184
    %1288 = vmatprep.subr.bf16.mxu0 %v1181
    %1289 = vmatpush2.bf16.msra.mxu0 %v1180
    %1290 = vmatprep.subr.bf16.mxu0 %v1177
    %1291 = vmatpush2.bf16.msra.mxu0 %v1176
    %1292 = vmatprep.subr.bf16.mxu0 %v1173
    %1293 = vmatpush2.bf16.msra.mxu0 %v1172
    %1294 = vmatprep.subr.bf16.mxu0 %v1169
    %1295 = vmatpush2.bf16.msra.mxu0 %v1168
    %1296 = vmatprep.mubr.bf16.mxu0 %v920
    %1297 = vmatmul.mubr.bf16.gmra.mxu0 %v919
    %v1298 = vpop.f32.mrf.mxu0
    %v1299 = vadd.f32 %v927, %v1298
    %v1300 = vpop.f32.mrf.mxu0
    %v1301 = vadd.f32 %v931, %v1300
    %v1302 = vpop.f32.mrf.mxu0
    %v1303 = vadd.f32 %v927, %v1302
    %v1304 = vpop.f32.mrf.mxu0
    %v1305 = vadd.f32 %v931, %v1304
    %1306 = vmatprep.mubr.bf16.mxu0 %v922
    %1307 = vmatmul.mubr.bf16.gmra.mxu0 %v921
    %v1308 = vpop.f32.mrf.mxu0
    %v1309 = vadd.f32 %v927, %v1308
    %v1310 = vpop.f32.mrf.mxu0
    %v1311 = vadd.f32 %v931, %v1310
    %v1312 = vpop.f32.mrf.mxu0
    %v1313 = vadd.f32 %v927, %v1312
    %v1314 = vpop.f32.mrf.mxu0
    %v1315 = vadd.f32 %v931, %v1314
    %1316 = vdwg.mxu0
    %1317 = vmatprep.subr.bf16.mxu0 %v1167
    %1318 = vmatpush1.bf16.msra.mxu0 %v1166
    %1319 = vmatprep.subr.bf16.mxu0 %v1163
    %1320 = vmatpush1.bf16.msra.mxu0 %v1162
    %1321 = vmatprep.subr.bf16.mxu0 %v1159
    %1322 = vmatpush1.bf16.msra.mxu0 %v1158
    %1323 = vmatprep.subr.bf16.mxu0 %v1155
    %1324 = vmatpush1.bf16.msra.mxu0 %v1154
    %1325 = vmatprep.subr.bf16.mxu0 %v1151
    %1326 = vmatpush1.bf16.msra.mxu0 %v1150
    %1327 = vmatprep.subr.bf16.mxu0 %v1147
    %1328 = vmatpush1.bf16.msra.mxu0 %v1146
    %1329 = vmatprep.subr.bf16.mxu0 %v1143
    %1330 = vmatpush1.bf16.msra.mxu0 %v1142
    %1331 = vmatprep.subr.bf16.mxu0 %v1139
    %1332 = vmatpush1.bf16.msra.mxu0 %v1138
    %1333 = vmatprep.subr.bf16.mxu0 %v1199
    %1334 = vmatpush2.bf16.msra.mxu0 %v1198
    %1335 = vmatprep.subr.bf16.mxu0 %v1195
    %1336 = vmatpush2.bf16.msra.mxu0 %v1194
    %1337 = vmatprep.subr.bf16.mxu0 %v1191
    %1338 = vmatpush2.bf16.msra.mxu0 %v1190
    %1339 = vmatprep.subr.bf16.mxu0 %v1187
    %1340 = vmatpush2.bf16.msra.mxu0 %v1186
    %1341 = vmatprep.subr.bf16.mxu0 %v1183
    %1342 = vmatpush2.bf16.msra.mxu0 %v1182
    %1343 = vmatprep.subr.bf16.mxu0 %v1179
    %1344 = vmatpush2.bf16.msra.mxu0 %v1178
    %1345 = vmatprep.subr.bf16.mxu0 %v1175
    %1346 = vmatpush2.bf16.msra.mxu0 %v1174
    %1347 = vmatprep.subr.bf16.mxu0 %v1171
    %1348 = vmatpush2.bf16.msra.mxu0 %v1170
    %1349 = vmatprep.mubr.bf16.mxu0 %v920
    %1350 = vmatmul.mubr.bf16.gmra.mxu0 %v919
    %v1351 = vpop.f32.mrf.mxu0
    %v1352 = vadd.f32 %v935, %v1351
    %v1353 = vpop.f32.mrf.mxu0
    %v1354 = vadd.f32 %v939, %v1353
    %v1355 = vpop.f32.mrf.mxu0
    %v1356 = vadd.f32 %v935, %v1355
    %v1357 = vpop.f32.mrf.mxu0
    %v1358 = vadd.f32 %v939, %v1357
    %1359 = vmatprep.mubr.bf16.mxu0 %v922
    %1360 = vmatmul.mubr.bf16.gmra.mxu0 %v921
    %v1361 = vpop.f32.mrf.mxu0
    %v1362 = vadd.f32 %v935, %v1361
    %v1363 = vpop.f32.mrf.mxu0
    %v1364 = vadd.f32 %v939, %v1363
    %v1365 = vpop.f32.mrf.mxu0
    %v1366 = vadd.f32 %v935, %v1365
    %v1367 = vpop.f32.mrf.mxu0
    %v1368 = vadd.f32 %v939, %v1367
    %1369 = vdwg.mxu0
    %v1370 = vmul.f32 %v1299, 0.5
    %v1371 = vmul.f32 %v1301, 0.5
    %v1372 = vmul.f32 %v1352, 0.5
    %v1373 = vmul.f32 %v1354, 0.5
    %v1374 = vmul.f32 %v1303, 0.5
    %v1375 = vmul.f32 %v1305, 0.5
    %v1376 = vmul.f32 %v1356, 0.5
    %v1377 = vmul.f32 %v1358, 0.5
    %v1378 = vmul.f32 %v1309, 0.5
    %v1379 = vmul.f32 %v1311, 0.5
    %v1380 = vmul.f32 %v1362, 0.5
    %v1381 = vmul.f32 %v1364, 0.5
    %v1382 = vmul.f32 %v1313, 0.5
    %v1383 = vmul.f32 %v1315, 0.5
    %v1384 = vmul.f32 %v1366, 0.5
    %v1385 = vmul.f32 %v1368, 0.5
    %v1386 = vmul.f32 %v1299, 0.044715
    %v1387 = vmul.f32 %v1301, 0.044715
    %v1388 = vmul.f32 %v1352, 0.044715
    %v1389 = vmul.f32 %v1354, 0.044715
    %v1390 = vmul.f32 %v1303, 0.044715
    %v1391 = vmul.f32 %v1305, 0.044715
    %v1392 = vmul.f32 %v1356, 0.044715
    %v1393 = vmul.f32 %v1358, 0.044715
    %v1394 = vmul.f32 %v1309, 0.044715
    %v1395 = vmul.f32 %v1311, 0.044715
    %v1396 = vmul.f32 %v1362, 0.044715
    %v1397 = vmul.f32 %v1364, 0.044715
    %v1398 = vmul.f32 %v1313, 0.044715
    %v1399 = vmul.f32 %v1315, 0.044715
    %v1400 = vmul.f32 %v1366, 0.044715
    %v1401 = vmul.f32 %v1368, 0.044715
    %v1402 = vmul.f32 %v1386, %v1299
    %v1403 = vmul.f32 %v1387, %v1301
    %v1404 = vmul.f32 %v1388, %v1352
    %v1405 = vmul.f32 %v1389, %v1354
    %v1406 = vmul.f32 %v1390, %v1303
    %v1407 = vmul.f32 %v1391, %v1305
    %v1408 = vmul.f32 %v1392, %v1356
    %v1409 = vmul.f32 %v1393, %v1358
    %v1410 = vmul.f32 %v1394, %v1309
    %v1411 = vmul.f32 %v1395, %v1311
    %v1412 = vmul.f32 %v1396, %v1362
    %v1413 = vmul.f32 %v1397, %v1364
    %v1414 = vmul.f32 %v1398, %v1313
    %v1415 = vmul.f32 %v1399, %v1315
    %v1416 = vmul.f32 %v1400, %v1366
    %v1417 = vmul.f32 %v1401, %v1368
    %v1418 = vmul.f32 %v1402, %v1299
    %v1419 = vmul.f32 %v1403, %v1301
    %v1420 = vmul.f32 %v1404, %v1352
    %v1421 = vmul.f32 %v1405, %v1354
    %v1422 = vmul.f32 %v1406, %v1303
    %v1423 = vmul.f32 %v1407, %v1305
    %v1424 = vmul.f32 %v1408, %v1356
    %v1425 = vmul.f32 %v1409, %v1358
    %v1426 = vmul.f32 %v1410, %v1309
    %v1427 = vmul.f32 %v1411, %v1311
    %v1428 = vmul.f32 %v1412, %v1362
    %v1429 = vmul.f32 %v1413, %v1364
    %v1430 = vmul.f32 %v1414, %v1313
    %v1431 = vmul.f32 %v1415, %v1315
    %v1432 = vmul.f32 %v1416, %v1366
    %v1433 = vmul.f32 %v1417, %v1368
    %v1434 = vadd.f32 %v1299, %v1418
    %v1435 = vadd.f32 %v1301, %v1419
    %v1436 = vadd.f32 %v1352, %v1420
    %v1437 = vadd.f32 %v1354, %v1421
    %v1438 = vadd.f32 %v1303, %v1422
    %v1439 = vadd.f32 %v1305, %v1423
    %v1440 = vadd.f32 %v1356, %v1424
    %v1441 = vadd.f32 %v1358, %v1425
    %v1442 = vadd.f32 %v1309, %v1426
    %v1443 = vadd.f32 %v1311, %v1427
    %v1444 = vadd.f32 %v1362, %v1428
    %v1445 = vadd.f32 %v1364, %v1429
    %v1446 = vadd.f32 %v1313, %v1430
    %v1447 = vadd.f32 %v1315, %v1431
    %v1448 = vadd.f32 %v1366, %v1432
    %v1449 = vadd.f32 %v1368, %v1433
    %v1450 = vmul.f32 %v1434, 0.7978846
    %v1451 = vmul.f32 %v1435, 0.7978846
    %v1452 = vmul.f32 %v1436, 0.7978846
    %v1453 = vmul.f32 %v1437, 0.7978846
    %v1454 = vmul.f32 %v1438, 0.7978846
    %v1455 = vmul.f32 %v1439, 0.7978846
    %v1456 = vmul.f32 %v1440, 0.7978846
    %v1457 = vmul.f32 %v1441, 0.7978846
    %v1458 = vmul.f32 %v1442, 0.7978846
    %v1459 = vmul.f32 %v1443, 0.7978846
    %v1460 = vmul.f32 %v1444, 0.7978846
    %v1461 = vmul.f32 %v1445, 0.7978846
    %v1462 = vmul.f32 %v1446, 0.7978846
    %v1463 = vmul.f32 %v1447, 0.7978846
    %v1464 = vmul.f32 %v1448, 0.7978846
    %v1465 = vmul.f32 %v1449, 0.7978846
    %v1466 = vtanh.pop %v1450
    %v1467 = vtanh.pop %v1451
    %v1468 = vtanh.pop %v1452
    %v1469 = vtanh.pop %v1453
    %v1470 = vtanh.pop %v1454
    %v1471 = vtanh.pop %v1455
    %v1472 = vtanh.pop %v1456
    %v1473 = vtanh.pop %v1457
    %v1474 = vtanh.pop %v1458
    %v1475 = vtanh.pop %v1459
    %v1476 = vtanh.pop %v1460
    %v1477 = vtanh.pop %v1461
    %v1478 = vtanh.pop %v1462
    %v1479 = vtanh.pop %v1463
    %v1480 = vtanh.pop %v1464
    %v1481 = vtanh.pop %v1465
    %v1482 = vadd.f32 %v1466, 1.0
    %v1483 = vadd.f32 %v1467, 1.0
    %v1484 = vadd.f32 %v1468, 1.0
    %v1485 = vadd.f32 %v1469, 1.0
    %v1486 = vadd.f32 %v1470, 1.0
    %v1487 = vadd.f32 %v1471, 1.0
    %v1488 = vadd.f32 %v1472, 1.0
    %v1489 = vadd.f32 %v1473, 1.0
    %v1490 = vadd.f32 %v1474, 1.0
    %v1491 = vadd.f32 %v1475, 1.0
    %v1492 = vadd.f32 %v1476, 1.0
    %v1493 = vadd.f32 %v1477, 1.0
    %v1494 = vadd.f32 %v1478, 1.0
    %v1495 = vadd.f32 %v1479, 1.0
    %v1496 = vadd.f32 %v1480, 1.0
    %v1497 = vadd.f32 %v1481, 1.0
    %v1498 = vmul.f32 %v1370, %v1482
    %v1499 = vmul.f32 %v1371, %v1483
    %v1500 = vmul.f32 %v1372, %v1484
    %v1501 = vmul.f32 %v1373, %v1485
    %v1502 = vmul.f32 %v1374, %v1486
    %v1503 = vmul.f32 %v1375, %v1487
    %v1504 = vmul.f32 %v1376, %v1488
    %v1505 = vmul.f32 %v1377, %v1489
    %v1506 = vmul.f32 %v1378, %v1490
    %v1507 = vmul.f32 %v1379, %v1491
    %v1508 = vmul.f32 %v1380, %v1492
    %v1509 = vmul.f32 %v1381, %v1493
    %v1510 = vmul.f32 %v1382, %v1494
    %v1511 = vmul.f32 %v1383, %v1495
    %v1512 = vmul.f32 %v1384, %v1496
    %v1513 = vmul.f32 %v1385, %v1497
    %v1514 = vld [vmem:[#allocation5] sm:$0xff]
    %v1515 = vld [vmem:[#allocation5 + $0x8] sm:$0xff]
    %v1516 = vpack.c.bf16 %v1515, %v1514
    %v1518 = vlaneseq
    %v1519 = vshrl.u32 %v1518, 7
    %v1520 = vsub.s32 0, %v1519
    %v1521 = vrot.slane %v906, %v1520
    %v1522 = vlaneseq
    %v1523 = vshrl.u32 %v1522, 7
    %v1524 = vsub.s32 1, %v1523
    %v1525 = vrot.slane %v906, %v1524
    %v1526 = vlaneseq
    %v1527 = vshrl.u32 %v1526, 7
    %v1528 = vsub.s32 2, %v1527
    %v1529 = vrot.slane %v906, %v1528
    %v1530 = vlaneseq
    %v1531 = vshrl.u32 %v1530, 7
    %v1532 = vsub.s32 3, %v1531
    %v1533 = vrot.slane %v906, %v1532
    %v1570 = vunpack.c.l.b16 %v169
    %v1571 = vunpack.c.h.b16 %v169
    %v1572 = vunpack.c.l.b16 %v170
    %v1573 = vunpack.c.h.b16 %v170
    %v1574 = vunpack.c.l.b16 %v171
    %v1575 = vunpack.c.h.b16 %v171
    %v1576 = vunpack.c.l.b16 %v172
    %v1577 = vunpack.c.h.b16 %v172
    %v1578 = vunpack.c.l.b16 %v173
    %v1579 = vunpack.c.h.b16 %v173
    %v1580 = vunpack.c.l.b16 %v174
    %v1581 = vunpack.c.h.b16 %v174
    %v1582 = vunpack.c.l.b16 %v175
    %v1583 = vunpack.c.h.b16 %v175
    %v1584 = vunpack.c.l.b16 %v176
    %v1585 = vunpack.c.h.b16 %v176
    %v1586 = vunpack.c.l.b16 %v177
    %v1587 = vunpack.c.h.b16 %v177
    %v1588 = vunpack.c.l.b16 %v178
    %v1589 = vunpack.c.h.b16 %v178
    %v1590 = vunpack.c.l.b16 %v179
    %v1591 = vunpack.c.h.b16 %v179
    %v1592 = vunpack.c.l.b16 %v180
    %v1593 = vunpack.c.h.b16 %v180
    %v1594 = vunpack.c.l.b16 %v181
    %v1595 = vunpack.c.h.b16 %v181
    %v1596 = vunpack.c.l.b16 %v182
    %v1597 = vunpack.c.h.b16 %v182
    %v1598 = vunpack.c.l.b16 %v183
    %v1599 = vunpack.c.h.b16 %v183
    %v1600 = vunpack.c.l.b16 %v184
    %v1601 = vunpack.c.h.b16 %v184
    %v1602 = vunpack.c.l.b16 %v185
    %v1603 = vunpack.c.h.b16 %v185
    %v1604 = vunpack.c.l.b16 %v186
    %v1605 = vunpack.c.h.b16 %v186
    %v1606 = vunpack.c.l.b16 %v187
    %v1607 = vunpack.c.h.b16 %v187
    %v1608 = vunpack.c.l.b16 %v188
    %v1609 = vunpack.c.h.b16 %v188
    %v1610 = vunpack.c.l.b16 %v189
    %v1611 = vunpack.c.h.b16 %v189
    %v1612 = vunpack.c.l.b16 %v190
    %v1613 = vunpack.c.h.b16 %v190
    %v1614 = vunpack.c.l.b16 %v191
    %v1615 = vunpack.c.h.b16 %v191
    %v1616 = vunpack.c.l.b16 %v192
    %v1617 = vunpack.c.h.b16 %v192
    %v1618 = vunpack.c.l.b16 %v193
    %v1619 = vunpack.c.h.b16 %v193
    %v1620 = vunpack.c.l.b16 %v194
    %v1621 = vunpack.c.h.b16 %v194
    %v1622 = vunpack.c.l.b16 %v195
    %v1623 = vunpack.c.h.b16 %v195
    %v1624 = vunpack.c.l.b16 %v196
    %v1625 = vunpack.c.h.b16 %v196
    %v1626 = vunpack.c.l.b16 %v197
    %v1627 = vunpack.c.h.b16 %v197
    %v1628 = vunpack.c.l.b16 %v198
    %v1629 = vunpack.c.h.b16 %v198
    %v1630 = vunpack.c.l.b16 %v199
    %v1631 = vunpack.c.h.b16 %v199
    %v1632 = vunpack.c.l.b16 %v200
    %v1633 = vunpack.c.h.b16 %v200
    %v1634 = vpack.c.b16 %v1574, %v1570
    %v1635 = vpack.c.b16 %v1575, %v1571
    %v1636 = vpack.c.b16 %v1576, %v1572
    %v1637 = vpack.c.b16 %v1577, %v1573
    %v1638 = vpack.c.b16 %v1582, %v1578
    %v1639 = vpack.c.b16 %v1583, %v1579
    %v1640 = vpack.c.b16 %v1584, %v1580
    %v1641 = vpack.c.b16 %v1585, %v1581
    %v1642 = vpack.c.b16 %v1590, %v1586
    %v1643 = vpack.c.b16 %v1591, %v1587
    %v1644 = vpack.c.b16 %v1592, %v1588
    %v1645 = vpack.c.b16 %v1593, %v1589
    %v1646 = vpack.c.b16 %v1598, %v1594
    %v1647 = vpack.c.b16 %v1599, %v1595
    %v1648 = vpack.c.b16 %v1600, %v1596
    %v1649 = vpack.c.b16 %v1601, %v1597
    %v1650 = vpack.c.b16 %v1606, %v1602
    %v1651 = vpack.c.b16 %v1607, %v1603
    %v1652 = vpack.c.b16 %v1608, %v1604
    %v1653 = vpack.c.b16 %v1609, %v1605
    %v1654 = vpack.c.b16 %v1614, %v1610
    %v1655 = vpack.c.b16 %v1615, %v1611
    %v1656 = vpack.c.b16 %v1616, %v1612
    %v1657 = vpack.c.b16 %v1617, %v1613
    %v1658 = vpack.c.b16 %v1622, %v1618
    %v1659 = vpack.c.b16 %v1623, %v1619
    %v1660 = vpack.c.b16 %v1624, %v1620
    %v1661 = vpack.c.b16 %v1625, %v1621
    %v1662 = vpack.c.b16 %v1630, %v1626
    %v1663 = vpack.c.b16 %v1631, %v1627
    %v1664 = vpack.c.b16 %v1632, %v1628
    %v1665 = vpack.c.b16 %v1633, %v1629
    %1698 = vmatprep.subr.bf16.mxu0 %v1663
    %1699 = vmatpush1.bf16.msra.mxu0 %v1662
    %1700 = vmatprep.subr.bf16.mxu0 %v1659
    %1701 = vmatpush1.bf16.msra.mxu0 %v1658
    %1702 = vmatprep.subr.bf16.mxu0 %v1655
    %1703 = vmatpush1.bf16.msra.mxu0 %v1654
    %1704 = vmatprep.subr.bf16.mxu0 %v1651
    %1705 = vmatpush1.bf16.msra.mxu0 %v1650
    %1706 = vmatprep.subr.bf16.mxu0 %v1647
    %1707 = vmatpush1.bf16.msra.mxu0 %v1646
    %1708 = vmatprep.subr.bf16.mxu0 %v1643
    %1709 = vmatpush1.bf16.msra.mxu0 %v1642
    %1710 = vmatprep.subr.bf16.mxu0 %v1639
    %1711 = vmatpush1.bf16.msra.mxu0 %v1638
    %1712 = vmatprep.subr.bf16.mxu0 %v1635
    %1713 = vmatpush1.bf16.msra.mxu0 %v1634
    %1714 = vmatprep.subr.bf16.mxu0 0
    %1715 = vmatpush2.bf16.msra.mxu0 0
    %1716 = vmatprep.subr.bf16.mxu0 0
    %1717 = vmatpush2.bf16.msra.mxu0 0
    %1718 = vmatprep.subr.bf16.mxu0 0
    %1719 = vmatpush2.bf16.msra.mxu0 0
    %1720 = vmatprep.subr.bf16.mxu0 0
    %1721 = vmatpush2.bf16.msra.mxu0 0
    %1722 = vmatprep.subr.bf16.mxu0 0
    %1723 = vmatpush2.bf16.msra.mxu0 0
    %1724 = vmatprep.subr.bf16.mxu0 0
    %1725 = vmatpush2.bf16.msra.mxu0 0
    %1726 = vmatprep.subr.bf16.mxu0 0
    %1727 = vmatpush2.bf16.msra.mxu0 0
    %1728 = vmatprep.subr.bf16.mxu0 0
    %1729 = vmatpush2.bf16.msra.mxu0 0
    %1730 = vmatprep.mubr.bf16.mxu0 0
    %1731 = vmatmul.mubr.bf16.gmra.mxu0 %v1516
    %v1732 = vpop.f32.mrf.mxu0
    %v1733 = vadd.f32 %v1521, %v1732
    %v1734 = vpop.f32.mrf.mxu0
    %v1735 = vadd.f32 %v1525, %v1734
    %v1736 = vpop.f32.mrf.mxu0
    %v1737 = vadd.f32 %v1521, %v1736
    %v1738 = vpop.f32.mrf.mxu0
    %v1739 = vadd.f32 %v1525, %v1738
    %1740 = vdwg.mxu0
    %1741 = vmatprep.subr.bf16.mxu0 %v1665
    %1742 = vmatpush1.bf16.msra.mxu0 %v1664
    %1743 = vmatprep.subr.bf16.mxu0 %v1661
    %1744 = vmatpush1.bf16.msra.mxu0 %v1660
    %1745 = vmatprep.subr.bf16.mxu0 %v1657
    %1746 = vmatpush1.bf16.msra.mxu0 %v1656
    %1747 = vmatprep.subr.bf16.mxu0 %v1653
    %1748 = vmatpush1.bf16.msra.mxu0 %v1652
    %1749 = vmatprep.subr.bf16.mxu0 %v1649
    %1750 = vmatpush1.bf16.msra.mxu0 %v1648
    %1751 = vmatprep.subr.bf16.mxu0 %v1645
    %1752 = vmatpush1.bf16.msra.mxu0 %v1644
    %1753 = vmatprep.subr.bf16.mxu0 %v1641
    %1754 = vmatpush1.bf16.msra.mxu0 %v1640
    %1755 = vmatprep.subr.bf16.mxu0 %v1637
    %1756 = vmatpush1.bf16.msra.mxu0 %v1636
    %1757 = vmatprep.subr.bf16.mxu0 0
    %1758 = vmatpush2.bf16.msra.mxu0 0
    %1759 = vmatprep.subr.bf16.mxu0 0
    %1760 = vmatpush2.bf16.msra.mxu0 0
    %1761 = vmatprep.subr.bf16.mxu0 0
    %1762 = vmatpush2.bf16.msra.mxu0 0
    %1763 = vmatprep.subr.bf16.mxu0 0
    %1764 = vmatpush2.bf16.msra.mxu0 0
    %1765 = vmatprep.subr.bf16.mxu0 0
    %1766 = vmatpush2.bf16.msra.mxu0 0
    %1767 = vmatprep.subr.bf16.mxu0 0
    %1768 = vmatpush2.bf16.msra.mxu0 0
    %1769 = vmatprep.subr.bf16.mxu0 0
    %1770 = vmatpush2.bf16.msra.mxu0 0
    %1771 = vmatprep.subr.bf16.mxu0 0
    %1772 = vmatpush2.bf16.msra.mxu0 0
    %1773 = vmatprep.mubr.bf16.mxu0 0
    %1774 = vmatmul.mubr.bf16.gmra.mxu0 %v1516
    %v1775 = vpop.f32.mrf.mxu0
    %v1776 = vadd.f32 %v1529, %v1775
    %v1777 = vpop.f32.mrf.mxu0
    %v1778 = vadd.f32 %v1533, %v1777
    %v1779 = vpop.f32.mrf.mxu0
    %v1780 = vadd.f32 %v1529, %v1779
    %v1781 = vpop.f32.mrf.mxu0
    %v1782 = vadd.f32 %v1533, %v1781
    %1783 = vdwg.mxu0
    %v1784 = vtanh.pop %v1733
    %v1785 = vtanh.pop %v1735
    %v1786 = vtanh.pop %v1776
    %v1787 = vtanh.pop %v1778
    %v1788 = vtanh.pop %v1737
    %v1789 = vtanh.pop %v1739
    %v1790 = vtanh.pop %v1780
    %v1791 = vtanh.pop %v1782
    %v1792 = vpack.c.bf16 %v1502, %v1498
    %v1793 = vpack.c.bf16 %v1503, %v1499
    %v1794 = vpack.c.bf16 %v1504, %v1500
    %v1795 = vpack.c.bf16 %v1505, %v1501
    %v1796 = vpack.c.bf16 %v1510, %v1506
    %v1797 = vpack.c.bf16 %v1511, %v1507
    %v1798 = vpack.c.bf16 %v1512, %v1508
    %v1799 = vpack.c.bf16 %v1513, %v1509
    %v1801 = vlaneseq
    %v1802 = vshrl.u32 %v1801, 7
    %v1803 = vsub.s32 0, %v1802
    %v1804 = vrot.slane %v907, %v1803
    %v1805 = vlaneseq
    %v1806 = vshrl.u32 %v1805, 7
    %v1807 = vsub.s32 1, %v1806
    %v1808 = vrot.slane %v907, %v1807
    %v1809 = vlaneseq
    %v1810 = vshrl.u32 %v1809, 7
    %v1811 = vsub.s32 2, %v1810
    %v1812 = vrot.slane %v907, %v1811
    %v1813 = vlaneseq
    %v1814 = vshrl.u32 %v1813, 7
    %v1815 = vsub.s32 3, %v1814
    %v1816 = vrot.slane %v907, %v1815
    %v1949 = vunpack.c.l.b16 %v201
    %v1950 = vunpack.c.h.b16 %v201
    %v1951 = vunpack.c.l.b16 %v202
    %v1952 = vunpack.c.h.b16 %v202
    %v1953 = vunpack.c.l.b16 %v203
    %v1954 = vunpack.c.h.b16 %v203
    %v1955 = vunpack.c.l.b16 %v204
    %v1956 = vunpack.c.h.b16 %v204
    %v1957 = vunpack.c.l.b16 %v205
    %v1958 = vunpack.c.h.b16 %v205
    %v1959 = vunpack.c.l.b16 %v206
    %v1960 = vunpack.c.h.b16 %v206
    %v1961 = vunpack.c.l.b16 %v207
    %v1962 = vunpack.c.h.b16 %v207
    %v1963 = vunpack.c.l.b16 %v208
    %v1964 = vunpack.c.h.b16 %v208
    %v1965 = vunpack.c.l.b16 %v209
    %v1966 = vunpack.c.h.b16 %v209
    %v1967 = vunpack.c.l.b16 %v210
    %v1968 = vunpack.c.h.b16 %v210
    %v1969 = vunpack.c.l.b16 %v211
    %v1970 = vunpack.c.h.b16 %v211
    %v1971 = vunpack.c.l.b16 %v212
    %v1972 = vunpack.c.h.b16 %v212
    %v1973 = vunpack.c.l.b16 %v213
    %v1974 = vunpack.c.h.b16 %v213
    %v1975 = vunpack.c.l.b16 %v214
    %v1976 = vunpack.c.h.b16 %v214
    %v1977 = vunpack.c.l.b16 %v215
    %v1978 = vunpack.c.h.b16 %v215
    %v1979 = vunpack.c.l.b16 %v216
    %v1980 = vunpack.c.h.b16 %v216
    %v1981 = vunpack.c.l.b16 %v217
    %v1982 = vunpack.c.h.b16 %v217
    %v1983 = vunpack.c.l.b16 %v218
    %v1984 = vunpack.c.h.b16 %v218
    %v1985 = vunpack.c.l.b16 %v219
    %v1986 = vunpack.c.h.b16 %v219
    %v1987 = vunpack.c.l.b16 %v220
    %v1988 = vunpack.c.h.b16 %v220
    %v1989 = vunpack.c.l.b16 %v221
    %v1990 = vunpack.c.h.b16 %v221
    %v1991 = vunpack.c.l.b16 %v222
    %v1992 = vunpack.c.h.b16 %v222
    %v1993 = vunpack.c.l.b16 %v223
    %v1994 = vunpack.c.h.b16 %v223
    %v1995 = vunpack.c.l.b16 %v224
    %v1996 = vunpack.c.h.b16 %v224
    %v1997 = vunpack.c.l.b16 %v225
    %v1998 = vunpack.c.h.b16 %v225
    %v1999 = vunpack.c.l.b16 %v226
    %v2000 = vunpack.c.h.b16 %v226
    %v2001 = vunpack.c.l.b16 %v227
    %v2002 = vunpack.c.h.b16 %v227
    %v2003 = vunpack.c.l.b16 %v228
    %v2004 = vunpack.c.h.b16 %v228
    %v2005 = vunpack.c.l.b16 %v229
    %v2006 = vunpack.c.h.b16 %v229
    %v2007 = vunpack.c.l.b16 %v230
    %v2008 = vunpack.c.h.b16 %v230
    %v2009 = vunpack.c.l.b16 %v231
    %v2010 = vunpack.c.h.b16 %v231
    %v2011 = vunpack.c.l.b16 %v232
    %v2012 = vunpack.c.h.b16 %v232
    %v2013 = vunpack.c.l.b16 %v233
    %v2014 = vunpack.c.h.b16 %v233
    %v2015 = vunpack.c.l.b16 %v234
    %v2016 = vunpack.c.h.b16 %v234
    %v2017 = vunpack.c.l.b16 %v235
    %v2018 = vunpack.c.h.b16 %v235
    %v2019 = vunpack.c.l.b16 %v236
    %v2020 = vunpack.c.h.b16 %v236
    %v2021 = vunpack.c.l.b16 %v237
    %v2022 = vunpack.c.h.b16 %v237
    %v2023 = vunpack.c.l.b16 %v238
    %v2024 = vunpack.c.h.b16 %v238
    %v2025 = vunpack.c.l.b16 %v239
    %v2026 = vunpack.c.h.b16 %v239
    %v2027 = vunpack.c.l.b16 %v240
    %v2028 = vunpack.c.h.b16 %v240
    %v2029 = vunpack.c.l.b16 %v241
    %v2030 = vunpack.c.h.b16 %v241
    %v2031 = vunpack.c.l.b16 %v242
    %v2032 = vunpack.c.h.b16 %v242
    %v2033 = vunpack.c.l.b16 %v243
    %v2034 = vunpack.c.h.b16 %v243
    %v2035 = vunpack.c.l.b16 %v244
    %v2036 = vunpack.c.h.b16 %v244
    %v2037 = vunpack.c.l.b16 %v245
    %v2038 = vunpack.c.h.b16 %v245
    %v2039 = vunpack.c.l.b16 %v246
    %v2040 = vunpack.c.h.b16 %v246
    %v2041 = vunpack.c.l.b16 %v247
    %v2042 = vunpack.c.h.b16 %v247
    %v2043 = vunpack.c.l.b16 %v248
    %v2044 = vunpack.c.h.b16 %v248
    %v2045 = vunpack.c.l.b16 %v249
    %v2046 = vunpack.c.h.b16 %v249
    %v2047 = vunpack.c.l.b16 %v250
    %v2048 = vunpack.c.h.b16 %v250
    %v2049 = vunpack.c.l.b16 %v251
    %v2050 = vunpack.c.h.b16 %v251
    %v2051 = vunpack.c.l.b16 %v252
    %v2052 = vunpack.c.h.b16 %v252
    %v2053 = vunpack.c.l.b16 %v253
    %v2054 = vunpack.c.h.b16 %v253
    %v2055 = vunpack.c.l.b16 %v254
    %v2056 = vunpack.c.h.b16 %v254
    %v2057 = vunpack.c.l.b16 %v255
    %v2058 = vunpack.c.h.b16 %v255
    %v2059 = vunpack.c.l.b16 %v256
    %v2060 = vunpack.c.h.b16 %v256
    %v2061 = vunpack.c.l.b16 %v257
    %v2062 = vunpack.c.h.b16 %v257
    %v2063 = vunpack.c.l.b16 %v258
    %v2064 = vunpack.c.h.b16 %v258
    %v2065 = vunpack.c.l.b16 %v259
    %v2066 = vunpack.c.h.b16 %v259
    %v2067 = vunpack.c.l.b16 %v260
    %v2068 = vunpack.c.h.b16 %v260
    %v2069 = vunpack.c.l.b16 %v261
    %v2070 = vunpack.c.h.b16 %v261
    %v2071 = vunpack.c.l.b16 %v262
    %v2072 = vunpack.c.h.b16 %v262
    %v2073 = vunpack.c.l.b16 %v263
    %v2074 = vunpack.c.h.b16 %v263
    %v2075 = vunpack.c.l.b16 %v264
    %v2076 = vunpack.c.h.b16 %v264
    %v2077 = vunpack.c.l.b16 %v265
    %v2078 = vunpack.c.h.b16 %v265
    %v2079 = vunpack.c.l.b16 %v266
    %v2080 = vunpack.c.h.b16 %v266
    %v2081 = vunpack.c.l.b16 %v267
    %v2082 = vunpack.c.h.b16 %v267
    %v2083 = vunpack.c.l.b16 %v268
    %v2084 = vunpack.c.h.b16 %v268
    %v2085 = vunpack.c.l.b16 %v269
    %v2086 = vunpack.c.h.b16 %v269
    %v2087 = vunpack.c.l.b16 %v270
    %v2088 = vunpack.c.h.b16 %v270
    %v2089 = vunpack.c.l.b16 %v271
    %v2090 = vunpack.c.h.b16 %v271
    %v2091 = vunpack.c.l.b16 %v272
    %v2092 = vunpack.c.h.b16 %v272
    %v2093 = vunpack.c.l.b16 %v273
    %v2094 = vunpack.c.h.b16 %v273
    %v2095 = vunpack.c.l.b16 %v274
    %v2096 = vunpack.c.h.b16 %v274
    %v2097 = vunpack.c.l.b16 %v275
    %v2098 = vunpack.c.h.b16 %v275
    %v2099 = vunpack.c.l.b16 %v276
    %v2100 = vunpack.c.h.b16 %v276
    %v2101 = vunpack.c.l.b16 %v277
    %v2102 = vunpack.c.h.b16 %v277
    %v2103 = vunpack.c.l.b16 %v278
    %v2104 = vunpack.c.h.b16 %v278
    %v2105 = vunpack.c.l.b16 %v279
    %v2106 = vunpack.c.h.b16 %v279
    %v2107 = vunpack.c.l.b16 %v280
    %v2108 = vunpack.c.h.b16 %v280
    %v2109 = vunpack.c.l.b16 %v281
    %v2110 = vunpack.c.h.b16 %v281
    %v2111 = vunpack.c.l.b16 %v282
    %v2112 = vunpack.c.h.b16 %v282
    %v2113 = vunpack.c.l.b16 %v283
    %v2114 = vunpack.c.h.b16 %v283
    %v2115 = vunpack.c.l.b16 %v284
    %v2116 = vunpack.c.h.b16 %v284
    %v2117 = vunpack.c.l.b16 %v285
    %v2118 = vunpack.c.h.b16 %v285
    %v2119 = vunpack.c.l.b16 %v286
    %v2120 = vunpack.c.h.b16 %v286
    %v2121 = vunpack.c.l.b16 %v287
    %v2122 = vunpack.c.h.b16 %v287
    %v2123 = vunpack.c.l.b16 %v288
    %v2124 = vunpack.c.h.b16 %v288
    %v2125 = vunpack.c.l.b16 %v289
    %v2126 = vunpack.c.h.b16 %v289
    %v2127 = vunpack.c.l.b16 %v290
    %v2128 = vunpack.c.h.b16 %v290
    %v2129 = vunpack.c.l.b16 %v291
    %v2130 = vunpack.c.h.b16 %v291
    %v2131 = vunpack.c.l.b16 %v292
    %v2132 = vunpack.c.h.b16 %v292
    %v2133 = vunpack.c.l.b16 %v293
    %v2134 = vunpack.c.h.b16 %v293
    %v2135 = vunpack.c.l.b16 %v294
    %v2136 = vunpack.c.h.b16 %v294
    %v2137 = vunpack.c.l.b16 %v295
    %v2138 = vunpack.c.h.b16 %v295
    %v2139 = vunpack.c.l.b16 %v296
    %v2140 = vunpack.c.h.b16 %v296
    %v2141 = vunpack.c.l.b16 %v297
    %v2142 = vunpack.c.h.b16 %v297
    %v2143 = vunpack.c.l.b16 %v298
    %v2144 = vunpack.c.h.b16 %v298
    %v2145 = vunpack.c.l.b16 %v299
    %v2146 = vunpack.c.h.b16 %v299
    %v2147 = vunpack.c.l.b16 %v300
    %v2148 = vunpack.c.h.b16 %v300
    %v2149 = vunpack.c.l.b16 %v301
    %v2150 = vunpack.c.h.b16 %v301
    %v2151 = vunpack.c.l.b16 %v302
    %v2152 = vunpack.c.h.b16 %v302
    %v2153 = vunpack.c.l.b16 %v303
    %v2154 = vunpack.c.h.b16 %v303
    %v2155 = vunpack.c.l.b16 %v304
    %v2156 = vunpack.c.h.b16 %v304
    %v2157 = vunpack.c.l.b16 %v305
    %v2158 = vunpack.c.h.b16 %v305
    %v2159 = vunpack.c.l.b16 %v306
    %v2160 = vunpack.c.h.b16 %v306
    %v2161 = vunpack.c.l.b16 %v307
    %v2162 = vunpack.c.h.b16 %v307
    %v2163 = vunpack.c.l.b16 %v308
    %v2164 = vunpack.c.h.b16 %v308
    %v2165 = vunpack.c.l.b16 %v309
    %v2166 = vunpack.c.h.b16 %v309
    %v2167 = vunpack.c.l.b16 %v310
    %v2168 = vunpack.c.h.b16 %v310
    %v2169 = vunpack.c.l.b16 %v311
    %v2170 = vunpack.c.h.b16 %v311
    %v2171 = vunpack.c.l.b16 %v312
    %v2172 = vunpack.c.h.b16 %v312
    %v2173 = vunpack.c.l.b16 %v313
    %v2174 = vunpack.c.h.b16 %v313
    %v2175 = vunpack.c.l.b16 %v314
    %v2176 = vunpack.c.h.b16 %v314
    %v2177 = vunpack.c.l.b16 %v315
    %v2178 = vunpack.c.h.b16 %v315
    %v2179 = vunpack.c.l.b16 %v316
    %v2180 = vunpack.c.h.b16 %v316
    %v2181 = vunpack.c.l.b16 %v317
    %v2182 = vunpack.c.h.b16 %v317
    %v2183 = vunpack.c.l.b16 %v318
    %v2184 = vunpack.c.h.b16 %v318
    %v2185 = vunpack.c.l.b16 %v319
    %v2186 = vunpack.c.h.b16 %v319
    %v2187 = vunpack.c.l.b16 %v320
    %v2188 = vunpack.c.h.b16 %v320
    %v2189 = vunpack.c.l.b16 %v321
    %v2190 = vunpack.c.h.b16 %v321
    %v2191 = vunpack.c.l.b16 %v322
    %v2192 = vunpack.c.h.b16 %v322
    %v2193 = vunpack.c.l.b16 %v323
    %v2194 = vunpack.c.h.b16 %v323
    %v2195 = vunpack.c.l.b16 %v324
    %v2196 = vunpack.c.h.b16 %v324
    %v2197 = vunpack.c.l.b16 %v325
    %v2198 = vunpack.c.h.b16 %v325
    %v2199 = vunpack.c.l.b16 %v326
    %v2200 = vunpack.c.h.b16 %v326
    %v2201 = vunpack.c.l.b16 %v327
    %v2202 = vunpack.c.h.b16 %v327
    %v2203 = vunpack.c.l.b16 %v328
    %v2204 = vunpack.c.h.b16 %v328
    %v2205 = vpack.c.b16 %v1953, %v1949
    %v2206 = vpack.c.b16 %v1954, %v1950
    %v2207 = vpack.c.b16 %v1955, %v1951
    %v2208 = vpack.c.b16 %v1956, %v1952
    %v2209 = vpack.c.b16 %v1961, %v1957
    %v2210 = vpack.c.b16 %v1962, %v1958
    %v2211 = vpack.c.b16 %v1963, %v1959
    %v2212 = vpack.c.b16 %v1964, %v1960
    %v2213 = vpack.c.b16 %v1969, %v1965
    %v2214 = vpack.c.b16 %v1970, %v1966
    %v2215 = vpack.c.b16 %v1971, %v1967
    %v2216 = vpack.c.b16 %v1972, %v1968
    %v2217 = vpack.c.b16 %v1977, %v1973
    %v2218 = vpack.c.b16 %v1978, %v1974
    %v2219 = vpack.c.b16 %v1979, %v1975
    %v2220 = vpack.c.b16 %v1980, %v1976
    %v2221 = vpack.c.b16 %v1985, %v1981
    %v2222 = vpack.c.b16 %v1986, %v1982
    %v2223 = vpack.c.b16 %v1987, %v1983
    %v2224 = vpack.c.b16 %v1988, %v1984
    %v2225 = vpack.c.b16 %v1993, %v1989
    %v2226 = vpack.c.b16 %v1994, %v1990
    %v2227 = vpack.c.b16 %v1995, %v1991
    %v2228 = vpack.c.b16 %v1996, %v1992
    %v2229 = vpack.c.b16 %v2001, %v1997
    %v2230 = vpack.c.b16 %v2002, %v1998
    %v2231 = vpack.c.b16 %v2003, %v1999
    %v2232 = vpack.c.b16 %v2004, %v2000
    %v2233 = vpack.c.b16 %v2009, %v2005
    %v2234 = vpack.c.b16 %v2010, %v2006
    %v2235 = vpack.c.b16 %v2011, %v2007
    %v2236 = vpack.c.b16 %v2012, %v2008
    %v2237 = vpack.c.b16 %v2017, %v2013
    %v2238 = vpack.c.b16 %v2018, %v2014
    %v2239 = vpack.c.b16 %v2019, %v2015
    %v2240 = vpack.c.b16 %v2020, %v2016
    %v2241 = vpack.c.b16 %v2025, %v2021
    %v2242 = vpack.c.b16 %v2026, %v2022
    %v2243 = vpack.c.b16 %v2027, %v2023
    %v2244 = vpack.c.b16 %v2028, %v2024
    %v2245 = vpack.c.b16 %v2033, %v2029
    %v2246 = vpack.c.b16 %v2034, %v2030
    %v2247 = vpack.c.b16 %v2035, %v2031
    %v2248 = vpack.c.b16 %v2036, %v2032
    %v2249 = vpack.c.b16 %v2041, %v2037
    %v2250 = vpack.c.b16 %v2042, %v2038
    %v2251 = vpack.c.b16 %v2043, %v2039
    %v2252 = vpack.c.b16 %v2044, %v2040
    %v2253 = vpack.c.b16 %v2049, %v2045
    %v2254 = vpack.c.b16 %v2050, %v2046
    %v2255 = vpack.c.b16 %v2051, %v2047
    %v2256 = vpack.c.b16 %v2052, %v2048
    %v2257 = vpack.c.b16 %v2057, %v2053
    %v2258 = vpack.c.b16 %v2058, %v2054
    %v2259 = vpack.c.b16 %v2059, %v2055
    %v2260 = vpack.c.b16 %v2060, %v2056
    %v2261 = vpack.c.b16 %v2065, %v2061
    %v2262 = vpack.c.b16 %v2066, %v2062
    %v2263 = vpack.c.b16 %v2067, %v2063
    %v2264 = vpack.c.b16 %v2068, %v2064
    %v2265 = vpack.c.b16 %v2073, %v2069
    %v2266 = vpack.c.b16 %v2074, %v2070
    %v2267 = vpack.c.b16 %v2075, %v2071
    %v2268 = vpack.c.b16 %v2076, %v2072
    %v2269 = vpack.c.b16 %v2081, %v2077
    %v2270 = vpack.c.b16 %v2082, %v2078
    %v2271 = vpack.c.b16 %v2083, %v2079
    %v2272 = vpack.c.b16 %v2084, %v2080
    %v2273 = vpack.c.b16 %v2089, %v2085
    %v2274 = vpack.c.b16 %v2090, %v2086
    %v2275 = vpack.c.b16 %v2091, %v2087
    %v2276 = vpack.c.b16 %v2092, %v2088
    %v2277 = vpack.c.b16 %v2097, %v2093
    %v2278 = vpack.c.b16 %v2098, %v2094
    %v2279 = vpack.c.b16 %v2099, %v2095
    %v2280 = vpack.c.b16 %v2100, %v2096
    %v2281 = vpack.c.b16 %v2105, %v2101
    %v2282 = vpack.c.b16 %v2106, %v2102
    %v2283 = vpack.c.b16 %v2107, %v2103
    %v2284 = vpack.c.b16 %v2108, %v2104
    %v2285 = vpack.c.b16 %v2113, %v2109
    %v2286 = vpack.c.b16 %v2114, %v2110
    %v2287 = vpack.c.b16 %v2115, %v2111
    %v2288 = vpack.c.b16 %v2116, %v2112
    %v2289 = vpack.c.b16 %v2121, %v2117
    %v2290 = vpack.c.b16 %v2122, %v2118
    %v2291 = vpack.c.b16 %v2123, %v2119
    %v2292 = vpack.c.b16 %v2124, %v2120
    %v2293 = vpack.c.b16 %v2129, %v2125
    %v2294 = vpack.c.b16 %v2130, %v2126
    %v2295 = vpack.c.b16 %v2131, %v2127
    %v2296 = vpack.c.b16 %v2132, %v2128
    %v2297 = vpack.c.b16 %v2137, %v2133
    %v2298 = vpack.c.b16 %v2138, %v2134
    %v2299 = vpack.c.b16 %v2139, %v2135
    %v2300 = vpack.c.b16 %v2140, %v2136
    %v2301 = vpack.c.b16 %v2145, %v2141
    %v2302 = vpack.c.b16 %v2146, %v2142
    %v2303 = vpack.c.b16 %v2147, %v2143
    %v2304 = vpack.c.b16 %v2148, %v2144
    %v2305 = vpack.c.b16 %v2153, %v2149
    %v2306 = vpack.c.b16 %v2154, %v2150
    %v2307 = vpack.c.b16 %v2155, %v2151
    %v2308 = vpack.c.b16 %v2156, %v2152
    %v2309 = vpack.c.b16 %v2161, %v2157
    %v2310 = vpack.c.b16 %v2162, %v2158
    %v2311 = vpack.c.b16 %v2163, %v2159
    %v2312 = vpack.c.b16 %v2164, %v2160
    %v2313 = vpack.c.b16 %v2169, %v2165
    %v2314 = vpack.c.b16 %v2170, %v2166
    %v2315 = vpack.c.b16 %v2171, %v2167
    %v2316 = vpack.c.b16 %v2172, %v2168
    %v2317 = vpack.c.b16 %v2177, %v2173
    %v2318 = vpack.c.b16 %v2178, %v2174
    %v2319 = vpack.c.b16 %v2179, %v2175
    %v2320 = vpack.c.b16 %v2180, %v2176
    %v2321 = vpack.c.b16 %v2185, %v2181
    %v2322 = vpack.c.b16 %v2186, %v2182
    %v2323 = vpack.c.b16 %v2187, %v2183
    %v2324 = vpack.c.b16 %v2188, %v2184
    %v2325 = vpack.c.b16 %v2193, %v2189
    %v2326 = vpack.c.b16 %v2194, %v2190
    %v2327 = vpack.c.b16 %v2195, %v2191
    %v2328 = vpack.c.b16 %v2196, %v2192
    %v2329 = vpack.c.b16 %v2201, %v2197
    %v2330 = vpack.c.b16 %v2202, %v2198
    %v2331 = vpack.c.b16 %v2203, %v2199
    %v2332 = vpack.c.b16 %v2204, %v2200
    %2461 = vmatprep.subr.bf16.mxu0 %v2234
    %2462 = vmatpush1.bf16.msra.mxu0 %v2233
    %2463 = vmatprep.subr.bf16.mxu0 %v2230
    %2464 = vmatpush1.bf16.msra.mxu0 %v2229
    %2465 = vmatprep.subr.bf16.mxu0 %v2226
    %2466 = vmatpush1.bf16.msra.mxu0 %v2225
    %2467 = vmatprep.subr.bf16.mxu0 %v2222
    %2468 = vmatpush1.bf16.msra.mxu0 %v2221
    %2469 = vmatprep.subr.bf16.mxu0 %v2218
    %2470 = vmatpush1.bf16.msra.mxu0 %v2217
    %2471 = vmatprep.subr.bf16.mxu0 %v2214
    %2472 = vmatpush1.bf16.msra.mxu0 %v2213
    %2473 = vmatprep.subr.bf16.mxu0 %v2210
    %2474 = vmatpush1.bf16.msra.mxu0 %v2209
    %2475 = vmatprep.subr.bf16.mxu0 %v2206
    %2476 = vmatpush1.bf16.msra.mxu0 %v2205
    %2477 = vmatprep.subr.bf16.mxu0 %v2266
    %2478 = vmatpush2.bf16.msra.mxu0 %v2265
    %2479 = vmatprep.subr.bf16.mxu0 %v2262
    %2480 = vmatpush2.bf16.msra.mxu0 %v2261
    %2481 = vmatprep.subr.bf16.mxu0 %v2258
    %2482 = vmatpush2.bf16.msra.mxu0 %v2257
    %2483 = vmatprep.subr.bf16.mxu0 %v2254
    %2484 = vmatpush2.bf16.msra.mxu0 %v2253
    %2485 = vmatprep.subr.bf16.mxu0 %v2250
    %2486 = vmatpush2.bf16.msra.mxu0 %v2249
    %2487 = vmatprep.subr.bf16.mxu0 %v2246
    %2488 = vmatpush2.bf16.msra.mxu0 %v2245
    %2489 = vmatprep.subr.bf16.mxu0 %v2242
    %2490 = vmatpush2.bf16.msra.mxu0 %v2241
    %2491 = vmatprep.subr.bf16.mxu0 %v2238
    %2492 = vmatpush2.bf16.msra.mxu0 %v2237
    %2493 = vmatprep.mubr.bf16.mxu0 %v1793
    %2494 = vmatmul.mubr.bf16.gmra.mxu0 %v1792
    %v2495 = vpop.f32.mrf.mxu0
    %v2496 = vadd.f32 %v1804, %v2495
    %v2497 = vpop.f32.mrf.mxu0
    %v2498 = vadd.f32 %v1808, %v2497
    %v2499 = vpop.f32.mrf.mxu0
    %v2500 = vadd.f32 %v1804, %v2499
    %v2501 = vpop.f32.mrf.mxu0
    %v2502 = vadd.f32 %v1808, %v2501
    %2503 = vmatprep.mubr.bf16.mxu0 %v1797
    %2504 = vmatmul.mubr.bf16.gmra.mxu0 %v1796
    %v2505 = vpop.f32.mrf.mxu0
    %v2506 = vadd.f32 %v1804, %v2505
    %v2507 = vpop.f32.mrf.mxu0
    %v2508 = vadd.f32 %v1808, %v2507
    %v2509 = vpop.f32.mrf.mxu0
    %v2510 = vadd.f32 %v1804, %v2509
    %v2511 = vpop.f32.mrf.mxu0
    %v2512 = vadd.f32 %v1808, %v2511
    %2513 = vdwg.mxu0
    %2514 = vmatprep.subr.bf16.mxu0 %v2298
    %2515 = vmatpush1.bf16.msra.mxu0 %v2297
    %2516 = vmatprep.subr.bf16.mxu0 %v2294
    %2517 = vmatpush1.bf16.msra.mxu0 %v2293
    %2518 = vmatprep.subr.bf16.mxu0 %v2290
    %2519 = vmatpush1.bf16.msra.mxu0 %v2289
    %2520 = vmatprep.subr.bf16.mxu0 %v2286
    %2521 = vmatpush1.bf16.msra.mxu0 %v2285
    %2522 = vmatprep.subr.bf16.mxu0 %v2282
    %2523 = vmatpush1.bf16.msra.mxu0 %v2281
    %2524 = vmatprep.subr.bf16.mxu0 %v2278
    %2525 = vmatpush1.bf16.msra.mxu0 %v2277
    %2526 = vmatprep.subr.bf16.mxu0 %v2274
    %2527 = vmatpush1.bf16.msra.mxu0 %v2273
    %2528 = vmatprep.subr.bf16.mxu0 %v2270
    %2529 = vmatpush1.bf16.msra.mxu0 %v2269
    %2530 = vmatprep.subr.bf16.mxu0 %v2330
    %2531 = vmatpush2.bf16.msra.mxu0 %v2329
    %2532 = vmatprep.subr.bf16.mxu0 %v2326
    %2533 = vmatpush2.bf16.msra.mxu0 %v2325
    %2534 = vmatprep.subr.bf16.mxu0 %v2322
    %2535 = vmatpush2.bf16.msra.mxu0 %v2321
    %2536 = vmatprep.subr.bf16.mxu0 %v2318
    %2537 = vmatpush2.bf16.msra.mxu0 %v2317
    %2538 = vmatprep.subr.bf16.mxu0 %v2314
    %2539 = vmatpush2.bf16.msra.mxu0 %v2313
    %2540 = vmatprep.subr.bf16.mxu0 %v2310
    %2541 = vmatpush2.bf16.msra.mxu0 %v2309
    %2542 = vmatprep.subr.bf16.mxu0 %v2306
    %2543 = vmatpush2.bf16.msra.mxu0 %v2305
    %2544 = vmatprep.subr.bf16.mxu0 %v2302
    %2545 = vmatpush2.bf16.msra.mxu0 %v2301
    %2546 = vmatprep.mubr.bf16.mxu0 %v1795
    %2547 = vmatmul.mubr.bf16.gmra.mxu0 %v1794
    %v2548 = vpop.f32.mrf.mxu0
    %v2549 = vadd.f32 %v2496, %v2548
    %v2550 = vpop.f32.mrf.mxu0
    %v2551 = vadd.f32 %v2498, %v2550
    %v2552 = vpop.f32.mrf.mxu0
    %v2553 = vadd.f32 %v2500, %v2552
    %v2554 = vpop.f32.mrf.mxu0
    %v2555 = vadd.f32 %v2502, %v2554
    %2556 = vmatprep.mubr.bf16.mxu0 %v1799
    %2557 = vmatmul.mubr.bf16.gmra.mxu0 %v1798
    %v2558 = vpop.f32.mrf.mxu0
    %v2559 = vadd.f32 %v2506, %v2558
    %v2560 = vpop.f32.mrf.mxu0
    %v2561 = vadd.f32 %v2508, %v2560
    %v2562 = vpop.f32.mrf.mxu0
    %v2563 = vadd.f32 %v2510, %v2562
    %v2564 = vpop.f32.mrf.mxu0
    %v2565 = vadd.f32 %v2512, %v2564
    %2566 = vdwg.mxu0
    %2567 = vmatprep.subr.bf16.mxu0 %v2236
    %2568 = vmatpush1.bf16.msra.mxu0 %v2235
    %2569 = vmatprep.subr.bf16.mxu0 %v2232
    %2570 = vmatpush1.bf16.msra.mxu0 %v2231
    %2571 = vmatprep.subr.bf16.mxu0 %v2228
    %2572 = vmatpush1.bf16.msra.mxu0 %v2227
    %2573 = vmatprep.subr.bf16.mxu0 %v2224
    %2574 = vmatpush1.bf16.msra.mxu0 %v2223
    %2575 = vmatprep.subr.bf16.mxu0 %v2220
    %2576 = vmatpush1.bf16.msra.mxu0 %v2219
    %2577 = vmatprep.subr.bf16.mxu0 %v2216
    %2578 = vmatpush1.bf16.msra.mxu0 %v2215
    %2579 = vmatprep.subr.bf16.mxu0 %v2212
    %2580 = vmatpush1.bf16.msra.mxu0 %v2211
    %2581 = vmatprep.subr.bf16.mxu0 %v2208
    %2582 = vmatpush1.bf16.msra.mxu0 %v2207
    %2583 = vmatprep.subr.bf16.mxu0 %v2268
    %2584 = vmatpush2.bf16.msra.mxu0 %v2267
    %2585 = vmatprep.subr.bf16.mxu0 %v2264
    %2586 = vmatpush2.bf16.msra.mxu0 %v2263
    %2587 = vmatprep.subr.bf16.mxu0 %v2260
    %2588 = vmatpush2.bf16.msra.mxu0 %v2259
    %2589 = vmatprep.subr.bf16.mxu0 %v2256
    %2590 = vmatpush2.bf16.msra.mxu0 %v2255
    %2591 = vmatprep.subr.bf16.mxu0 %v2252
    %2592 = vmatpush2.bf16.msra.mxu0 %v2251
    %2593 = vmatprep.subr.bf16.mxu0 %v2248
    %2594 = vmatpush2.bf16.msra.mxu0 %v2247
    %2595 = vmatprep.subr.bf16.mxu0 %v2244
    %2596 = vmatpush2.bf16.msra.mxu0 %v2243
    %2597 = vmatprep.subr.bf16.mxu0 %v2240
    %2598 = vmatpush2.bf16.msra.mxu0 %v2239
    %2599 = vmatprep.mubr.bf16.mxu0 %v1793
    %2600 = vmatmul.mubr.bf16.gmra.mxu0 %v1792
    %v2601 = vpop.f32.mrf.mxu0
    %v2602 = vadd.f32 %v1812, %v2601
    %v2603 = vpop.f32.mrf.mxu0
    %v2604 = vadd.f32 %v1816, %v2603
    %v2605 = vpop.f32.mrf.mxu0
    %v2606 = vadd.f32 %v1812, %v2605
    %v2607 = vpop.f32.mrf.mxu0
    %v2608 = vadd.f32 %v1816, %v2607
    %2609 = vmatprep.mubr.bf16.mxu0 %v1797
    %2610 = vmatmul.mubr.bf16.gmra.mxu0 %v1796
    %v2611 = vpop.f32.mrf.mxu0
    %v2612 = vadd.f32 %v1812, %v2611
    %v2613 = vpop.f32.mrf.mxu0
    %v2614 = vadd.f32 %v1816, %v2613
    %v2615 = vpop.f32.mrf.mxu0
    %v2616 = vadd.f32 %v1812, %v2615
    %v2617 = vpop.f32.mrf.mxu0
    %v2618 = vadd.f32 %v1816, %v2617
    %2619 = vdwg.mxu0
    %2620 = vmatprep.subr.bf16.mxu0 %v2300
    %2621 = vmatpush1.bf16.msra.mxu0 %v2299
    %2622 = vmatprep.subr.bf16.mxu0 %v2296
    %2623 = vmatpush1.bf16.msra.mxu0 %v2295
    %2624 = vmatprep.subr.bf16.mxu0 %v2292
    %2625 = vmatpush1.bf16.msra.mxu0 %v2291
    %2626 = vmatprep.subr.bf16.mxu0 %v2288
    %2627 = vmatpush1.bf16.msra.mxu0 %v2287
    %2628 = vmatprep.subr.bf16.mxu0 %v2284
    %2629 = vmatpush1.bf16.msra.mxu0 %v2283
    %2630 = vmatprep.subr.bf16.mxu0 %v2280
    %2631 = vmatpush1.bf16.msra.mxu0 %v2279
    %2632 = vmatprep.subr.bf16.mxu0 %v2276
    %2633 = vmatpush1.bf16.msra.mxu0 %v2275
    %2634 = vmatprep.subr.bf16.mxu0 %v2272
    %2635 = vmatpush1.bf16.msra.mxu0 %v2271
    %2636 = vmatprep.subr.bf16.mxu0 %v2332
    %2637 = vmatpush2.bf16.msra.mxu0 %v2331
    %2638 = vmatprep.subr.bf16.mxu0 %v2328
    %2639 = vmatpush2.bf16.msra.mxu0 %v2327
    %2640 = vmatprep.subr.bf16.mxu0 %v2324
    %2641 = vmatpush2.bf16.msra.mxu0 %v2323
    %2642 = vmatprep.subr.bf16.mxu0 %v2320
    %2643 = vmatpush2.bf16.msra.mxu0 %v2319
    %2644 = vmatprep.subr.bf16.mxu0 %v2316
    %2645 = vmatpush2.bf16.msra.mxu0 %v2315
    %2646 = vmatprep.subr.bf16.mxu0 %v2312
    %2647 = vmatpush2.bf16.msra.mxu0 %v2311
    %2648 = vmatprep.subr.bf16.mxu0 %v2308
    %2649 = vmatpush2.bf16.msra.mxu0 %v2307
    %2650 = vmatprep.subr.bf16.mxu0 %v2304
    %2651 = vmatpush2.bf16.msra.mxu0 %v2303
    %2652 = vmatprep.mubr.bf16.mxu0 %v1795
    %2653 = vmatmul.mubr.bf16.gmra.mxu0 %v1794
    %v2654 = vpop.f32.mrf.mxu0
    %v2655 = vadd.f32 %v2602, %v2654
    %v2656 = vpop.f32.mrf.mxu0
    %v2657 = vadd.f32 %v2604, %v2656
    %v2658 = vpop.f32.mrf.mxu0
    %v2659 = vadd.f32 %v2606, %v2658
    %v2660 = vpop.f32.mrf.mxu0
    %v2661 = vadd.f32 %v2608, %v2660
    %2662 = vmatprep.mubr.bf16.mxu0 %v1799
    %2663 = vmatmul.mubr.bf16.gmra.mxu0 %v1798
    %v2664 = vpop.f32.mrf.mxu0
    %v2665 = vadd.f32 %v2612, %v2664
    %v2666 = vpop.f32.mrf.mxu0
    %v2667 = vadd.f32 %v2614, %v2666
    %v2668 = vpop.f32.mrf.mxu0
    %v2669 = vadd.f32 %v2616, %v2668
    %v2670 = vpop.f32.mrf.mxu0
    %v2671 = vadd.f32 %v2618, %v2670
    %2672 = vdwg.mxu0
    %v2673 = vpack.c.bf16 %v1788, %v1784
    %v2674 = vpack.c.bf16 %v1789, %v1785
    %v2675 = vpack.c.bf16 %v1790, %v1786
    %v2676 = vpack.c.bf16 %v1791, %v1787
    %v2678 = vlaneseq
    %v2679 = vshrl.u32 %v2678, 7
    %v2680 = vsub.s32 0, %v2679
    %v2681 = vrot.slane %v908, %v2680
    %v2682 = vlaneseq
    %v2683 = vshrl.u32 %v2682, 7
    %v2684 = vsub.s32 1, %v2683
    %v2685 = vrot.slane %v908, %v2684
    %v2686 = vlaneseq
    %v2687 = vshrl.u32 %v2686, 7
    %v2688 = vsub.s32 2, %v2687
    %v2689 = vrot.slane %v908, %v2688
    %v2690 = vlaneseq
    %v2691 = vshrl.u32 %v2690, 7
    %v2692 = vsub.s32 3, %v2691
    %v2693 = vrot.slane %v908, %v2692
    %v2694 = vlaneseq
    %v2695 = vshrl.u32 %v2694, 7
    %v2696 = vsub.s32 4, %v2695
    %v2697 = vrot.slane %v908, %v2696
    %v2698 = vlaneseq
    %v2699 = vshrl.u32 %v2698, 7
    %v2700 = vsub.s32 5, %v2699
    %v2701 = vrot.slane %v908, %v2700
    %v2702 = vlaneseq
    %v2703 = vshrl.u32 %v2702, 7
    %v2704 = vsub.s32 6, %v2703
    %v2705 = vrot.slane %v908, %v2704
    %v2706 = vlaneseq
    %v2707 = vshrl.u32 %v2706, 7
    %v2708 = vsub.s32 7, %v2707
    %v2709 = vrot.slane %v908, %v2708
    %v2974 = vunpack.c.l.b16 %v329
    %v2975 = vunpack.c.h.b16 %v329
    %v2976 = vunpack.c.l.b16 %v330
    %v2977 = vunpack.c.h.b16 %v330
    %v2978 = vunpack.c.l.b16 %v331
    %v2979 = vunpack.c.h.b16 %v331
    %v2980 = vunpack.c.l.b16 %v332
    %v2981 = vunpack.c.h.b16 %v332
    %v2982 = vunpack.c.l.b16 %v333
    %v2983 = vunpack.c.h.b16 %v333
    %v2984 = vunpack.c.l.b16 %v334
    %v2985 = vunpack.c.h.b16 %v334
    %v2986 = vunpack.c.l.b16 %v335
    %v2987 = vunpack.c.h.b16 %v335
    %v2988 = vunpack.c.l.b16 %v336
    %v2989 = vunpack.c.h.b16 %v336
    %v2990 = vunpack.c.l.b16 %v337
    %v2991 = vunpack.c.h.b16 %v337
    %v2992 = vunpack.c.l.b16 %v338
    %v2993 = vunpack.c.h.b16 %v338
    %v2994 = vunpack.c.l.b16 %v339
    %v2995 = vunpack.c.h.b16 %v339
    %v2996 = vunpack.c.l.b16 %v340
    %v2997 = vunpack.c.h.b16 %v340
    %v2998 = vunpack.c.l.b16 %v341
    %v2999 = vunpack.c.h.b16 %v341
    %v3000 = vunpack.c.l.b16 %v342
    %v3001 = vunpack.c.h.b16 %v342
    %v3002 = vunpack.c.l.b16 %v343
    %v3003 = vunpack.c.h.b16 %v343
    %v3004 = vunpack.c.l.b16 %v344
    %v3005 = vunpack.c.h.b16 %v344
    %v3006 = vunpack.c.l.b16 %v345
    %v3007 = vunpack.c.h.b16 %v345
    %v3008 = vunpack.c.l.b16 %v346
    %v3009 = vunpack.c.h.b16 %v346
    %v3010 = vunpack.c.l.b16 %v347
    %v3011 = vunpack.c.h.b16 %v347
    %v3012 = vunpack.c.l.b16 %v348
    %v3013 = vunpack.c.h.b16 %v348
    %v3014 = vunpack.c.l.b16 %v349
    %v3015 = vunpack.c.h.b16 %v349
    %v3016 = vunpack.c.l.b16 %v350
    %v3017 = vunpack.c.h.b16 %v350
    %v3018 = vunpack.c.l.b16 %v351
    %v3019 = vunpack.c.h.b16 %v351
    %v3020 = vunpack.c.l.b16 %v352
    %v3021 = vunpack.c.h.b16 %v352
    %v3022 = vunpack.c.l.b16 %v353
    %v3023 = vunpack.c.h.b16 %v353
    %v3024 = vunpack.c.l.b16 %v354
    %v3025 = vunpack.c.h.b16 %v354
    %v3026 = vunpack.c.l.b16 %v355
    %v3027 = vunpack.c.h.b16 %v355
    %v3028 = vunpack.c.l.b16 %v356
    %v3029 = vunpack.c.h.b16 %v356
    %v3030 = vunpack.c.l.b16 %v357
    %v3031 = vunpack.c.h.b16 %v357
    %v3032 = vunpack.c.l.b16 %v358
    %v3033 = vunpack.c.h.b16 %v358
    %v3034 = vunpack.c.l.b16 %v359
    %v3035 = vunpack.c.h.b16 %v359
    %v3036 = vunpack.c.l.b16 %v360
    %v3037 = vunpack.c.h.b16 %v360
    %v3038 = vunpack.c.l.b16 %v361
    %v3039 = vunpack.c.h.b16 %v361
    %v3040 = vunpack.c.l.b16 %v362
    %v3041 = vunpack.c.h.b16 %v362
    %v3042 = vunpack.c.l.b16 %v363
    %v3043 = vunpack.c.h.b16 %v363
    %v3044 = vunpack.c.l.b16 %v364
    %v3045 = vunpack.c.h.b16 %v364
    %v3046 = vunpack.c.l.b16 %v365
    %v3047 = vunpack.c.h.b16 %v365
    %v3048 = vunpack.c.l.b16 %v366
    %v3049 = vunpack.c.h.b16 %v366
    %v3050 = vunpack.c.l.b16 %v367
    %v3051 = vunpack.c.h.b16 %v367
    %v3052 = vunpack.c.l.b16 %v368
    %v3053 = vunpack.c.h.b16 %v368
    %v3054 = vunpack.c.l.b16 %v369
    %v3055 = vunpack.c.h.b16 %v369
    %v3056 = vunpack.c.l.b16 %v370
    %v3057 = vunpack.c.h.b16 %v370
    %v3058 = vunpack.c.l.b16 %v371
    %v3059 = vunpack.c.h.b16 %v371
    %v3060 = vunpack.c.l.b16 %v372
    %v3061 = vunpack.c.h.b16 %v372
    %v3062 = vunpack.c.l.b16 %v373
    %v3063 = vunpack.c.h.b16 %v373
    %v3064 = vunpack.c.l.b16 %v374
    %v3065 = vunpack.c.h.b16 %v374
    %v3066 = vunpack.c.l.b16 %v375
    %v3067 = vunpack.c.h.b16 %v375
    %v3068 = vunpack.c.l.b16 %v376
    %v3069 = vunpack.c.h.b16 %v376
    %v3070 = vunpack.c.l.b16 %v377
    %v3071 = vunpack.c.h.b16 %v377
    %v3072 = vunpack.c.l.b16 %v378
    %v3073 = vunpack.c.h.b16 %v378
    %v3074 = vunpack.c.l.b16 %v379
    %v3075 = vunpack.c.h.b16 %v379
    %v3076 = vunpack.c.l.b16 %v380
    %v3077 = vunpack.c.h.b16 %v380
    %v3078 = vunpack.c.l.b16 %v381
    %v3079 = vunpack.c.h.b16 %v381
    %v3080 = vunpack.c.l.b16 %v382
    %v3081 = vunpack.c.h.b16 %v382
    %v3082 = vunpack.c.l.b16 %v383
    %v3083 = vunpack.c.h.b16 %v383
    %v3084 = vunpack.c.l.b16 %v384
    %v3085 = vunpack.c.h.b16 %v384
    %v3086 = vunpack.c.l.b16 %v385
    %v3087 = vunpack.c.h.b16 %v385
    %v3088 = vunpack.c.l.b16 %v386
    %v3089 = vunpack.c.h.b16 %v386
    %v3090 = vunpack.c.l.b16 %v387
    %v3091 = vunpack.c.h.b16 %v387
    %v3092 = vunpack.c.l.b16 %v388
    %v3093 = vunpack.c.h.b16 %v388
    %v3094 = vunpack.c.l.b16 %v389
    %v3095 = vunpack.c.h.b16 %v389
    %v3096 = vunpack.c.l.b16 %v390
    %v3097 = vunpack.c.h.b16 %v390
    %v3098 = vunpack.c.l.b16 %v391
    %v3099 = vunpack.c.h.b16 %v391
    %v3100 = vunpack.c.l.b16 %v392
    %v3101 = vunpack.c.h.b16 %v392
    %v3102 = vunpack.c.l.b16 %v393
    %v3103 = vunpack.c.h.b16 %v393
    %v3104 = vunpack.c.l.b16 %v394
    %v3105 = vunpack.c.h.b16 %v394
    %v3106 = vunpack.c.l.b16 %v395
    %v3107 = vunpack.c.h.b16 %v395
    %v3108 = vunpack.c.l.b16 %v396
    %v3109 = vunpack.c.h.b16 %v396
    %v3110 = vunpack.c.l.b16 %v397
    %v3111 = vunpack.c.h.b16 %v397
    %v3112 = vunpack.c.l.b16 %v398
    %v3113 = vunpack.c.h.b16 %v398
    %v3114 = vunpack.c.l.b16 %v399
    %v3115 = vunpack.c.h.b16 %v399
    %v3116 = vunpack.c.l.b16 %v400
    %v3117 = vunpack.c.h.b16 %v400
    %v3118 = vunpack.c.l.b16 %v401
    %v3119 = vunpack.c.h.b16 %v401
    %v3120 = vunpack.c.l.b16 %v402
    %v3121 = vunpack.c.h.b16 %v402
    %v3122 = vunpack.c.l.b16 %v403
    %v3123 = vunpack.c.h.b16 %v403
    %v3124 = vunpack.c.l.b16 %v404
    %v3125 = vunpack.c.h.b16 %v404
    %v3126 = vunpack.c.l.b16 %v405
    %v3127 = vunpack.c.h.b16 %v405
    %v3128 = vunpack.c.l.b16 %v406
    %v3129 = vunpack.c.h.b16 %v406
    %v3130 = vunpack.c.l.b16 %v407
    %v3131 = vunpack.c.h.b16 %v407
    %v3132 = vunpack.c.l.b16 %v408
    %v3133 = vunpack.c.h.b16 %v408
    %v3134 = vunpack.c.l.b16 %v409
    %v3135 = vunpack.c.h.b16 %v409
    %v3136 = vunpack.c.l.b16 %v410
    %v3137 = vunpack.c.h.b16 %v410
    %v3138 = vunpack.c.l.b16 %v411
    %v3139 = vunpack.c.h.b16 %v411
    %v3140 = vunpack.c.l.b16 %v412
    %v3141 = vunpack.c.h.b16 %v412
    %v3142 = vunpack.c.l.b16 %v413
    %v3143 = vunpack.c.h.b16 %v413
    %v3144 = vunpack.c.l.b16 %v414
    %v3145 = vunpack.c.h.b16 %v414
    %v3146 = vunpack.c.l.b16 %v415
    %v3147 = vunpack.c.h.b16 %v415
    %v3148 = vunpack.c.l.b16 %v416
    %v3149 = vunpack.c.h.b16 %v416
    %v3150 = vunpack.c.l.b16 %v417
    %v3151 = vunpack.c.h.b16 %v417
    %v3152 = vunpack.c.l.b16 %v418
    %v3153 = vunpack.c.h.b16 %v418
    %v3154 = vunpack.c.l.b16 %v419
    %v3155 = vunpack.c.h.b16 %v419
    %v3156 = vunpack.c.l.b16 %v420
    %v3157 = vunpack.c.h.b16 %v420
    %v3158 = vunpack.c.l.b16 %v421
    %v3159 = vunpack.c.h.b16 %v421
    %v3160 = vunpack.c.l.b16 %v422
    %v3161 = vunpack.c.h.b16 %v422
    %v3162 = vunpack.c.l.b16 %v423
    %v3163 = vunpack.c.h.b16 %v423
    %v3164 = vunpack.c.l.b16 %v424
    %v3165 = vunpack.c.h.b16 %v424
    %v3166 = vunpack.c.l.b16 %v425
    %v3167 = vunpack.c.h.b16 %v425
    %v3168 = vunpack.c.l.b16 %v426
    %v3169 = vunpack.c.h.b16 %v426
    %v3170 = vunpack.c.l.b16 %v427
    %v3171 = vunpack.c.h.b16 %v427
    %v3172 = vunpack.c.l.b16 %v428
    %v3173 = vunpack.c.h.b16 %v428
    %v3174 = vunpack.c.l.b16 %v429
    %v3175 = vunpack.c.h.b16 %v429
    %v3176 = vunpack.c.l.b16 %v430
    %v3177 = vunpack.c.h.b16 %v430
    %v3178 = vunpack.c.l.b16 %v431
    %v3179 = vunpack.c.h.b16 %v431
    %v3180 = vunpack.c.l.b16 %v432
    %v3181 = vunpack.c.h.b16 %v432
    %v3182 = vunpack.c.l.b16 %v433
    %v3183 = vunpack.c.h.b16 %v433
    %v3184 = vunpack.c.l.b16 %v434
    %v3185 = vunpack.c.h.b16 %v434
    %v3186 = vunpack.c.l.b16 %v435
    %v3187 = vunpack.c.h.b16 %v435
    %v3188 = vunpack.c.l.b16 %v436
    %v3189 = vunpack.c.h.b16 %v436
    %v3190 = vunpack.c.l.b16 %v437
    %v3191 = vunpack.c.h.b16 %v437
    %v3192 = vunpack.c.l.b16 %v438
    %v3193 = vunpack.c.h.b16 %v438
    %v3194 = vunpack.c.l.b16 %v439
    %v3195 = vunpack.c.h.b16 %v439
    %v3196 = vunpack.c.l.b16 %v440
    %v3197 = vunpack.c.h.b16 %v440
    %v3198 = vunpack.c.l.b16 %v441
    %v3199 = vunpack.c.h.b16 %v441
    %v3200 = vunpack.c.l.b16 %v442
    %v3201 = vunpack.c.h.b16 %v442
    %v3202 = vunpack.c.l.b16 %v443
    %v3203 = vunpack.c.h.b16 %v443
    %v3204 = vunpack.c.l.b16 %v444
    %v3205 = vunpack.c.h.b16 %v444
    %v3206 = vunpack.c.l.b16 %v445
    %v3207 = vunpack.c.h.b16 %v445
    %v3208 = vunpack.c.l.b16 %v446
    %v3209 = vunpack.c.h.b16 %v446
    %v3210 = vunpack.c.l.b16 %v447
    %v3211 = vunpack.c.h.b16 %v447
    %v3212 = vunpack.c.l.b16 %v448
    %v3213 = vunpack.c.h.b16 %v448
    %v3214 = vunpack.c.l.b16 %v449
    %v3215 = vunpack.c.h.b16 %v449
    %v3216 = vunpack.c.l.b16 %v450
    %v3217 = vunpack.c.h.b16 %v450
    %v3218 = vunpack.c.l.b16 %v451
    %v3219 = vunpack.c.h.b16 %v451
    %v3220 = vunpack.c.l.b16 %v452
    %v3221 = vunpack.c.h.b16 %v452
    %v3222 = vunpack.c.l.b16 %v453
    %v3223 = vunpack.c.h.b16 %v453
    %v3224 = vunpack.c.l.b16 %v454
    %v3225 = vunpack.c.h.b16 %v454
    %v3226 = vunpack.c.l.b16 %v455
    %v3227 = vunpack.c.h.b16 %v455
    %v3228 = vunpack.c.l.b16 %v456
    %v3229 = vunpack.c.h.b16 %v456
    %v3230 = vunpack.c.l.b16 %v457
    %v3231 = vunpack.c.h.b16 %v457
    %v3232 = vunpack.c.l.b16 %v458
    %v3233 = vunpack.c.h.b16 %v458
    %v3234 = vunpack.c.l.b16 %v459
    %v3235 = vunpack.c.h.b16 %v459
    %v3236 = vunpack.c.l.b16 %v460
    %v3237 = vunpack.c.h.b16 %v460
    %v3238 = vunpack.c.l.b16 %v461
    %v3239 = vunpack.c.h.b16 %v461
    %v3240 = vunpack.c.l.b16 %v462
    %v3241 = vunpack.c.h.b16 %v462
    %v3242 = vunpack.c.l.b16 %v463
    %v3243 = vunpack.c.h.b16 %v463
    %v3244 = vunpack.c.l.b16 %v464
    %v3245 = vunpack.c.h.b16 %v464
    %v3246 = vunpack.c.l.b16 %v465
    %v3247 = vunpack.c.h.b16 %v465
    %v3248 = vunpack.c.l.b16 %v466
    %v3249 = vunpack.c.h.b16 %v466
    %v3250 = vunpack.c.l.b16 %v467
    %v3251 = vunpack.c.h.b16 %v467
    %v3252 = vunpack.c.l.b16 %v468
    %v3253 = vunpack.c.h.b16 %v468
    %v3254 = vunpack.c.l.b16 %v469
    %v3255 = vunpack.c.h.b16 %v469
    %v3256 = vunpack.c.l.b16 %v470
    %v3257 = vunpack.c.h.b16 %v470
    %v3258 = vunpack.c.l.b16 %v471
    %v3259 = vunpack.c.h.b16 %v471
    %v3260 = vunpack.c.l.b16 %v472
    %v3261 = vunpack.c.h.b16 %v472
    %v3262 = vunpack.c.l.b16 %v473
    %v3263 = vunpack.c.h.b16 %v473
    %v3264 = vunpack.c.l.b16 %v474
    %v3265 = vunpack.c.h.b16 %v474
    %v3266 = vunpack.c.l.b16 %v475
    %v3267 = vunpack.c.h.b16 %v475
    %v3268 = vunpack.c.l.b16 %v476
    %v3269 = vunpack.c.h.b16 %v476
    %v3270 = vunpack.c.l.b16 %v477
    %v3271 = vunpack.c.h.b16 %v477
    %v3272 = vunpack.c.l.b16 %v478
    %v3273 = vunpack.c.h.b16 %v478
    %v3274 = vunpack.c.l.b16 %v479
    %v3275 = vunpack.c.h.b16 %v479
    %v3276 = vunpack.c.l.b16 %v480
    %v3277 = vunpack.c.h.b16 %v480
    %v3278 = vunpack.c.l.b16 %v481
    %v3279 = vunpack.c.h.b16 %v481
    %v3280 = vunpack.c.l.b16 %v482
    %v3281 = vunpack.c.h.b16 %v482
    %v3282 = vunpack.c.l.b16 %v483
    %v3283 = vunpack.c.h.b16 %v483
    %v3284 = vunpack.c.l.b16 %v484
    %v3285 = vunpack.c.h.b16 %v484
    %v3286 = vunpack.c.l.b16 %v485
    %v3287 = vunpack.c.h.b16 %v485
    %v3288 = vunpack.c.l.b16 %v486
    %v3289 = vunpack.c.h.b16 %v486
    %v3290 = vunpack.c.l.b16 %v487
    %v3291 = vunpack.c.h.b16 %v487
    %v3292 = vunpack.c.l.b16 %v488
    %v3293 = vunpack.c.h.b16 %v488
    %v3294 = vunpack.c.l.b16 %v489
    %v3295 = vunpack.c.h.b16 %v489
    %v3296 = vunpack.c.l.b16 %v490
    %v3297 = vunpack.c.h.b16 %v490
    %v3298 = vunpack.c.l.b16 %v491
    %v3299 = vunpack.c.h.b16 %v491
    %v3300 = vunpack.c.l.b16 %v492
    %v3301 = vunpack.c.h.b16 %v492
    %v3302 = vunpack.c.l.b16 %v493
    %v3303 = vunpack.c.h.b16 %v493
    %v3304 = vunpack.c.l.b16 %v494
    %v3305 = vunpack.c.h.b16 %v494
    %v3306 = vunpack.c.l.b16 %v495
    %v3307 = vunpack.c.h.b16 %v495
    %v3308 = vunpack.c.l.b16 %v496
    %v3309 = vunpack.c.h.b16 %v496
    %v3310 = vunpack.c.l.b16 %v497
    %v3311 = vunpack.c.h.b16 %v497
    %v3312 = vunpack.c.l.b16 %v498
    %v3313 = vunpack.c.h.b16 %v498
    %v3314 = vunpack.c.l.b16 %v499
    %v3315 = vunpack.c.h.b16 %v499
    %v3316 = vunpack.c.l.b16 %v500
    %v3317 = vunpack.c.h.b16 %v500
    %v3318 = vunpack.c.l.b16 %v501
    %v3319 = vunpack.c.h.b16 %v501
    %v3320 = vunpack.c.l.b16 %v502
    %v3321 = vunpack.c.h.b16 %v502
    %v3322 = vunpack.c.l.b16 %v503
    %v3323 = vunpack.c.h.b16 %v503
    %v3324 = vunpack.c.l.b16 %v504
    %v3325 = vunpack.c.h.b16 %v504
    %v3326 = vunpack.c.l.b16 %v505
    %v3327 = vunpack.c.h.b16 %v505
    %v3328 = vunpack.c.l.b16 %v506
    %v3329 = vunpack.c.h.b16 %v506
    %v3330 = vunpack.c.l.b16 %v507
    %v3331 = vunpack.c.h.b16 %v507
    %v3332 = vunpack.c.l.b16 %v508
    %v3333 = vunpack.c.h.b16 %v508
    %v3334 = vunpack.c.l.b16 %v509
    %v3335 = vunpack.c.h.b16 %v509
    %v3336 = vunpack.c.l.b16 %v510
    %v3337 = vunpack.c.h.b16 %v510
    %v3338 = vunpack.c.l.b16 %v511
    %v3339 = vunpack.c.h.b16 %v511
    %v3340 = vunpack.c.l.b16 %v512
    %v3341 = vunpack.c.h.b16 %v512
    %v3342 = vunpack.c.l.b16 %v513
    %v3343 = vunpack.c.h.b16 %v513
    %v3344 = vunpack.c.l.b16 %v514
    %v3345 = vunpack.c.h.b16 %v514
    %v3346 = vunpack.c.l.b16 %v515
    %v3347 = vunpack.c.h.b16 %v515
    %v3348 = vunpack.c.l.b16 %v516
    %v3349 = vunpack.c.h.b16 %v516
    %v3350 = vunpack.c.l.b16 %v517
    %v3351 = vunpack.c.h.b16 %v517
    %v3352 = vunpack.c.l.b16 %v518
    %v3353 = vunpack.c.h.b16 %v518
    %v3354 = vunpack.c.l.b16 %v519
    %v3355 = vunpack.c.h.b16 %v519
    %v3356 = vunpack.c.l.b16 %v520
    %v3357 = vunpack.c.h.b16 %v520
    %v3358 = vunpack.c.l.b16 %v521
    %v3359 = vunpack.c.h.b16 %v521
    %v3360 = vunpack.c.l.b16 %v522
    %v3361 = vunpack.c.h.b16 %v522
    %v3362 = vunpack.c.l.b16 %v523
    %v3363 = vunpack.c.h.b16 %v523
    %v3364 = vunpack.c.l.b16 %v524
    %v3365 = vunpack.c.h.b16 %v524
    %v3366 = vunpack.c.l.b16 %v525
    %v3367 = vunpack.c.h.b16 %v525
    %v3368 = vunpack.c.l.b16 %v526
    %v3369 = vunpack.c.h.b16 %v526
    %v3370 = vunpack.c.l.b16 %v527
    %v3371 = vunpack.c.h.b16 %v527
    %v3372 = vunpack.c.l.b16 %v528
    %v3373 = vunpack.c.h.b16 %v528
    %v3374 = vunpack.c.l.b16 %v529
    %v3375 = vunpack.c.h.b16 %v529
    %v3376 = vunpack.c.l.b16 %v530
    %v3377 = vunpack.c.h.b16 %v530
    %v3378 = vunpack.c.l.b16 %v531
    %v3379 = vunpack.c.h.b16 %v531
    %v3380 = vunpack.c.l.b16 %v532
    %v3381 = vunpack.c.h.b16 %v532
    %v3382 = vunpack.c.l.b16 %v533
    %v3383 = vunpack.c.h.b16 %v533
    %v3384 = vunpack.c.l.b16 %v534
    %v3385 = vunpack.c.h.b16 %v534
    %v3386 = vunpack.c.l.b16 %v535
    %v3387 = vunpack.c.h.b16 %v535
    %v3388 = vunpack.c.l.b16 %v536
    %v3389 = vunpack.c.h.b16 %v536
    %v3390 = vunpack.c.l.b16 %v537
    %v3391 = vunpack.c.h.b16 %v537
    %v3392 = vunpack.c.l.b16 %v538
    %v3393 = vunpack.c.h.b16 %v538
    %v3394 = vunpack.c.l.b16 %v539
    %v3395 = vunpack.c.h.b16 %v539
    %v3396 = vunpack.c.l.b16 %v540
    %v3397 = vunpack.c.h.b16 %v540
    %v3398 = vunpack.c.l.b16 %v541
    %v3399 = vunpack.c.h.b16 %v541
    %v3400 = vunpack.c.l.b16 %v542
    %v3401 = vunpack.c.h.b16 %v542
    %v3402 = vunpack.c.l.b16 %v543
    %v3403 = vunpack.c.h.b16 %v543
    %v3404 = vunpack.c.l.b16 %v544
    %v3405 = vunpack.c.h.b16 %v544
    %v3406 = vunpack.c.l.b16 %v545
    %v3407 = vunpack.c.h.b16 %v545
    %v3408 = vunpack.c.l.b16 %v546
    %v3409 = vunpack.c.h.b16 %v546
    %v3410 = vunpack.c.l.b16 %v547
    %v3411 = vunpack.c.h.b16 %v547
    %v3412 = vunpack.c.l.b16 %v548
    %v3413 = vunpack.c.h.b16 %v548
    %v3414 = vunpack.c.l.b16 %v549
    %v3415 = vunpack.c.h.b16 %v549
    %v3416 = vunpack.c.l.b16 %v550
    %v3417 = vunpack.c.h.b16 %v550
    %v3418 = vunpack.c.l.b16 %v551
    %v3419 = vunpack.c.h.b16 %v551
    %v3420 = vunpack.c.l.b16 %v552
    %v3421 = vunpack.c.h.b16 %v552
    %v3422 = vunpack.c.l.b16 %v553
    %v3423 = vunpack.c.h.b16 %v553
    %v3424 = vunpack.c.l.b16 %v554
    %v3425 = vunpack.c.h.b16 %v554
    %v3426 = vunpack.c.l.b16 %v555
    %v3427 = vunpack.c.h.b16 %v555
    %v3428 = vunpack.c.l.b16 %v556
    %v3429 = vunpack.c.h.b16 %v556
    %v3430 = vunpack.c.l.b16 %v557
    %v3431 = vunpack.c.h.b16 %v557
    %v3432 = vunpack.c.l.b16 %v558
    %v3433 = vunpack.c.h.b16 %v558
    %v3434 = vunpack.c.l.b16 %v559
    %v3435 = vunpack.c.h.b16 %v559
    %v3436 = vunpack.c.l.b16 %v560
    %v3437 = vunpack.c.h.b16 %v560
    %v3438 = vunpack.c.l.b16 %v561
    %v3439 = vunpack.c.h.b16 %v561
    %v3440 = vunpack.c.l.b16 %v562
    %v3441 = vunpack.c.h.b16 %v562
    %v3442 = vunpack.c.l.b16 %v563
    %v3443 = vunpack.c.h.b16 %v563
    %v3444 = vunpack.c.l.b16 %v564
    %v3445 = vunpack.c.h.b16 %v564
    %v3446 = vunpack.c.l.b16 %v565
    %v3447 = vunpack.c.h.b16 %v565
    %v3448 = vunpack.c.l.b16 %v566
    %v3449 = vunpack.c.h.b16 %v566
    %v3450 = vunpack.c.l.b16 %v567
    %v3451 = vunpack.c.h.b16 %v567
    %v3452 = vunpack.c.l.b16 %v568
    %v3453 = vunpack.c.h.b16 %v568
    %v3454 = vunpack.c.l.b16 %v569
    %v3455 = vunpack.c.h.b16 %v569
    %v3456 = vunpack.c.l.b16 %v570
    %v3457 = vunpack.c.h.b16 %v570
    %v3458 = vunpack.c.l.b16 %v571
    %v3459 = vunpack.c.h.b16 %v571
    %v3460 = vunpack.c.l.b16 %v572
    %v3461 = vunpack.c.h.b16 %v572
    %v3462 = vunpack.c.l.b16 %v573
    %v3463 = vunpack.c.h.b16 %v573
    %v3464 = vunpack.c.l.b16 %v574
    %v3465 = vunpack.c.h.b16 %v574
    %v3466 = vunpack.c.l.b16 %v575
    %v3467 = vunpack.c.h.b16 %v575
    %v3468 = vunpack.c.l.b16 %v576
    %v3469 = vunpack.c.h.b16 %v576
    %v3470 = vunpack.c.l.b16 %v577
    %v3471 = vunpack.c.h.b16 %v577
    %v3472 = vunpack.c.l.b16 %v578
    %v3473 = vunpack.c.h.b16 %v578
    %v3474 = vunpack.c.l.b16 %v579
    %v3475 = vunpack.c.h.b16 %v579
    %v3476 = vunpack.c.l.b16 %v580
    %v3477 = vunpack.c.h.b16 %v580
    %v3478 = vunpack.c.l.b16 %v581
    %v3479 = vunpack.c.h.b16 %v581
    %v3480 = vunpack.c.l.b16 %v582
    %v3481 = vunpack.c.h.b16 %v582
    %v3482 = vunpack.c.l.b16 %v583
    %v3483 = vunpack.c.h.b16 %v583
    %v3484 = vunpack.c.l.b16 %v584
    %v3485 = vunpack.c.h.b16 %v584
    %v3486 = vpack.c.b16 %v2982, %v2974
    %v3487 = vpack.c.b16 %v2983, %v2975
    %v3488 = vpack.c.b16 %v2984, %v2976
    %v3489 = vpack.c.b16 %v2985, %v2977
    %v3490 = vpack.c.b16 %v2986, %v2978
    %v3491 = vpack.c.b16 %v2987, %v2979
    %v3492 = vpack.c.b16 %v2988, %v2980
    %v3493 = vpack.c.b16 %v2989, %v2981
    %v3494 = vpack.c.b16 %v2998, %v2990
    %v3495 = vpack.c.b16 %v2999, %v2991
    %v3496 = vpack.c.b16 %v3000, %v2992
    %v3497 = vpack.c.b16 %v3001, %v2993
    %v3498 = vpack.c.b16 %v3002, %v2994
    %v3499 = vpack.c.b16 %v3003, %v2995
    %v3500 = vpack.c.b16 %v3004, %v2996
    %v3501 = vpack.c.b16 %v3005, %v2997
    %v3502 = vpack.c.b16 %v3014, %v3006
    %v3503 = vpack.c.b16 %v3015, %v3007
    %v3504 = vpack.c.b16 %v3016, %v3008
    %v3505 = vpack.c.b16 %v3017, %v3009
    %v3506 = vpack.c.b16 %v3018, %v3010
    %v3507 = vpack.c.b16 %v3019, %v3011
    %v3508 = vpack.c.b16 %v3020, %v3012
    %v3509 = vpack.c.b16 %v3021, %v3013
    %v3510 = vpack.c.b16 %v3030, %v3022
    %v3511 = vpack.c.b16 %v3031, %v3023
    %v3512 = vpack.c.b16 %v3032, %v3024
    %v3513 = vpack.c.b16 %v3033, %v3025
    %v3514 = vpack.c.b16 %v3034, %v3026
    %v3515 = vpack.c.b16 %v3035, %v3027
    %v3516 = vpack.c.b16 %v3036, %v3028
    %v3517 = vpack.c.b16 %v3037, %v3029
    %v3518 = vpack.c.b16 %v3046, %v3038
    %v3519 = vpack.c.b16 %v3047, %v3039
    %v3520 = vpack.c.b16 %v3048, %v3040
    %v3521 = vpack.c.b16 %v3049, %v3041
    %v3522 = vpack.c.b16 %v3050, %v3042
    %v3523 = vpack.c.b16 %v3051, %v3043
    %v3524 = vpack.c.b16 %v3052, %v3044
    %v3525 = vpack.c.b16 %v3053, %v3045
    %v3526 = vpack.c.b16 %v3062, %v3054
    %v3527 = vpack.c.b16 %v3063, %v3055
    %v3528 = vpack.c.b16 %v3064, %v3056
    %v3529 = vpack.c.b16 %v3065, %v3057
    %v3530 = vpack.c.b16 %v3066, %v3058
    %v3531 = vpack.c.b16 %v3067, %v3059
    %v3532 = vpack.c.b16 %v3068, %v3060
    %v3533 = vpack.c.b16 %v3069, %v3061
    %v3534 = vpack.c.b16 %v3078, %v3070
    %v3535 = vpack.c.b16 %v3079, %v3071
    %v3536 = vpack.c.b16 %v3080, %v3072
    %v3537 = vpack.c.b16 %v3081, %v3073
    %v3538 = vpack.c.b16 %v3082, %v3074
    %v3539 = vpack.c.b16 %v3083, %v3075
    %v3540 = vpack.c.b16 %v3084, %v3076
    %v3541 = vpack.c.b16 %v3085, %v3077
    %v3542 = vpack.c.b16 %v3094, %v3086
    %v3543 = vpack.c.b16 %v3095, %v3087
    %v3544 = vpack.c.b16 %v3096, %v3088
    %v3545 = vpack.c.b16 %v3097, %v3089
    %v3546 = vpack.c.b16 %v3098, %v3090
    %v3547 = vpack.c.b16 %v3099, %v3091
    %v3548 = vpack.c.b16 %v3100, %v3092
    %v3549 = vpack.c.b16 %v3101, %v3093
    %v3550 = vpack.c.b16 %v3110, %v3102
    %v3551 = vpack.c.b16 %v3111, %v3103
    %v3552 = vpack.c.b16 %v3112, %v3104
    %v3553 = vpack.c.b16 %v3113, %v3105
    %v3554 = vpack.c.b16 %v3114, %v3106
    %v3555 = vpack.c.b16 %v3115, %v3107
    %v3556 = vpack.c.b16 %v3116, %v3108
    %v3557 = vpack.c.b16 %v3117, %v3109
    %v3558 = vpack.c.b16 %v3126, %v3118
    %v3559 = vpack.c.b16 %v3127, %v3119
    %v3560 = vpack.c.b16 %v3128, %v3120
    %v3561 = vpack.c.b16 %v3129, %v3121
    %v3562 = vpack.c.b16 %v3130, %v3122
    %v3563 = vpack.c.b16 %v3131, %v3123
    %v3564 = vpack.c.b16 %v3132, %v3124
    %v3565 = vpack.c.b16 %v3133, %v3125
    %v3566 = vpack.c.b16 %v3142, %v3134
    %v3567 = vpack.c.b16 %v3143, %v3135
    %v3568 = vpack.c.b16 %v3144, %v3136
    %v3569 = vpack.c.b16 %v3145, %v3137
    %v3570 = vpack.c.b16 %v3146, %v3138
    %v3571 = vpack.c.b16 %v3147, %v3139
    %v3572 = vpack.c.b16 %v3148, %v3140
    %v3573 = vpack.c.b16 %v3149, %v3141
    %v3574 = vpack.c.b16 %v3158, %v3150
    %v3575 = vpack.c.b16 %v3159, %v3151
    %v3576 = vpack.c.b16 %v3160, %v3152
    %v3577 = vpack.c.b16 %v3161, %v3153
    %v3578 = vpack.c.b16 %v3162, %v3154
    %v3579 = vpack.c.b16 %v3163, %v3155
    %v3580 = vpack.c.b16 %v3164, %v3156
    %v3581 = vpack.c.b16 %v3165, %v3157
    %v3582 = vpack.c.b16 %v3174, %v3166
    %v3583 = vpack.c.b16 %v3175, %v3167
    %v3584 = vpack.c.b16 %v3176, %v3168
    %v3585 = vpack.c.b16 %v3177, %v3169
    %v3586 = vpack.c.b16 %v3178, %v3170
    %v3587 = vpack.c.b16 %v3179, %v3171
    %v3588 = vpack.c.b16 %v3180, %v3172
    %v3589 = vpack.c.b16 %v3181, %v3173
    %v3590 = vpack.c.b16 %v3190, %v3182
    %v3591 = vpack.c.b16 %v3191, %v3183
    %v3592 = vpack.c.b16 %v3192, %v3184
    %v3593 = vpack.c.b16 %v3193, %v3185
    %v3594 = vpack.c.b16 %v3194, %v3186
    %v3595 = vpack.c.b16 %v3195, %v3187
    %v3596 = vpack.c.b16 %v3196, %v3188
    %v3597 = vpack.c.b16 %v3197, %v3189
    %v3598 = vpack.c.b16 %v3206, %v3198
    %v3599 = vpack.c.b16 %v3207, %v3199
    %v3600 = vpack.c.b16 %v3208, %v3200
    %v3601 = vpack.c.b16 %v3209, %v3201
    %v3602 = vpack.c.b16 %v3210, %v3202
    %v3603 = vpack.c.b16 %v3211, %v3203
    %v3604 = vpack.c.b16 %v3212, %v3204
    %v3605 = vpack.c.b16 %v3213, %v3205
    %v3606 = vpack.c.b16 %v3222, %v3214
    %v3607 = vpack.c.b16 %v3223, %v3215
    %v3608 = vpack.c.b16 %v3224, %v3216
    %v3609 = vpack.c.b16 %v3225, %v3217
    %v3610 = vpack.c.b16 %v3226, %v3218
    %v3611 = vpack.c.b16 %v3227, %v3219
    %v3612 = vpack.c.b16 %v3228, %v3220
    %v3613 = vpack.c.b16 %v3229, %v3221
    %v3614 = vpack.c.b16 %v3238, %v3230
    %v3615 = vpack.c.b16 %v3239, %v3231
    %v3616 = vpack.c.b16 %v3240, %v3232
    %v3617 = vpack.c.b16 %v3241, %v3233
    %v3618 = vpack.c.b16 %v3242, %v3234
    %v3619 = vpack.c.b16 %v3243, %v3235
    %v3620 = vpack.c.b16 %v3244, %v3236
    %v3621 = vpack.c.b16 %v3245, %v3237
    %v3622 = vpack.c.b16 %v3254, %v3246
    %v3623 = vpack.c.b16 %v3255, %v3247
    %v3624 = vpack.c.b16 %v3256, %v3248
    %v3625 = vpack.c.b16 %v3257, %v3249
    %v3626 = vpack.c.b16 %v3258, %v3250
    %v3627 = vpack.c.b16 %v3259, %v3251
    %v3628 = vpack.c.b16 %v3260, %v3252
    %v3629 = vpack.c.b16 %v3261, %v3253
    %v3630 = vpack.c.b16 %v3270, %v3262
    %v3631 = vpack.c.b16 %v3271, %v3263
    %v3632 = vpack.c.b16 %v3272, %v3264
    %v3633 = vpack.c.b16 %v3273, %v3265
    %v3634 = vpack.c.b16 %v3274, %v3266
    %v3635 = vpack.c.b16 %v3275, %v3267
    %v3636 = vpack.c.b16 %v3276, %v3268
    %v3637 = vpack.c.b16 %v3277, %v3269
    %v3638 = vpack.c.b16 %v3286, %v3278
    %v3639 = vpack.c.b16 %v3287, %v3279
    %v3640 = vpack.c.b16 %v3288, %v3280
    %v3641 = vpack.c.b16 %v3289, %v3281
    %v3642 = vpack.c.b16 %v3290, %v3282
    %v3643 = vpack.c.b16 %v3291, %v3283
    %v3644 = vpack.c.b16 %v3292, %v3284
    %v3645 = vpack.c.b16 %v3293, %v3285
    %v3646 = vpack.c.b16 %v3302, %v3294
    %v3647 = vpack.c.b16 %v3303, %v3295
    %v3648 = vpack.c.b16 %v3304, %v3296
    %v3649 = vpack.c.b16 %v3305, %v3297
    %v3650 = vpack.c.b16 %v3306, %v3298
    %v3651 = vpack.c.b16 %v3307, %v3299
    %v3652 = vpack.c.b16 %v3308, %v3300
    %v3653 = vpack.c.b16 %v3309, %v3301
    %v3654 = vpack.c.b16 %v3318, %v3310
    %v3655 = vpack.c.b16 %v3319, %v3311
    %v3656 = vpack.c.b16 %v3320, %v3312
    %v3657 = vpack.c.b16 %v3321, %v3313
    %v3658 = vpack.c.b16 %v3322, %v3314
    %v3659 = vpack.c.b16 %v3323, %v3315
    %v3660 = vpack.c.b16 %v3324, %v3316
    %v3661 = vpack.c.b16 %v3325, %v3317
    %v3662 = vpack.c.b16 %v3334, %v3326
    %v3663 = vpack.c.b16 %v3335, %v3327
    %v3664 = vpack.c.b16 %v3336, %v3328
    %v3665 = vpack.c.b16 %v3337, %v3329
    %v3666 = vpack.c.b16 %v3338, %v3330
    %v3667 = vpack.c.b16 %v3339, %v3331
    %v3668 = vpack.c.b16 %v3340, %v3332
    %v3669 = vpack.c.b16 %v3341, %v3333
    %v3670 = vpack.c.b16 %v3350, %v3342
    %v3671 = vpack.c.b16 %v3351, %v3343
    %v3672 = vpack.c.b16 %v3352, %v3344
    %v3673 = vpack.c.b16 %v3353, %v3345
    %v3674 = vpack.c.b16 %v3354, %v3346
    %v3675 = vpack.c.b16 %v3355, %v3347
    %v3676 = vpack.c.b16 %v3356, %v3348
    %v3677 = vpack.c.b16 %v3357, %v3349
    %v3678 = vpack.c.b16 %v3366, %v3358
    %v3679 = vpack.c.b16 %v3367, %v3359
    %v3680 = vpack.c.b16 %v3368, %v3360
    %v3681 = vpack.c.b16 %v3369, %v3361
    %v3682 = vpack.c.b16 %v3370, %v3362
    %v3683 = vpack.c.b16 %v3371, %v3363
    %v3684 = vpack.c.b16 %v3372, %v3364
    %v3685 = vpack.c.b16 %v3373, %v3365
    %v3686 = vpack.c.b16 %v3382, %v3374
    %v3687 = vpack.c.b16 %v3383, %v3375
    %v3688 = vpack.c.b16 %v3384, %v3376
    %v3689 = vpack.c.b16 %v3385, %v3377
    %v3690 = vpack.c.b16 %v3386, %v3378
    %v3691 = vpack.c.b16 %v3387, %v3379
    %v3692 = vpack.c.b16 %v3388, %v3380
    %v3693 = vpack.c.b16 %v3389, %v3381
    %v3694 = vpack.c.b16 %v3398, %v3390
    %v3695 = vpack.c.b16 %v3399, %v3391
    %v3696 = vpack.c.b16 %v3400, %v3392
    %v3697 = vpack.c.b16 %v3401, %v3393
    %v3698 = vpack.c.b16 %v3402, %v3394
    %v3699 = vpack.c.b16 %v3403, %v3395
    %v3700 = vpack.c.b16 %v3404, %v3396
    %v3701 = vpack.c.b16 %v3405, %v3397
    %v3702 = vpack.c.b16 %v3414, %v3406
    %v3703 = vpack.c.b16 %v3415, %v3407
    %v3704 = vpack.c.b16 %v3416, %v3408
    %v3705 = vpack.c.b16 %v3417, %v3409
    %v3706 = vpack.c.b16 %v3418, %v3410
    %v3707 = vpack.c.b16 %v3419, %v3411
    %v3708 = vpack.c.b16 %v3420, %v3412
    %v3709 = vpack.c.b16 %v3421, %v3413
    %v3710 = vpack.c.b16 %v3430, %v3422
    %v3711 = vpack.c.b16 %v3431, %v3423
    %v3712 = vpack.c.b16 %v3432, %v3424
    %v3713 = vpack.c.b16 %v3433, %v3425
    %v3714 = vpack.c.b16 %v3434, %v3426
    %v3715 = vpack.c.b16 %v3435, %v3427
    %v3716 = vpack.c.b16 %v3436, %v3428
    %v3717 = vpack.c.b16 %v3437, %v3429
    %v3718 = vpack.c.b16 %v3446, %v3438
    %v3719 = vpack.c.b16 %v3447, %v3439
    %v3720 = vpack.c.b16 %v3448, %v3440
    %v3721 = vpack.c.b16 %v3449, %v3441
    %v3722 = vpack.c.b16 %v3450, %v3442
    %v3723 = vpack.c.b16 %v3451, %v3443
    %v3724 = vpack.c.b16 %v3452, %v3444
    %v3725 = vpack.c.b16 %v3453, %v3445
    %v3726 = vpack.c.b16 %v3462, %v3454
    %v3727 = vpack.c.b16 %v3463, %v3455
    %v3728 = vpack.c.b16 %v3464, %v3456
    %v3729 = vpack.c.b16 %v3465, %v3457
    %v3730 = vpack.c.b16 %v3466, %v3458
    %v3731 = vpack.c.b16 %v3467, %v3459
    %v3732 = vpack.c.b16 %v3468, %v3460
    %v3733 = vpack.c.b16 %v3469, %v3461
    %v3734 = vpack.c.b16 %v3478, %v3470
    %v3735 = vpack.c.b16 %v3479, %v3471
    %v3736 = vpack.c.b16 %v3480, %v3472
    %v3737 = vpack.c.b16 %v3481, %v3473
    %v3738 = vpack.c.b16 %v3482, %v3474
    %v3739 = vpack.c.b16 %v3483, %v3475
    %v3740 = vpack.c.b16 %v3484, %v3476
    %v3741 = vpack.c.b16 %v3485, %v3477
    %3998 = vmatprep.subr.bf16.mxu0 %v3543
    %3999 = vmatpush1.bf16.msra.mxu0 %v3542
    %4000 = vmatprep.subr.bf16.mxu0 %v3535
    %4001 = vmatpush1.bf16.msra.mxu0 %v3534
    %4002 = vmatprep.subr.bf16.mxu0 %v3527
    %4003 = vmatpush1.bf16.msra.mxu0 %v3526
    %4004 = vmatprep.subr.bf16.mxu0 %v3519
    %4005 = vmatpush1.bf16.msra.mxu0 %v3518
    %4006 = vmatprep.subr.bf16.mxu0 %v3511
    %4007 = vmatpush1.bf16.msra.mxu0 %v3510
    %4008 = vmatprep.subr.bf16.mxu0 %v3503
    %4009 = vmatpush1.bf16.msra.mxu0 %v3502
    %4010 = vmatprep.subr.bf16.mxu0 %v3495
    %4011 = vmatpush1.bf16.msra.mxu0 %v3494
    %4012 = vmatprep.subr.bf16.mxu0 %v3487
    %4013 = vmatpush1.bf16.msra.mxu0 %v3486
    %4014 = vmatprep.subr.bf16.mxu0 %v3607
    %4015 = vmatpush2.bf16.msra.mxu0 %v3606
    %4016 = vmatprep.subr.bf16.mxu0 %v3599
    %4017 = vmatpush2.bf16.msra.mxu0 %v3598
    %4018 = vmatprep.subr.bf16.mxu0 %v3591
    %4019 = vmatpush2.bf16.msra.mxu0 %v3590
    %4020 = vmatprep.subr.bf16.mxu0 %v3583
    %4021 = vmatpush2.bf16.msra.mxu0 %v3582
    %4022 = vmatprep.subr.bf16.mxu0 %v3575
    %4023 = vmatpush2.bf16.msra.mxu0 %v3574
    %4024 = vmatprep.subr.bf16.mxu0 %v3567
    %4025 = vmatpush2.bf16.msra.mxu0 %v3566
    %4026 = vmatprep.subr.bf16.mxu0 %v3559
    %4027 = vmatpush2.bf16.msra.mxu0 %v3558
    %4028 = vmatprep.subr.bf16.mxu0 %v3551
    %4029 = vmatpush2.bf16.msra.mxu0 %v3550
    %4030 = vmatprep.mubr.bf16.mxu0 %v2674
    %4031 = vmatmul.mubr.bf16.gmra.mxu0 %v2673
    %v4032 = vpop.f32.mrf.mxu0
    %v4033 = vadd.f32 %v2681, %v4032
    %v4034 = vpop.f32.mrf.mxu0
    %v4035 = vadd.f32 %v2685, %v4034
    %v4036 = vpop.f32.mrf.mxu0
    %v4037 = vadd.f32 %v2681, %v4036
    %v4038 = vpop.f32.mrf.mxu0
    %v4039 = vadd.f32 %v2685, %v4038
    %4040 = vdwg.mxu0
    %4041 = vmatprep.subr.bf16.mxu0 %v3671
    %4042 = vmatpush1.bf16.msra.mxu0 %v3670
    %4043 = vmatprep.subr.bf16.mxu0 %v3663
    %4044 = vmatpush1.bf16.msra.mxu0 %v3662
    %4045 = vmatprep.subr.bf16.mxu0 %v3655
    %4046 = vmatpush1.bf16.msra.mxu0 %v3654
    %4047 = vmatprep.subr.bf16.mxu0 %v3647
    %4048 = vmatpush1.bf16.msra.mxu0 %v3646
    %4049 = vmatprep.subr.bf16.mxu0 %v3639
    %4050 = vmatpush1.bf16.msra.mxu0 %v3638
    %4051 = vmatprep.subr.bf16.mxu0 %v3631
    %4052 = vmatpush1.bf16.msra.mxu0 %v3630
    %4053 = vmatprep.subr.bf16.mxu0 %v3623
    %4054 = vmatpush1.bf16.msra.mxu0 %v3622
    %4055 = vmatprep.subr.bf16.mxu0 %v3615
    %4056 = vmatpush1.bf16.msra.mxu0 %v3614
    %4057 = vmatprep.subr.bf16.mxu0 %v3735
    %4058 = vmatpush2.bf16.msra.mxu0 %v3734
    %4059 = vmatprep.subr.bf16.mxu0 %v3727
    %4060 = vmatpush2.bf16.msra.mxu0 %v3726
    %4061 = vmatprep.subr.bf16.mxu0 %v3719
    %4062 = vmatpush2.bf16.msra.mxu0 %v3718
    %4063 = vmatprep.subr.bf16.mxu0 %v3711
    %4064 = vmatpush2.bf16.msra.mxu0 %v3710
    %4065 = vmatprep.subr.bf16.mxu0 %v3703
    %4066 = vmatpush2.bf16.msra.mxu0 %v3702
    %4067 = vmatprep.subr.bf16.mxu0 %v3695
    %4068 = vmatpush2.bf16.msra.mxu0 %v3694
    %4069 = vmatprep.subr.bf16.mxu0 %v3687
    %4070 = vmatpush2.bf16.msra.mxu0 %v3686
    %4071 = vmatprep.subr.bf16.mxu0 %v3679
    %4072 = vmatpush2.bf16.msra.mxu0 %v3678
    %4073 = vmatprep.mubr.bf16.mxu0 %v2676
    %4074 = vmatmul.mubr.bf16.gmra.mxu0 %v2675
    %v4075 = vpop.f32.mrf.mxu0
    %v4076 = vadd.f32 %v4033, %v4075
    %v4077 = vpop.f32.mrf.mxu0
    %v4078 = vadd.f32 %v4035, %v4077
    %v4079 = vpop.f32.mrf.mxu0
    %v4080 = vadd.f32 %v4037, %v4079
    %v4081 = vpop.f32.mrf.mxu0
    %v4082 = vadd.f32 %v4039, %v4081
    %4083 = vdwg.mxu0
    %4084 = vmatprep.subr.bf16.mxu0 %v3545
    %4085 = vmatpush1.bf16.msra.mxu0 %v3544
    %4086 = vmatprep.subr.bf16.mxu0 %v3537
    %4087 = vmatpush1.bf16.msra.mxu0 %v3536
    %4088 = vmatprep.subr.bf16.mxu0 %v3529
    %4089 = vmatpush1.bf16.msra.mxu0 %v3528
    %4090 = vmatprep.subr.bf16.mxu0 %v3521
    %4091 = vmatpush1.bf16.msra.mxu0 %v3520
    %4092 = vmatprep.subr.bf16.mxu0 %v3513
    %4093 = vmatpush1.bf16.msra.mxu0 %v3512
    %4094 = vmatprep.subr.bf16.mxu0 %v3505
    %4095 = vmatpush1.bf16.msra.mxu0 %v3504
    %4096 = vmatprep.subr.bf16.mxu0 %v3497
    %4097 = vmatpush1.bf16.msra.mxu0 %v3496
    %4098 = vmatprep.subr.bf16.mxu0 %v3489
    %4099 = vmatpush1.bf16.msra.mxu0 %v3488
    %4100 = vmatprep.subr.bf16.mxu0 %v3609
    %4101 = vmatpush2.bf16.msra.mxu0 %v3608
    %4102 = vmatprep.subr.bf16.mxu0 %v3601
    %4103 = vmatpush2.bf16.msra.mxu0 %v3600
    %4104 = vmatprep.subr.bf16.mxu0 %v3593
    %4105 = vmatpush2.bf16.msra.mxu0 %v3592
    %4106 = vmatprep.subr.bf16.mxu0 %v3585
    %4107 = vmatpush2.bf16.msra.mxu0 %v3584
    %4108 = vmatprep.subr.bf16.mxu0 %v3577
    %4109 = vmatpush2.bf16.msra.mxu0 %v3576
    %4110 = vmatprep.subr.bf16.mxu0 %v3569
    %4111 = vmatpush2.bf16.msra.mxu0 %v3568
    %4112 = vmatprep.subr.bf16.mxu0 %v3561
    %4113 = vmatpush2.bf16.msra.mxu0 %v3560
    %4114 = vmatprep.subr.bf16.mxu0 %v3553
    %4115 = vmatpush2.bf16.msra.mxu0 %v3552
    %4116 = vmatprep.mubr.bf16.mxu0 %v2674
    %4117 = vmatmul.mubr.bf16.gmra.mxu0 %v2673
    %v4118 = vpop.f32.mrf.mxu0
    %v4119 = vadd.f32 %v2689, %v4118
    %v4120 = vpop.f32.mrf.mxu0
    %v4121 = vadd.f32 %v2693, %v4120
    %v4122 = vpop.f32.mrf.mxu0
    %v4123 = vadd.f32 %v2689, %v4122
    %v4124 = vpop.f32.mrf.mxu0
    %v4125 = vadd.f32 %v2693, %v4124
    %4126 = vdwg.mxu0
    %4127 = vmatprep.subr.bf16.mxu0 %v3673
    %4128 = vmatpush1.bf16.msra.mxu0 %v3672
    %4129 = vmatprep.subr.bf16.mxu0 %v3665
    %4130 = vmatpush1.bf16.msra.mxu0 %v3664
    %4131 = vmatprep.subr.bf16.mxu0 %v3657
    %4132 = vmatpush1.bf16.msra.mxu0 %v3656
    %4133 = vmatprep.subr.bf16.mxu0 %v3649
    %4134 = vmatpush1.bf16.msra.mxu0 %v3648
    %4135 = vmatprep.subr.bf16.mxu0 %v3641
    %4136 = vmatpush1.bf16.msra.mxu0 %v3640
    %4137 = vmatprep.subr.bf16.mxu0 %v3633
    %4138 = vmatpush1.bf16.msra.mxu0 %v3632
    %4139 = vmatprep.subr.bf16.mxu0 %v3625
    %4140 = vmatpush1.bf16.msra.mxu0 %v3624
    %4141 = vmatprep.subr.bf16.mxu0 %v3617
    %4142 = vmatpush1.bf16.msra.mxu0 %v3616
    %4143 = vmatprep.subr.bf16.mxu0 %v3737
    %4144 = vmatpush2.bf16.msra.mxu0 %v3736
    %4145 = vmatprep.subr.bf16.mxu0 %v3729
    %4146 = vmatpush2.bf16.msra.mxu0 %v3728
    %4147 = vmatprep.subr.bf16.mxu0 %v3721
    %4148 = vmatpush2.bf16.msra.mxu0 %v3720
    %4149 = vmatprep.subr.bf16.mxu0 %v3713
    %4150 = vmatpush2.bf16.msra.mxu0 %v3712
    %4151 = vmatprep.subr.bf16.mxu0 %v3705
    %4152 = vmatpush2.bf16.msra.mxu0 %v3704
    %4153 = vmatprep.subr.bf16.mxu0 %v3697
    %4154 = vmatpush2.bf16.msra.mxu0 %v3696
    %4155 = vmatprep.subr.bf16.mxu0 %v3689
    %4156 = vmatpush2.bf16.msra.mxu0 %v3688
    %4157 = vmatprep.subr.bf16.mxu0 %v3681
    %4158 = vmatpush2.bf16.msra.mxu0 %v3680
    %4159 = vmatprep.mubr.bf16.mxu0 %v2676
    %4160 = vmatmul.mubr.bf16.gmra.mxu0 %v2675
    %v4161 = vpop.f32.mrf.mxu0
    %v4162 = vadd.f32 %v4119, %v4161
    %v4163 = vpop.f32.mrf.mxu0
    %v4164 = vadd.f32 %v4121, %v4163
    %v4165 = vpop.f32.mrf.mxu0
    %v4166 = vadd.f32 %v4123, %v4165
    %v4167 = vpop.f32.mrf.mxu0
    %v4168 = vadd.f32 %v4125, %v4167
    %4169 = vdwg.mxu0
    %4170 = vmatprep.subr.bf16.mxu0 %v3547
    %4171 = vmatpush1.bf16.msra.mxu0 %v3546
    %4172 = vmatprep.subr.bf16.mxu0 %v3539
    %4173 = vmatpush1.bf16.msra.mxu0 %v3538
    %4174 = vmatprep.subr.bf16.mxu0 %v3531
    %4175 = vmatpush1.bf16.msra.mxu0 %v3530
    %4176 = vmatprep.subr.bf16.mxu0 %v3523
    %4177 = vmatpush1.bf16.msra.mxu0 %v3522
    %4178 = vmatprep.subr.bf16.mxu0 %v3515
    %4179 = vmatpush1.bf16.msra.mxu0 %v3514
    %4180 = vmatprep.subr.bf16.mxu0 %v3507
    %4181 = vmatpush1.bf16.msra.mxu0 %v3506
    %4182 = vmatprep.subr.bf16.mxu0 %v3499
    %4183 = vmatpush1.bf16.msra.mxu0 %v3498
    %4184 = vmatprep.subr.bf16.mxu0 %v3491
    %4185 = vmatpush1.bf16.msra.mxu0 %v3490
    %4186 = vmatprep.subr.bf16.mxu0 %v3611
    %4187 = vmatpush2.bf16.msra.mxu0 %v3610
    %4188 = vmatprep.subr.bf16.mxu0 %v3603
    %4189 = vmatpush2.bf16.msra.mxu0 %v3602
    %4190 = vmatprep.subr.bf16.mxu0 %v3595
    %4191 = vmatpush2.bf16.msra.mxu0 %v3594
    %4192 = vmatprep.subr.bf16.mxu0 %v3587
    %4193 = vmatpush2.bf16.msra.mxu0 %v3586
    %4194 = vmatprep.subr.bf16.mxu0 %v3579
    %4195 = vmatpush2.bf16.msra.mxu0 %v3578
    %4196 = vmatprep.subr.bf16.mxu0 %v3571
    %4197 = vmatpush2.bf16.msra.mxu0 %v3570
    %4198 = vmatprep.subr.bf16.mxu0 %v3563
    %4199 = vmatpush2.bf16.msra.mxu0 %v3562
    %4200 = vmatprep.subr.bf16.mxu0 %v3555
    %4201 = vmatpush2.bf16.msra.mxu0 %v3554
    %4202 = vmatprep.mubr.bf16.mxu0 %v2674
    %4203 = vmatmul.mubr.bf16.gmra.mxu0 %v2673
    %v4204 = vpop.f32.mrf.mxu0
    %v4205 = vadd.f32 %v2697, %v4204
    %v4206 = vpop.f32.mrf.mxu0
    %v4207 = vadd.f32 %v2701, %v4206
    %v4208 = vpop.f32.mrf.mxu0
    %v4209 = vadd.f32 %v2697, %v4208
    %v4210 = vpop.f32.mrf.mxu0
    %v4211 = vadd.f32 %v2701, %v4210
    %4212 = vdwg.mxu0
    %4213 = vmatprep.subr.bf16.mxu0 %v3675
    %4214 = vmatpush1.bf16.msra.mxu0 %v3674
    %4215 = vmatprep.subr.bf16.mxu0 %v3667
    %4216 = vmatpush1.bf16.msra.mxu0 %v3666
    %4217 = vmatprep.subr.bf16.mxu0 %v3659
    %4218 = vmatpush1.bf16.msra.mxu0 %v3658
    %4219 = vmatprep.subr.bf16.mxu0 %v3651
    %4220 = vmatpush1.bf16.msra.mxu0 %v3650
    %4221 = vmatprep.subr.bf16.mxu0 %v3643
    %4222 = vmatpush1.bf16.msra.mxu0 %v3642
    %4223 = vmatprep.subr.bf16.mxu0 %v3635
    %4224 = vmatpush1.bf16.msra.mxu0 %v3634
    %4225 = vmatprep.subr.bf16.mxu0 %v3627
    %4226 = vmatpush1.bf16.msra.mxu0 %v3626
    %4227 = vmatprep.subr.bf16.mxu0 %v3619
    %4228 = vmatpush1.bf16.msra.mxu0 %v3618
    %4229 = vmatprep.subr.bf16.mxu0 %v3739
    %4230 = vmatpush2.bf16.msra.mxu0 %v3738
    %4231 = vmatprep.subr.bf16.mxu0 %v3731
    %4232 = vmatpush2.bf16.msra.mxu0 %v3730
    %4233 = vmatprep.subr.bf16.mxu0 %v3723
    %4234 = vmatpush2.bf16.msra.mxu0 %v3722
    %4235 = vmatprep.subr.bf16.mxu0 %v3715
    %4236 = vmatpush2.bf16.msra.mxu0 %v3714
    %4237 = vmatprep.subr.bf16.mxu0 %v3707
    %4238 = vmatpush2.bf16.msra.mxu0 %v3706
    %4239 = vmatprep.subr.bf16.mxu0 %v3699
    %4240 = vmatpush2.bf16.msra.mxu0 %v3698
    %4241 = vmatprep.subr.bf16.mxu0 %v3691
    %4242 = vmatpush2.bf16.msra.mxu0 %v3690
    %4243 = vmatprep.subr.bf16.mxu0 %v3683
    %4244 = vmatpush2.bf16.msra.mxu0 %v3682
    %4245 = vmatprep.mubr.bf16.mxu0 %v2676
    %4246 = vmatmul.mubr.bf16.gmra.mxu0 %v2675
    %v4247 = vpop.f32.mrf.mxu0
    %v4248 = vadd.f32 %v4205, %v4247
    %v4249 = vpop.f32.mrf.mxu0
    %v4250 = vadd.f32 %v4207, %v4249
    %v4251 = vpop.f32.mrf.mxu0
    %v4252 = vadd.f32 %v4209, %v4251
    %v4253 = vpop.f32.mrf.mxu0
    %v4254 = vadd.f32 %v4211, %v4253
    %4255 = vdwg.mxu0
    %4256 = vmatprep.subr.bf16.mxu0 %v3549
    %4257 = vmatpush1.bf16.msra.mxu0 %v3548
    %4258 = vmatprep.subr.bf16.mxu0 %v3541
    %4259 = vmatpush1.bf16.msra.mxu0 %v3540
    %4260 = vmatprep.subr.bf16.mxu0 %v3533
    %4261 = vmatpush1.bf16.msra.mxu0 %v3532
    %4262 = vmatprep.subr.bf16.mxu0 %v3525
    %4263 = vmatpush1.bf16.msra.mxu0 %v3524
    %4264 = vmatprep.subr.bf16.mxu0 %v3517
    %4265 = vmatpush1.bf16.msra.mxu0 %v3516
    %4266 = vmatprep.subr.bf16.mxu0 %v3509
    %4267 = vmatpush1.bf16.msra.mxu0 %v3508
    %4268 = vmatprep.subr.bf16.mxu0 %v3501
    %4269 = vmatpush1.bf16.msra.mxu0 %v3500
    %4270 = vmatprep.subr.bf16.mxu0 %v3493
    %4271 = vmatpush1.bf16.msra.mxu0 %v3492
    %4272 = vmatprep.subr.bf16.mxu0 %v3613
    %4273 = vmatpush2.bf16.msra.mxu0 %v3612
    %4274 = vmatprep.subr.bf16.mxu0 %v3605
    %4275 = vmatpush2.bf16.msra.mxu0 %v3604
    %4276 = vmatprep.subr.bf16.mxu0 %v3597
    %4277 = vmatpush2.bf16.msra.mxu0 %v3596
    %4278 = vmatprep.subr.bf16.mxu0 %v3589
    %4279 = vmatpush2.bf16.msra.mxu0 %v3588
    %4280 = vmatprep.subr.bf16.mxu0 %v3581
    %4281 = vmatpush2.bf16.msra.mxu0 %v3580
    %4282 = vmatprep.subr.bf16.mxu0 %v3573
    %4283 = vmatpush2.bf16.msra.mxu0 %v3572
    %4284 = vmatprep.subr.bf16.mxu0 %v3565
    %4285 = vmatpush2.bf16.msra.mxu0 %v3564
    %4286 = vmatprep.subr.bf16.mxu0 %v3557
    %4287 = vmatpush2.bf16.msra.mxu0 %v3556
    %4288 = vmatprep.mubr.bf16.mxu0 %v2674
    %4289 = vmatmul.mubr.bf16.gmra.mxu0 %v2673
    %v4290 = vpop.f32.mrf.mxu0
    %v4291 = vadd.f32 %v2705, %v4290
    %v4292 = vpop.f32.mrf.mxu0
    %v4293 = vadd.f32 %v2709, %v4292
    %v4294 = vpop.f32.mrf.mxu0
    %v4295 = vadd.f32 %v2705, %v4294
    %v4296 = vpop.f32.mrf.mxu0
    %v4297 = vadd.f32 %v2709, %v4296
    %4298 = vdwg.mxu0
    %4299 = vmatprep.subr.bf16.mxu0 %v3677
    %4300 = vmatpush1.bf16.msra.mxu0 %v3676
    %4301 = vmatprep.subr.bf16.mxu0 %v3669
    %4302 = vmatpush1.bf16.msra.mxu0 %v3668
    %4303 = vmatprep.subr.bf16.mxu0 %v3661
    %4304 = vmatpush1.bf16.msra.mxu0 %v3660
    %4305 = vmatprep.subr.bf16.mxu0 %v3653
    %4306 = vmatpush1.bf16.msra.mxu0 %v3652
    %4307 = vmatprep.subr.bf16.mxu0 %v3645
    %4308 = vmatpush1.bf16.msra.mxu0 %v3644
    %4309 = vmatprep.subr.bf16.mxu0 %v3637
    %4310 = vmatpush1.bf16.msra.mxu0 %v3636
    %4311 = vmatprep.subr.bf16.mxu0 %v3629
    %4312 = vmatpush1.bf16.msra.mxu0 %v3628
    %4313 = vmatprep.subr.bf16.mxu0 %v3621
    %4314 = vmatpush1.bf16.msra.mxu0 %v3620
    %4315 = vmatprep.subr.bf16.mxu0 %v3741
    %4316 = vmatpush2.bf16.msra.mxu0 %v3740
    %4317 = vmatprep.subr.bf16.mxu0 %v3733
    %4318 = vmatpush2.bf16.msra.mxu0 %v3732
    %4319 = vmatprep.subr.bf16.mxu0 %v3725
    %4320 = vmatpush2.bf16.msra.mxu0 %v3724
    %4321 = vmatprep.subr.bf16.mxu0 %v3717
    %4322 = vmatpush2.bf16.msra.mxu0 %v3716
    %4323 = vmatprep.subr.bf16.mxu0 %v3709
    %4324 = vmatpush2.bf16.msra.mxu0 %v3708
    %4325 = vmatprep.subr.bf16.mxu0 %v3701
    %4326 = vmatpush2.bf16.msra.mxu0 %v3700
    %4327 = vmatprep.subr.bf16.mxu0 %v3693
    %4328 = vmatpush2.bf16.msra.mxu0 %v3692
    %4329 = vmatprep.subr.bf16.mxu0 %v3685
    %4330 = vmatpush2.bf16.msra.mxu0 %v3684
    %4331 = vmatprep.mubr.bf16.mxu0 %v2676
    %4332 = vmatmul.mubr.bf16.gmra.mxu0 %v2675
    %v4333 = vpop.f32.mrf.mxu0
    %v4334 = vadd.f32 %v4291, %v4333
    %v4335 = vpop.f32.mrf.mxu0
    %v4336 = vadd.f32 %v4293, %v4335
    %v4337 = vpop.f32.mrf.mxu0
    %v4338 = vadd.f32 %v4295, %v4337
    %v4339 = vpop.f32.mrf.mxu0
    %v4340 = vadd.f32 %v4297, %v4339
    %4341 = vdwg.mxu0
    %v4342 = vpack.c.bf16 %v2553, %v2549
    %v4343 = vpack.c.bf16 %v2555, %v2551
    %v4344 = vpack.c.bf16 %v2659, %v2655
    %v4345 = vpack.c.bf16 %v2661, %v2657
    %v4346 = vpack.c.bf16 %v2563, %v2559
    %v4347 = vpack.c.bf16 %v2565, %v2561
    %v4348 = vpack.c.bf16 %v2669, %v2665
    %v4349 = vpack.c.bf16 %v2671, %v2667
    %v4350 = vpack.c.bf16 %v4076, %v4076
    %v4351 = vpack.c.bf16 %v4078, %v4078
    %v4352 = vpack.c.bf16 %v4162, %v4162
    %v4353 = vpack.c.bf16 %v4164, %v4164
    %v4354 = vpack.c.bf16 %v4080, %v4080
    %v4355 = vpack.c.bf16 %v4082, %v4082
    %v4356 = vpack.c.bf16 %v4166, %v4166
    %v4357 = vpack.c.bf16 %v4168, %v4168
    %v4358 = vpack.c.bf16 %v4248, %v4248
    %v4359 = vpack.c.bf16 %v4250, %v4250
    %v4360 = vpack.c.bf16 %v4334, %v4334
    %v4361 = vpack.c.bf16 %v4336, %v4336
    %v4362 = vpack.c.bf16 %v4252, %v4252
    %v4363 = vpack.c.bf16 %v4254, %v4254
    %v4364 = vpack.c.bf16 %v4338, %v4338
    %v4365 = vpack.c.bf16 %v4340, %v4340
    %4366 = vmatprep.subr.bf16.mxu0 0
    %4367 = vmatpush1.bf16.xpose.msra.mxu0 0
    %4368 = vmatprep.subr.bf16.mxu0 0
    %4369 = vmatpush1.bf16.xpose.msra.mxu0 0
    %4370 = vmatprep.subr.bf16.mxu0 0
    %4371 = vmatpush1.bf16.xpose.msra.mxu0 0
    %4372 = vmatprep.subr.bf16.mxu0 0
    %4373 = vmatpush1.bf16.xpose.msra.mxu0 0
    %4374 = vmatprep.subr.bf16.mxu0 0
    %4375 = vmatpush1.bf16.xpose.msra.mxu0 0
    %4376 = vmatprep.subr.bf16.mxu0 0
    %4377 = vmatpush1.bf16.xpose.msra.mxu0 0
    %4378 = vmatprep.subr.bf16.mxu0 0
    %4379 = vmatpush1.bf16.xpose.msra.mxu0 0
    %4380 = vmatprep.subr.bf16.mxu0 %v4351
    %4381 = vmatpush1.bf16.xpose.msra.mxu0 %v4350
    %4382 = vmatprep.subr.bf16.mxu0 0
    %4383 = vmatpush2.bf16.xpose.msra.mxu0 0
    %4384 = vmatprep.subr.bf16.mxu0 0
    %4385 = vmatpush2.bf16.xpose.msra.mxu0 0
    %4386 = vmatprep.subr.bf16.mxu0 0
    %4387 = vmatpush2.bf16.xpose.msra.mxu0 0
    %4388 = vmatprep.subr.bf16.mxu0 0
    %4389 = vmatpush2.bf16.xpose.msra.mxu0 0
    %4390 = vmatprep.subr.bf16.mxu0 0
    %4391 = vmatpush2.bf16.xpose.msra.mxu0 0
    %4392 = vmatprep.subr.bf16.mxu0 0
    %4393 = vmatpush2.bf16.xpose.msra.mxu0 0
    %4394 = vmatprep.subr.bf16.mxu0 0
    %4395 = vmatpush2.bf16.xpose.msra.mxu0 0
    %4396 = vmatprep.subr.bf16.mxu0 0
    %4397 = vmatpush2.bf16.xpose.msra.mxu0 0
    %4398 = vmatprep.mubr.bf16.mxu0 %v4343
    %4399 = vmatmul.mubr.bf16.gmra.mxu0 %v4342
    %v4400 = vpop.f32.mrf.mxu0
    %v4401 = vadd.f32 0.0, %v4400
    %v4402 = vpop.f32.mrf.mxu0
    %v4403 = vpop.f32.mrf.mxu0
    %v4404 = vadd.f32 0.0, %v4403
    %v4405 = vpop.f32.mrf.mxu0
    %4406 = vdwg.mxu0
    %4407 = vmatprep.subr.bf16.mxu0 0
    %4408 = vmatpush1.bf16.xpose.msra.mxu0 0
    %4409 = vmatprep.subr.bf16.mxu0 0
    %4410 = vmatpush1.bf16.xpose.msra.mxu0 0
    %4411 = vmatprep.subr.bf16.mxu0 0
    %4412 = vmatpush1.bf16.xpose.msra.mxu0 0
    %4413 = vmatprep.subr.bf16.mxu0 0
    %4414 = vmatpush1.bf16.xpose.msra.mxu0 0
    %4415 = vmatprep.subr.bf16.mxu0 0
    %4416 = vmatpush1.bf16.xpose.msra.mxu0 0
    %4417 = vmatprep.subr.bf16.mxu0 0
    %4418 = vmatpush1.bf16.xpose.msra.mxu0 0
    %4419 = vmatprep.subr.bf16.mxu0 0
    %4420 = vmatpush1.bf16.xpose.msra.mxu0 0
    %4421 = vmatprep.subr.bf16.mxu0 %v4353
    %4422 = vmatpush1.bf16.xpose.msra.mxu0 %v4352
    %4423 = vmatprep.subr.bf16.mxu0 0
    %4424 = vmatpush2.bf16.xpose.msra.mxu0 0
    %4425 = vmatprep.subr.bf16.mxu0 0
    %4426 = vmatpush2.bf16.xpose.msra.mxu0 0
    %4427 = vmatprep.subr.bf16.mxu0 0
    %4428 = vmatpush2.bf16.xpose.msra.mxu0 0
    %4429 = vmatprep.subr.bf16.mxu0 0
    %4430 = vmatpush2.bf16.xpose.msra.mxu0 0
    %4431 = vmatprep.subr.bf16.mxu0 0
    %4432 = vmatpush2.bf16.xpose.msra.mxu0 0
    %4433 = vmatprep.subr.bf16.mxu0 0
    %4434 = vmatpush2.bf16.xpose.msra.mxu0 0
    %4435 = vmatprep.subr.bf16.mxu0 0
    %4436 = vmatpush2.bf16.xpose.msra.mxu0 0
    %4437 = vmatprep.subr.bf16.mxu0 0
    %4438 = vmatpush2.bf16.xpose.msra.mxu0 0
    %4439 = vmatprep.mubr.bf16.mxu0 %v4345
    %4440 = vmatmul.mubr.bf16.gmra.mxu0 %v4344
    %v4441 = vpop.f32.mrf.mxu0
    %v4442 = vadd.f32 %v4401, %v4441
    %v4443 = vpop.f32.mrf.mxu0
    %v4444 = vpop.f32.mrf.mxu0
    %v4445 = vadd.f32 %v4404, %v4444
    %v4446 = vpop.f32.mrf.mxu0
    %4447 = vdwg.mxu0
    %4448 = vmatprep.subr.bf16.mxu0 0
    %4449 = vmatpush1.bf16.xpose.msra.mxu0 0
    %4450 = vmatprep.subr.bf16.mxu0 0
    %4451 = vmatpush1.bf16.xpose.msra.mxu0 0
    %4452 = vmatprep.subr.bf16.mxu0 0
    %4453 = vmatpush1.bf16.xpose.msra.mxu0 0
    %4454 = vmatprep.subr.bf16.mxu0 0
    %4455 = vmatpush1.bf16.xpose.msra.mxu0 0
    %4456 = vmatprep.subr.bf16.mxu0 0
    %4457 = vmatpush1.bf16.xpose.msra.mxu0 0
    %4458 = vmatprep.subr.bf16.mxu0 0
    %4459 = vmatpush1.bf16.xpose.msra.mxu0 0
    %4460 = vmatprep.subr.bf16.mxu0 0
    %4461 = vmatpush1.bf16.xpose.msra.mxu0 0
    %4462 = vmatprep.subr.bf16.mxu0 %v4355
    %4463 = vmatpush1.bf16.xpose.msra.mxu0 %v4354
    %4464 = vmatprep.subr.bf16.mxu0 0
    %4465 = vmatpush2.bf16.xpose.msra.mxu0 0
    %4466 = vmatprep.subr.bf16.mxu0 0
    %4467 = vmatpush2.bf16.xpose.msra.mxu0 0
    %4468 = vmatprep.subr.bf16.mxu0 0
    %4469 = vmatpush2.bf16.xpose.msra.mxu0 0
    %4470 = vmatprep.subr.bf16.mxu0 0
    %4471 = vmatpush2.bf16.xpose.msra.mxu0 0
    %4472 = vmatprep.subr.bf16.mxu0 0
    %4473 = vmatpush2.bf16.xpose.msra.mxu0 0
    %4474 = vmatprep.subr.bf16.mxu0 0
    %4475 = vmatpush2.bf16.xpose.msra.mxu0 0
    %4476 = vmatprep.subr.bf16.mxu0 0
    %4477 = vmatpush2.bf16.xpose.msra.mxu0 0
    %4478 = vmatprep.subr.bf16.mxu0 0
    %4479 = vmatpush2.bf16.xpose.msra.mxu0 0
    %4480 = vmatprep.mubr.bf16.mxu0 %v4347
    %4481 = vmatmul.mubr.bf16.gmra.mxu0 %v4346
    %v4482 = vpop.f32.mrf.mxu0
    %v4483 = vadd.f32 0.0, %v4482
    %v4484 = vpop.f32.mrf.mxu0
    %v4485 = vpop.f32.mrf.mxu0
    %v4486 = vadd.f32 0.0, %v4485
    %v4487 = vpop.f32.mrf.mxu0
    %4488 = vdwg.mxu0
    %4489 = vmatprep.subr.bf16.mxu0 0
    %4490 = vmatpush1.bf16.xpose.msra.mxu0 0
    %4491 = vmatprep.subr.bf16.mxu0 0
    %4492 = vmatpush1.bf16.xpose.msra.mxu0 0
    %4493 = vmatprep.subr.bf16.mxu0 0
    %4494 = vmatpush1.bf16.xpose.msra.mxu0 0
    %4495 = vmatprep.subr.bf16.mxu0 0
    %4496 = vmatpush1.bf16.xpose.msra.mxu0 0
    %4497 = vmatprep.subr.bf16.mxu0 0
    %4498 = vmatpush1.bf16.xpose.msra.mxu0 0
    %4499 = vmatprep.subr.bf16.mxu0 0
    %4500 = vmatpush1.bf16.xpose.msra.mxu0 0
    %4501 = vmatprep.subr.bf16.mxu0 0
    %4502 = vmatpush1.bf16.xpose.msra.mxu0 0
    %4503 = vmatprep.subr.bf16.mxu0 %v4357
    %4504 = vmatpush1.bf16.xpose.msra.mxu0 %v4356
    %4505 = vmatprep.subr.bf16.mxu0 0
    %4506 = vmatpush2.bf16.xpose.msra.mxu0 0
    %4507 = vmatprep.subr.bf16.mxu0 0
    %4508 = vmatpush2.bf16.xpose.msra.mxu0 0
    %4509 = vmatprep.subr.bf16.mxu0 0
    %4510 = vmatpush2.bf16.xpose.msra.mxu0 0
    %4511 = vmatprep.subr.bf16.mxu0 0
    %4512 = vmatpush2.bf16.xpose.msra.mxu0 0
    %4513 = vmatprep.subr.bf16.mxu0 0
    %4514 = vmatpush2.bf16.xpose.msra.mxu0 0
    %4515 = vmatprep.subr.bf16.mxu0 0
    %4516 = vmatpush2.bf16.xpose.msra.mxu0 0
    %4517 = vmatprep.subr.bf16.mxu0 0
    %4518 = vmatpush2.bf16.xpose.msra.mxu0 0
    %4519 = vmatprep.subr.bf16.mxu0 0
    %4520 = vmatpush2.bf16.xpose.msra.mxu0 0
    %4521 = vmatprep.mubr.bf16.mxu0 %v4349
    %4522 = vmatmul.mubr.bf16.gmra.mxu0 %v4348
    %v4523 = vpop.f32.mrf.mxu0
    %v4524 = vadd.f32 %v4483, %v4523
    %v4525 = vpop.f32.mrf.mxu0
    %v4526 = vpop.f32.mrf.mxu0
    %v4527 = vadd.f32 %v4486, %v4526
    %v4528 = vpop.f32.mrf.mxu0
    %4529 = vdwg.mxu0
    %v4530 = vmul.f32 %v4442, 0.044194173
    %v4531 = vmul.f32 %v4445, 0.044194173
    %v4532 = vmul.f32 %v4524, 0.044194173
    %v4533 = vmul.f32 %v4527, 0.044194173
    %vm4534 = vcmask 64512
    %v4535 = vsel %vm4534, %v4530, -inf
    %4536 = vmax.xlane.f32.xlu0 %v4535
    %v4537 = vpop.xlane.xlu0 %4536
    %v4538 = vsel %vm4534, %v4531, -inf
    %4539 = vmax.xlane.f32.xlu0 %v4538
    %v4540 = vpop.xlane.xlu0 %4539
    %v4541 = vsel %vm4534, %v4532, -inf
    %4542 = vmax.xlane.f32.xlu0 %v4541
    %v4543 = vpop.xlane.xlu0 %4542
    %v4544 = vsel %vm4534, %v4533, -inf
    %4545 = vmax.xlane.f32.xlu0 %v4544
    %v4546 = vpop.xlane.xlu0 %4545
    %v4547 = vsub.f32 %v4530, %v4537
    %v4548 = vsub.f32 %v4531, %v4540
    %v4549 = vsub.f32 %v4532, %v4543
    %v4550 = vsub.f32 %v4533, %v4546
    %v4551 = vmul.f32 %v4547, 1.442695
    %v4552 = vpow.pop %v4551
    %v4553 = vmul.f32 %v4548, 1.442695
    %v4554 = vpow.pop %v4553
    %v4555 = vmul.f32 %v4549, 1.442695
    %v4556 = vpow.pop %v4555
    %v4557 = vmul.f32 %v4550, 1.442695
    %v4558 = vpow.pop %v4557
    %v4559 = vsel %vm4534, %v4552, 0.0
    %4560 = vadd.xlane.f32.xlu0 %v4559
    %v4561 = vpop.xlane.xlu0 %4560
    %v4562 = vsel %vm4534, %v4554, 0.0
    %4563 = vadd.xlane.f32.xlu0 %v4562
    %v4564 = vpop.xlane.xlu0 %4563
    %v4565 = vsel %vm4534, %v4556, 0.0
    %4566 = vadd.xlane.f32.xlu0 %v4565
    %v4567 = vpop.xlane.xlu0 %4566
    %v4568 = vsel %vm4534, %v4558, 0.0
    %4569 = vadd.xlane.f32.xlu0 %v4568
    %v4570 = vpop.xlane.xlu0 %4569
    %v4571 = vrcp.pop %v4561
    %v4572 = vmul.f32 %v4552, %v4571
    %v4573 = vrcp.pop %v4564
    %v4574 = vmul.f32 %v4554, %v4573
    %v4575 = vrcp.pop %v4567
    %v4576 = vmul.f32 %v4556, %v4575
    %v4577 = vrcp.pop %v4570
    %v4578 = vmul.f32 %v4558, %v4577
    %v4579 = vpack.c.bf16 %v4574, %v4572
    %v4580 = vpack.c.bf16 %v4578, %v4576
    %v4582 = vsel %vm4534, %v4579, 0
    %vm4584 = vcmask 1043456
    %v4586 = vsel %vm4584, %v4358, 0
    %v4589 = vsel %vm4584, %v4359, 0
    %v4592 = vsel %vm4584, %v4360, 0
    %v4595 = vsel %vm4584, %v4361, 0
    %4597 = vmatprep.subr.bf16.mxu0 0
    %4598 = vmatpush1.bf16.msra.mxu0 0
    %4599 = vmatprep.subr.bf16.mxu0 0
    %4600 = vmatpush1.bf16.msra.mxu0 0
    %4601 = vmatprep.subr.bf16.mxu0 0
    %4602 = vmatpush1.bf16.msra.mxu0 0
    %4603 = vmatprep.subr.bf16.mxu0 0
    %4604 = vmatpush1.bf16.msra.mxu0 0
    %4605 = vmatprep.subr.bf16.mxu0 0
    %4606 = vmatpush1.bf16.msra.mxu0 0
    %4607 = vmatprep.subr.bf16.mxu0 0
    %4608 = vmatpush1.bf16.msra.mxu0 0
    %4609 = vmatprep.subr.bf16.mxu0 0
    %4610 = vmatpush1.bf16.msra.mxu0 0
    %4611 = vmatprep.subr.bf16.mxu0 %v4589
    %4612 = vmatpush1.bf16.msra.mxu0 %v4586
    %4613 = vmatprep.subr.bf16.mxu0 0
    %4614 = vmatpush2.bf16.msra.mxu0 0
    %4615 = vmatprep.subr.bf16.mxu0 0
    %4616 = vmatpush2.bf16.msra.mxu0 0
    %4617 = vmatprep.subr.bf16.mxu0 0
    %4618 = vmatpush2.bf16.msra.mxu0 0
    %4619 = vmatprep.subr.bf16.mxu0 0
    %4620 = vmatpush2.bf16.msra.mxu0 0
    %4621 = vmatprep.subr.bf16.mxu0 0
    %4622 = vmatpush2.bf16.msra.mxu0 0
    %4623 = vmatprep.subr.bf16.mxu0 0
    %4624 = vmatpush2.bf16.msra.mxu0 0
    %4625 = vmatprep.subr.bf16.mxu0 0
    %4626 = vmatpush2.bf16.msra.mxu0 0
    %4627 = vmatprep.subr.bf16.mxu0 0
    %4628 = vmatpush2.bf16.msra.mxu0 0
    %4629 = vmatprep.mubr.bf16.mxu0 0
    %4630 = vmatmul.mubr.bf16.gmra.mxu0 %v4582
    %v4631 = vpop.f32.mrf.mxu0
    %v4632 = vadd.f32 0.0, %v4631
    %v4633 = vpop.f32.mrf.mxu0
    %v4634 = vadd.f32 0.0, %v4633
    %v4635 = vpop.f32.mrf.mxu0
    %v4636 = vadd.f32 0.0, %v4635
    %v4637 = vpop.f32.mrf.mxu0
    %v4638 = vadd.f32 0.0, %v4637
    %4639 = vdwg.mxu0
    %4640 = vmatprep.subr.bf16.mxu0 0
    %4641 = vmatpush1.bf16.msra.mxu0 0
    %4642 = vmatprep.subr.bf16.mxu0 0
    %4643 = vmatpush1.bf16.msra.mxu0 0
    %4644 = vmatprep.subr.bf16.mxu0 0
    %4645 = vmatpush1.bf16.msra.mxu0 0
    %4646 = vmatprep.subr.bf16.mxu0 0
    %4647 = vmatpush1.bf16.msra.mxu0 0
    %4648 = vmatprep.subr.bf16.mxu0 0
    %4649 = vmatpush1.bf16.msra.mxu0 0
    %4650 = vmatprep.subr.bf16.mxu0 0
    %4651 = vmatpush1.bf16.msra.mxu0 0
    %4652 = vmatprep.subr.bf16.mxu0 0
    %4653 = vmatpush1.bf16.msra.mxu0 0
    %4654 = vmatprep.subr.bf16.mxu0 %v4595
    %4655 = vmatpush1.bf16.msra.mxu0 %v4592
    %4656 = vmatprep.subr.bf16.mxu0 0
    %4657 = vmatpush2.bf16.msra.mxu0 0
    %4658 = vmatprep.subr.bf16.mxu0 0
    %4659 = vmatpush2.bf16.msra.mxu0 0
    %4660 = vmatprep.subr.bf16.mxu0 0
    %4661 = vmatpush2.bf16.msra.mxu0 0
    %4662 = vmatprep.subr.bf16.mxu0 0
    %4663 = vmatpush2.bf16.msra.mxu0 0
    %4664 = vmatprep.subr.bf16.mxu0 0
    %4665 = vmatpush2.bf16.msra.mxu0 0
    %4666 = vmatprep.subr.bf16.mxu0 0
    %4667 = vmatpush2.bf16.msra.mxu0 0
    %4668 = vmatprep.subr.bf16.mxu0 0
    %4669 = vmatpush2.bf16.msra.mxu0 0
    %4670 = vmatprep.subr.bf16.mxu0 0
    %4671 = vmatpush2.bf16.msra.mxu0 0
    %4672 = vmatprep.mubr.bf16.mxu0 0
    %4673 = vmatmul.mubr.bf16.gmra.mxu0 %v4582
    %v4674 = vpop.f32.mrf.mxu0
    %v4675 = vadd.f32 0.0, %v4674
    %v4676 = vpop.f32.mrf.mxu0
    %v4677 = vadd.f32 0.0, %v4676
    %v4678 = vpop.f32.mrf.mxu0
    %v4679 = vadd.f32 0.0, %v4678
    %v4680 = vpop.f32.mrf.mxu0
    %v4681 = vadd.f32 0.0, %v4680
    %4682 = vdwg.mxu0
    %v4684 = vsel %vm4534, %v4580, 0
    %v4687 = vsel %vm4584, %v4362, 0
    %v4690 = vsel %vm4584, %v4363, 0
    %v4693 = vsel %vm4584, %v4364, 0
    %v4696 = vsel %vm4584, %v4365, 0
    %4698 = vmatprep.subr.bf16.mxu0 0
    %4699 = vmatpush1.bf16.msra.mxu0 0
    %4700 = vmatprep.subr.bf16.mxu0 0
    %4701 = vmatpush1.bf16.msra.mxu0 0
    %4702 = vmatprep.subr.bf16.mxu0 0
    %4703 = vmatpush1.bf16.msra.mxu0 0
    %4704 = vmatprep.subr.bf16.mxu0 0
    %4705 = vmatpush1.bf16.msra.mxu0 0
    %4706 = vmatprep.subr.bf16.mxu0 0
    %4707 = vmatpush1.bf16.msra.mxu0 0
    %4708 = vmatprep.subr.bf16.mxu0 0
    %4709 = vmatpush1.bf16.msra.mxu0 0
    %4710 = vmatprep.subr.bf16.mxu0 0
    %4711 = vmatpush1.bf16.msra.mxu0 0
    %4712 = vmatprep.subr.bf16.mxu0 %v4690
    %4713 = vmatpush1.bf16.msra.mxu0 %v4687
    %4714 = vmatprep.subr.bf16.mxu0 0
    %4715 = vmatpush2.bf16.msra.mxu0 0
    %4716 = vmatprep.subr.bf16.mxu0 0
    %4717 = vmatpush2.bf16.msra.mxu0 0
    %4718 = vmatprep.subr.bf16.mxu0 0
    %4719 = vmatpush2.bf16.msra.mxu0 0
    %4720 = vmatprep.subr.bf16.mxu0 0
    %4721 = vmatpush2.bf16.msra.mxu0 0
    %4722 = vmatprep.subr.bf16.mxu0 0
    %4723 = vmatpush2.bf16.msra.mxu0 0
    %4724 = vmatprep.subr.bf16.mxu0 0
    %4725 = vmatpush2.bf16.msra.mxu0 0
    %4726 = vmatprep.subr.bf16.mxu0 0
    %4727 = vmatpush2.bf16.msra.mxu0 0
    %4728 = vmatprep.subr.bf16.mxu0 0
    %4729 = vmatpush2.bf16.msra.mxu0 0
    %4730 = vmatprep.mubr.bf16.mxu0 0
    %4731 = vmatmul.mubr.bf16.gmra.mxu0 %v4684
    %v4732 = vpop.f32.mrf.mxu0
    %v4733 = vadd.f32 0.0, %v4732
    %v4734 = vpop.f32.mrf.mxu0
    %v4735 = vadd.f32 0.0, %v4734
    %v4736 = vpop.f32.mrf.mxu0
    %v4737 = vadd.f32 0.0, %v4736
    %v4738 = vpop.f32.mrf.mxu0
    %v4739 = vadd.f32 0.0, %v4738
    %4740 = vdwg.mxu0
    %4741 = vmatprep.subr.bf16.mxu0 0
    %4742 = vmatpush1.bf16.msra.mxu0 0
    %4743 = vmatprep.subr.bf16.mxu0 0
    %4744 = vmatpush1.bf16.msra.mxu0 0
    %4745 = vmatprep.subr.bf16.mxu0 0
    %4746 = vmatpush1.bf16.msra.mxu0 0
    %4747 = vmatprep.subr.bf16.mxu0 0
    %4748 = vmatpush1.bf16.msra.mxu0 0
    %4749 = vmatprep.subr.bf16.mxu0 0
    %4750 = vmatpush1.bf16.msra.mxu0 0
    %4751 = vmatprep.subr.bf16.mxu0 0
    %4752 = vmatpush1.bf16.msra.mxu0 0
    %4753 = vmatprep.subr.bf16.mxu0 0
    %4754 = vmatpush1.bf16.msra.mxu0 0
    %4755 = vmatprep.subr.bf16.mxu0 %v4696
    %4756 = vmatpush1.bf16.msra.mxu0 %v4693
    %4757 = vmatprep.subr.bf16.mxu0 0
    %4758 = vmatpush2.bf16.msra.mxu0 0
    %4759 = vmatprep.subr.bf16.mxu0 0
    %4760 = vmatpush2.bf16.msra.mxu0 0
    %4761 = vmatprep.subr.bf16.mxu0 0
    %4762 = vmatpush2.bf16.msra.mxu0 0
    %4763 = vmatprep.subr.bf16.mxu0 0
    %4764 = vmatpush2.bf16.msra.mxu0 0
    %4765 = vmatprep.subr.bf16.mxu0 0
    %4766 = vmatpush2.bf16.msra.mxu0 0
    %4767 = vmatprep.subr.bf16.mxu0 0
    %4768 = vmatpush2.bf16.msra.mxu0 0
    %4769 = vmatprep.subr.bf16.mxu0 0
    %4770 = vmatpush2.bf16.msra.mxu0 0
    %4771 = vmatprep.subr.bf16.mxu0 0
    %4772 = vmatpush2.bf16.msra.mxu0 0
    %4773 = vmatprep.mubr.bf16.mxu0 0
    %4774 = vmatmul.mubr.bf16.gmra.mxu0 %v4684
    %v4775 = vpop.f32.mrf.mxu0
    %v4776 = vadd.f32 0.0, %v4775
    %v4777 = vpop.f32.mrf.mxu0
    %v4778 = vadd.f32 0.0, %v4777
    %v4779 = vpop.f32.mrf.mxu0
    %v4780 = vadd.f32 0.0, %v4779
    %v4781 = vpop.f32.mrf.mxu0
    %v4782 = vadd.f32 0.0, %v4781
    %4783 = vdwg.mxu0
    %v4784 = vpack.c.bf16 %v4636, %v4632
    %v4785 = vpack.c.bf16 %v4638, %v4634
    %v4786 = vpack.c.bf16 %v4679, %v4675
    %v4787 = vpack.c.bf16 %v4681, %v4677
    %v4788 = vpack.c.bf16 %v4737, %v4733
    %v4789 = vpack.c.bf16 %v4739, %v4735
    %v4790 = vpack.c.bf16 %v4780, %v4776
    %v4791 = vpack.c.bf16 %v4782, %v4778
    %v4793 = vlaneseq
    %v4794 = vshrl.u32 %v4793, 7
    %v4795 = vsub.s32 0, %v4794
    %v4796 = vrot.slane %v909, %v4795
    %v4797 = vlaneseq
    %v4798 = vshrl.u32 %v4797, 7
    %v4799 = vsub.s32 1, %v4798
    %v4800 = vrot.slane %v909, %v4799
    %v4801 = vlaneseq
    %v4802 = vshrl.u32 %v4801, 7
    %v4803 = vsub.s32 2, %v4802
    %v4804 = vrot.slane %v909, %v4803
    %v4805 = vlaneseq
    %v4806 = vshrl.u32 %v4805, 7
    %v4807 = vsub.s32 3, %v4806
    %v4808 = vrot.slane %v909, %v4807
    %v4809 = vlaneseq
    %v4810 = vshrl.u32 %v4809, 7
    %v4811 = vsub.s32 4, %v4810
    %v4812 = vrot.slane %v909, %v4811
    %v4813 = vlaneseq
    %v4814 = vshrl.u32 %v4813, 7
    %v4815 = vsub.s32 5, %v4814
    %v4816 = vrot.slane %v909, %v4815
    %v4817 = vlaneseq
    %v4818 = vshrl.u32 %v4817, 7
    %v4819 = vsub.s32 6, %v4818
    %v4820 = vrot.slane %v909, %v4819
    %v4821 = vlaneseq
    %v4822 = vshrl.u32 %v4821, 7
    %v4823 = vsub.s32 7, %v4822
    %v4824 = vrot.slane %v909, %v4823
    %v5089 = vunpack.c.l.b16 %v585
    %v5090 = vunpack.c.h.b16 %v585
    %v5091 = vunpack.c.l.b16 %v586
    %v5092 = vunpack.c.h.b16 %v586
    %v5093 = vunpack.c.l.b16 %v587
    %v5094 = vunpack.c.h.b16 %v587
    %v5095 = vunpack.c.l.b16 %v588
    %v5096 = vunpack.c.h.b16 %v588
    %v5097 = vunpack.c.l.b16 %v589
    %v5098 = vunpack.c.h.b16 %v589
    %v5099 = vunpack.c.l.b16 %v590
    %v5100 = vunpack.c.h.b16 %v590
    %v5101 = vunpack.c.l.b16 %v591
    %v5102 = vunpack.c.h.b16 %v591
    %v5103 = vunpack.c.l.b16 %v592
    %v5104 = vunpack.c.h.b16 %v592
    %v5105 = vunpack.c.l.b16 %v593
    %v5106 = vunpack.c.h.b16 %v593
    %v5107 = vunpack.c.l.b16 %v594
    %v5108 = vunpack.c.h.b16 %v594
    %v5109 = vunpack.c.l.b16 %v595
    %v5110 = vunpack.c.h.b16 %v595
    %v5111 = vunpack.c.l.b16 %v596
    %v5112 = vunpack.c.h.b16 %v596
    %v5113 = vunpack.c.l.b16 %v597
    %v5114 = vunpack.c.h.b16 %v597
    %v5115 = vunpack.c.l.b16 %v598
    %v5116 = vunpack.c.h.b16 %v598
    %v5117 = vunpack.c.l.b16 %v599
    %v5118 = vunpack.c.h.b16 %v599
    %v5119 = vunpack.c.l.b16 %v600
    %v5120 = vunpack.c.h.b16 %v600
    %v5121 = vunpack.c.l.b16 %v601
    %v5122 = vunpack.c.h.b16 %v601
    %v5123 = vunpack.c.l.b16 %v602
    %v5124 = vunpack.c.h.b16 %v602
    %v5125 = vunpack.c.l.b16 %v603
    %v5126 = vunpack.c.h.b16 %v603
    %v5127 = vunpack.c.l.b16 %v604
    %v5128 = vunpack.c.h.b16 %v604
    %v5129 = vunpack.c.l.b16 %v605
    %v5130 = vunpack.c.h.b16 %v605
    %v5131 = vunpack.c.l.b16 %v606
    %v5132 = vunpack.c.h.b16 %v606
    %v5133 = vunpack.c.l.b16 %v607
    %v5134 = vunpack.c.h.b16 %v607
    %v5135 = vunpack.c.l.b16 %v608
    %v5136 = vunpack.c.h.b16 %v608
    %v5137 = vunpack.c.l.b16 %v609
    %v5138 = vunpack.c.h.b16 %v609
    %v5139 = vunpack.c.l.b16 %v610
    %v5140 = vunpack.c.h.b16 %v610
    %v5141 = vunpack.c.l.b16 %v611
    %v5142 = vunpack.c.h.b16 %v611
    %v5143 = vunpack.c.l.b16 %v612
    %v5144 = vunpack.c.h.b16 %v612
    %v5145 = vunpack.c.l.b16 %v613
    %v5146 = vunpack.c.h.b16 %v613
    %v5147 = vunpack.c.l.b16 %v614
    %v5148 = vunpack.c.h.b16 %v614
    %v5149 = vunpack.c.l.b16 %v615
    %v5150 = vunpack.c.h.b16 %v615
    %v5151 = vunpack.c.l.b16 %v616
    %v5152 = vunpack.c.h.b16 %v616
    %v5153 = vunpack.c.l.b16 %v617
    %v5154 = vunpack.c.h.b16 %v617
    %v5155 = vunpack.c.l.b16 %v618
    %v5156 = vunpack.c.h.b16 %v618
    %v5157 = vunpack.c.l.b16 %v619
    %v5158 = vunpack.c.h.b16 %v619
    %v5159 = vunpack.c.l.b16 %v620
    %v5160 = vunpack.c.h.b16 %v620
    %v5161 = vunpack.c.l.b16 %v621
    %v5162 = vunpack.c.h.b16 %v621
    %v5163 = vunpack.c.l.b16 %v622
    %v5164 = vunpack.c.h.b16 %v622
    %v5165 = vunpack.c.l.b16 %v623
    %v5166 = vunpack.c.h.b16 %v623
    %v5167 = vunpack.c.l.b16 %v624
    %v5168 = vunpack.c.h.b16 %v624
    %v5169 = vunpack.c.l.b16 %v625
    %v5170 = vunpack.c.h.b16 %v625
    %v5171 = vunpack.c.l.b16 %v626
    %v5172 = vunpack.c.h.b16 %v626
    %v5173 = vunpack.c.l.b16 %v627
    %v5174 = vunpack.c.h.b16 %v627
    %v5175 = vunpack.c.l.b16 %v628
    %v5176 = vunpack.c.h.b16 %v628
    %v5177 = vunpack.c.l.b16 %v629
    %v5178 = vunpack.c.h.b16 %v629
    %v5179 = vunpack.c.l.b16 %v630
    %v5180 = vunpack.c.h.b16 %v630
    %v5181 = vunpack.c.l.b16 %v631
    %v5182 = vunpack.c.h.b16 %v631
    %v5183 = vunpack.c.l.b16 %v632
    %v5184 = vunpack.c.h.b16 %v632
    %v5185 = vunpack.c.l.b16 %v633
    %v5186 = vunpack.c.h.b16 %v633
    %v5187 = vunpack.c.l.b16 %v634
    %v5188 = vunpack.c.h.b16 %v634
    %v5189 = vunpack.c.l.b16 %v635
    %v5190 = vunpack.c.h.b16 %v635
    %v5191 = vunpack.c.l.b16 %v636
    %v5192 = vunpack.c.h.b16 %v636
    %v5193 = vunpack.c.l.b16 %v637
    %v5194 = vunpack.c.h.b16 %v637
    %v5195 = vunpack.c.l.b16 %v638
    %v5196 = vunpack.c.h.b16 %v638
    %v5197 = vunpack.c.l.b16 %v639
    %v5198 = vunpack.c.h.b16 %v639
    %v5199 = vunpack.c.l.b16 %v640
    %v5200 = vunpack.c.h.b16 %v640
    %v5201 = vunpack.c.l.b16 %v641
    %v5202 = vunpack.c.h.b16 %v641
    %v5203 = vunpack.c.l.b16 %v642
    %v5204 = vunpack.c.h.b16 %v642
    %v5205 = vunpack.c.l.b16 %v643
    %v5206 = vunpack.c.h.b16 %v643
    %v5207 = vunpack.c.l.b16 %v644
    %v5208 = vunpack.c.h.b16 %v644
    %v5209 = vunpack.c.l.b16 %v645
    %v5210 = vunpack.c.h.b16 %v645
    %v5211 = vunpack.c.l.b16 %v646
    %v5212 = vunpack.c.h.b16 %v646
    %v5213 = vunpack.c.l.b16 %v647
    %v5214 = vunpack.c.h.b16 %v647
    %v5215 = vunpack.c.l.b16 %v648
    %v5216 = vunpack.c.h.b16 %v648
    %v5217 = vunpack.c.l.b16 %v649
    %v5218 = vunpack.c.h.b16 %v649
    %v5219 = vunpack.c.l.b16 %v650
    %v5220 = vunpack.c.h.b16 %v650
    %v5221 = vunpack.c.l.b16 %v651
    %v5222 = vunpack.c.h.b16 %v651
    %v5223 = vunpack.c.l.b16 %v652
    %v5224 = vunpack.c.h.b16 %v652
    %v5225 = vunpack.c.l.b16 %v653
    %v5226 = vunpack.c.h.b16 %v653
    %v5227 = vunpack.c.l.b16 %v654
    %v5228 = vunpack.c.h.b16 %v654
    %v5229 = vunpack.c.l.b16 %v655
    %v5230 = vunpack.c.h.b16 %v655
    %v5231 = vunpack.c.l.b16 %v656
    %v5232 = vunpack.c.h.b16 %v656
    %v5233 = vunpack.c.l.b16 %v657
    %v5234 = vunpack.c.h.b16 %v657
    %v5235 = vunpack.c.l.b16 %v658
    %v5236 = vunpack.c.h.b16 %v658
    %v5237 = vunpack.c.l.b16 %v659
    %v5238 = vunpack.c.h.b16 %v659
    %v5239 = vunpack.c.l.b16 %v660
    %v5240 = vunpack.c.h.b16 %v660
    %v5241 = vunpack.c.l.b16 %v661
    %v5242 = vunpack.c.h.b16 %v661
    %v5243 = vunpack.c.l.b16 %v662
    %v5244 = vunpack.c.h.b16 %v662
    %v5245 = vunpack.c.l.b16 %v663
    %v5246 = vunpack.c.h.b16 %v663
    %v5247 = vunpack.c.l.b16 %v664
    %v5248 = vunpack.c.h.b16 %v664
    %v5249 = vunpack.c.l.b16 %v665
    %v5250 = vunpack.c.h.b16 %v665
    %v5251 = vunpack.c.l.b16 %v666
    %v5252 = vunpack.c.h.b16 %v666
    %v5253 = vunpack.c.l.b16 %v667
    %v5254 = vunpack.c.h.b16 %v667
    %v5255 = vunpack.c.l.b16 %v668
    %v5256 = vunpack.c.h.b16 %v668
    %v5257 = vunpack.c.l.b16 %v669
    %v5258 = vunpack.c.h.b16 %v669
    %v5259 = vunpack.c.l.b16 %v670
    %v5260 = vunpack.c.h.b16 %v670
    %v5261 = vunpack.c.l.b16 %v671
    %v5262 = vunpack.c.h.b16 %v671
    %v5263 = vunpack.c.l.b16 %v672
    %v5264 = vunpack.c.h.b16 %v672
    %v5265 = vunpack.c.l.b16 %v673
    %v5266 = vunpack.c.h.b16 %v673
    %v5267 = vunpack.c.l.b16 %v674
    %v5268 = vunpack.c.h.b16 %v674
    %v5269 = vunpack.c.l.b16 %v675
    %v5270 = vunpack.c.h.b16 %v675
    %v5271 = vunpack.c.l.b16 %v676
    %v5272 = vunpack.c.h.b16 %v676
    %v5273 = vunpack.c.l.b16 %v677
    %v5274 = vunpack.c.h.b16 %v677
    %v5275 = vunpack.c.l.b16 %v678
    %v5276 = vunpack.c.h.b16 %v678
    %v5277 = vunpack.c.l.b16 %v679
    %v5278 = vunpack.c.h.b16 %v679
    %v5279 = vunpack.c.l.b16 %v680
    %v5280 = vunpack.c.h.b16 %v680
    %v5281 = vunpack.c.l.b16 %v681
    %v5282 = vunpack.c.h.b16 %v681
    %v5283 = vunpack.c.l.b16 %v682
    %v5284 = vunpack.c.h.b16 %v682
    %v5285 = vunpack.c.l.b16 %v683
    %v5286 = vunpack.c.h.b16 %v683
    %v5287 = vunpack.c.l.b16 %v684
    %v5288 = vunpack.c.h.b16 %v684
    %v5289 = vunpack.c.l.b16 %v685
    %v5290 = vunpack.c.h.b16 %v685
    %v5291 = vunpack.c.l.b16 %v686
    %v5292 = vunpack.c.h.b16 %v686
    %v5293 = vunpack.c.l.b16 %v687
    %v5294 = vunpack.c.h.b16 %v687
    %v5295 = vunpack.c.l.b16 %v688
    %v5296 = vunpack.c.h.b16 %v688
    %v5297 = vunpack.c.l.b16 %v689
    %v5298 = vunpack.c.h.b16 %v689
    %v5299 = vunpack.c.l.b16 %v690
    %v5300 = vunpack.c.h.b16 %v690
    %v5301 = vunpack.c.l.b16 %v691
    %v5302 = vunpack.c.h.b16 %v691
    %v5303 = vunpack.c.l.b16 %v692
    %v5304 = vunpack.c.h.b16 %v692
    %v5305 = vunpack.c.l.b16 %v693
    %v5306 = vunpack.c.h.b16 %v693
    %v5307 = vunpack.c.l.b16 %v694
    %v5308 = vunpack.c.h.b16 %v694
    %v5309 = vunpack.c.l.b16 %v695
    %v5310 = vunpack.c.h.b16 %v695
    %v5311 = vunpack.c.l.b16 %v696
    %v5312 = vunpack.c.h.b16 %v696
    %v5313 = vunpack.c.l.b16 %v697
    %v5314 = vunpack.c.h.b16 %v697
    %v5315 = vunpack.c.l.b16 %v698
    %v5316 = vunpack.c.h.b16 %v698
    %v5317 = vunpack.c.l.b16 %v699
    %v5318 = vunpack.c.h.b16 %v699
    %v5319 = vunpack.c.l.b16 %v700
    %v5320 = vunpack.c.h.b16 %v700
    %v5321 = vunpack.c.l.b16 %v701
    %v5322 = vunpack.c.h.b16 %v701
    %v5323 = vunpack.c.l.b16 %v702
    %v5324 = vunpack.c.h.b16 %v702
    %v5325 = vunpack.c.l.b16 %v703
    %v5326 = vunpack.c.h.b16 %v703
    %v5327 = vunpack.c.l.b16 %v704
    %v5328 = vunpack.c.h.b16 %v704
    %v5329 = vunpack.c.l.b16 %v705
    %v5330 = vunpack.c.h.b16 %v705
    %v5331 = vunpack.c.l.b16 %v706
    %v5332 = vunpack.c.h.b16 %v706
    %v5333 = vunpack.c.l.b16 %v707
    %v5334 = vunpack.c.h.b16 %v707
    %v5335 = vunpack.c.l.b16 %v708
    %v5336 = vunpack.c.h.b16 %v708
    %v5337 = vunpack.c.l.b16 %v709
    %v5338 = vunpack.c.h.b16 %v709
    %v5339 = vunpack.c.l.b16 %v710
    %v5340 = vunpack.c.h.b16 %v710
    %v5341 = vunpack.c.l.b16 %v711
    %v5342 = vunpack.c.h.b16 %v711
    %v5343 = vunpack.c.l.b16 %v712
    %v5344 = vunpack.c.h.b16 %v712
    %v5345 = vunpack.c.l.b16 %v713
    %v5346 = vunpack.c.h.b16 %v713
    %v5347 = vunpack.c.l.b16 %v714
    %v5348 = vunpack.c.h.b16 %v714
    %v5349 = vunpack.c.l.b16 %v715
    %v5350 = vunpack.c.h.b16 %v715
    %v5351 = vunpack.c.l.b16 %v716
    %v5352 = vunpack.c.h.b16 %v716
    %v5353 = vunpack.c.l.b16 %v717
    %v5354 = vunpack.c.h.b16 %v717
    %v5355 = vunpack.c.l.b16 %v718
    %v5356 = vunpack.c.h.b16 %v718
    %v5357 = vunpack.c.l.b16 %v719
    %v5358 = vunpack.c.h.b16 %v719
    %v5359 = vunpack.c.l.b16 %v720
    %v5360 = vunpack.c.h.b16 %v720
    %v5361 = vunpack.c.l.b16 %v721
    %v5362 = vunpack.c.h.b16 %v721
    %v5363 = vunpack.c.l.b16 %v722
    %v5364 = vunpack.c.h.b16 %v722
    %v5365 = vunpack.c.l.b16 %v723
    %v5366 = vunpack.c.h.b16 %v723
    %v5367 = vunpack.c.l.b16 %v724
    %v5368 = vunpack.c.h.b16 %v724
    %v5369 = vunpack.c.l.b16 %v725
    %v5370 = vunpack.c.h.b16 %v725
    %v5371 = vunpack.c.l.b16 %v726
    %v5372 = vunpack.c.h.b16 %v726
    %v5373 = vunpack.c.l.b16 %v727
    %v5374 = vunpack.c.h.b16 %v727
    %v5375 = vunpack.c.l.b16 %v728
    %v5376 = vunpack.c.h.b16 %v728
    %v5377 = vunpack.c.l.b16 %v729
    %v5378 = vunpack.c.h.b16 %v729
    %v5379 = vunpack.c.l.b16 %v730
    %v5380 = vunpack.c.h.b16 %v730
    %v5381 = vunpack.c.l.b16 %v731
    %v5382 = vunpack.c.h.b16 %v731
    %v5383 = vunpack.c.l.b16 %v732
    %v5384 = vunpack.c.h.b16 %v732
    %v5385 = vunpack.c.l.b16 %v733
    %v5386 = vunpack.c.h.b16 %v733
    %v5387 = vunpack.c.l.b16 %v734
    %v5388 = vunpack.c.h.b16 %v734
    %v5389 = vunpack.c.l.b16 %v735
    %v5390 = vunpack.c.h.b16 %v735
    %v5391 = vunpack.c.l.b16 %v736
    %v5392 = vunpack.c.h.b16 %v736
    %v5393 = vunpack.c.l.b16 %v737
    %v5394 = vunpack.c.h.b16 %v737
    %v5395 = vunpack.c.l.b16 %v738
    %v5396 = vunpack.c.h.b16 %v738
    %v5397 = vunpack.c.l.b16 %v739
    %v5398 = vunpack.c.h.b16 %v739
    %v5399 = vunpack.c.l.b16 %v740
    %v5400 = vunpack.c.h.b16 %v740
    %v5401 = vunpack.c.l.b16 %v741
    %v5402 = vunpack.c.h.b16 %v741
    %v5403 = vunpack.c.l.b16 %v742
    %v5404 = vunpack.c.h.b16 %v742
    %v5405 = vunpack.c.l.b16 %v743
    %v5406 = vunpack.c.h.b16 %v743
    %v5407 = vunpack.c.l.b16 %v744
    %v5408 = vunpack.c.h.b16 %v744
    %v5409 = vunpack.c.l.b16 %v745
    %v5410 = vunpack.c.h.b16 %v745
    %v5411 = vunpack.c.l.b16 %v746
    %v5412 = vunpack.c.h.b16 %v746
    %v5413 = vunpack.c.l.b16 %v747
    %v5414 = vunpack.c.h.b16 %v747
    %v5415 = vunpack.c.l.b16 %v748
    %v5416 = vunpack.c.h.b16 %v748
    %v5417 = vunpack.c.l.b16 %v749
    %v5418 = vunpack.c.h.b16 %v749
    %v5419 = vunpack.c.l.b16 %v750
    %v5420 = vunpack.c.h.b16 %v750
    %v5421 = vunpack.c.l.b16 %v751
    %v5422 = vunpack.c.h.b16 %v751
    %v5423 = vunpack.c.l.b16 %v752
    %v5424 = vunpack.c.h.b16 %v752
    %v5425 = vunpack.c.l.b16 %v753
    %v5426 = vunpack.c.h.b16 %v753
    %v5427 = vunpack.c.l.b16 %v754
    %v5428 = vunpack.c.h.b16 %v754
    %v5429 = vunpack.c.l.b16 %v755
    %v5430 = vunpack.c.h.b16 %v755
    %v5431 = vunpack.c.l.b16 %v756
    %v5432 = vunpack.c.h.b16 %v756
    %v5433 = vunpack.c.l.b16 %v757
    %v5434 = vunpack.c.h.b16 %v757
    %v5435 = vunpack.c.l.b16 %v758
    %v5436 = vunpack.c.h.b16 %v758
    %v5437 = vunpack.c.l.b16 %v759
    %v5438 = vunpack.c.h.b16 %v759
    %v5439 = vunpack.c.l.b16 %v760
    %v5440 = vunpack.c.h.b16 %v760
    %v5441 = vunpack.c.l.b16 %v761
    %v5442 = vunpack.c.h.b16 %v761
    %v5443 = vunpack.c.l.b16 %v762
    %v5444 = vunpack.c.h.b16 %v762
    %v5445 = vunpack.c.l.b16 %v763
    %v5446 = vunpack.c.h.b16 %v763
    %v5447 = vunpack.c.l.b16 %v764
    %v5448 = vunpack.c.h.b16 %v764
    %v5449 = vunpack.c.l.b16 %v765
    %v5450 = vunpack.c.h.b16 %v765
    %v5451 = vunpack.c.l.b16 %v766
    %v5452 = vunpack.c.h.b16 %v766
    %v5453 = vunpack.c.l.b16 %v767
    %v5454 = vunpack.c.h.b16 %v767
    %v5455 = vunpack.c.l.b16 %v768
    %v5456 = vunpack.c.h.b16 %v768
    %v5457 = vunpack.c.l.b16 %v769
    %v5458 = vunpack.c.h.b16 %v769
    %v5459 = vunpack.c.l.b16 %v770
    %v5460 = vunpack.c.h.b16 %v770
    %v5461 = vunpack.c.l.b16 %v771
    %v5462 = vunpack.c.h.b16 %v771
    %v5463 = vunpack.c.l.b16 %v772
    %v5464 = vunpack.c.h.b16 %v772
    %v5465 = vunpack.c.l.b16 %v773
    %v5466 = vunpack.c.h.b16 %v773
    %v5467 = vunpack.c.l.b16 %v774
    %v5468 = vunpack.c.h.b16 %v774
    %v5469 = vunpack.c.l.b16 %v775
    %v5470 = vunpack.c.h.b16 %v775
    %v5471 = vunpack.c.l.b16 %v776
    %v5472 = vunpack.c.h.b16 %v776
    %v5473 = vunpack.c.l.b16 %v777
    %v5474 = vunpack.c.h.b16 %v777
    %v5475 = vunpack.c.l.b16 %v778
    %v5476 = vunpack.c.h.b16 %v778
    %v5477 = vunpack.c.l.b16 %v779
    %v5478 = vunpack.c.h.b16 %v779
    %v5479 = vunpack.c.l.b16 %v780
    %v5480 = vunpack.c.h.b16 %v780
    %v5481 = vunpack.c.l.b16 %v781
    %v5482 = vunpack.c.h.b16 %v781
    %v5483 = vunpack.c.l.b16 %v782
    %v5484 = vunpack.c.h.b16 %v782
    %v5485 = vunpack.c.l.b16 %v783
    %v5486 = vunpack.c.h.b16 %v783
    %v5487 = vunpack.c.l.b16 %v784
    %v5488 = vunpack.c.h.b16 %v784
    %v5489 = vunpack.c.l.b16 %v785
    %v5490 = vunpack.c.h.b16 %v785
    %v5491 = vunpack.c.l.b16 %v786
    %v5492 = vunpack.c.h.b16 %v786
    %v5493 = vunpack.c.l.b16 %v787
    %v5494 = vunpack.c.h.b16 %v787
    %v5495 = vunpack.c.l.b16 %v788
    %v5496 = vunpack.c.h.b16 %v788
    %v5497 = vunpack.c.l.b16 %v789
    %v5498 = vunpack.c.h.b16 %v789
    %v5499 = vunpack.c.l.b16 %v790
    %v5500 = vunpack.c.h.b16 %v790
    %v5501 = vunpack.c.l.b16 %v791
    %v5502 = vunpack.c.h.b16 %v791
    %v5503 = vunpack.c.l.b16 %v792
    %v5504 = vunpack.c.h.b16 %v792
    %v5505 = vunpack.c.l.b16 %v793
    %v5506 = vunpack.c.h.b16 %v793
    %v5507 = vunpack.c.l.b16 %v794
    %v5508 = vunpack.c.h.b16 %v794
    %v5509 = vunpack.c.l.b16 %v795
    %v5510 = vunpack.c.h.b16 %v795
    %v5511 = vunpack.c.l.b16 %v796
    %v5512 = vunpack.c.h.b16 %v796
    %v5513 = vunpack.c.l.b16 %v797
    %v5514 = vunpack.c.h.b16 %v797
    %v5515 = vunpack.c.l.b16 %v798
    %v5516 = vunpack.c.h.b16 %v798
    %v5517 = vunpack.c.l.b16 %v799
    %v5518 = vunpack.c.h.b16 %v799
    %v5519 = vunpack.c.l.b16 %v800
    %v5520 = vunpack.c.h.b16 %v800
    %v5521 = vunpack.c.l.b16 %v801
    %v5522 = vunpack.c.h.b16 %v801
    %v5523 = vunpack.c.l.b16 %v802
    %v5524 = vunpack.c.h.b16 %v802
    %v5525 = vunpack.c.l.b16 %v803
    %v5526 = vunpack.c.h.b16 %v803
    %v5527 = vunpack.c.l.b16 %v804
    %v5528 = vunpack.c.h.b16 %v804
    %v5529 = vunpack.c.l.b16 %v805
    %v5530 = vunpack.c.h.b16 %v805
    %v5531 = vunpack.c.l.b16 %v806
    %v5532 = vunpack.c.h.b16 %v806
    %v5533 = vunpack.c.l.b16 %v807
    %v5534 = vunpack.c.h.b16 %v807
    %v5535 = vunpack.c.l.b16 %v808
    %v5536 = vunpack.c.h.b16 %v808
    %v5537 = vunpack.c.l.b16 %v809
    %v5538 = vunpack.c.h.b16 %v809
    %v5539 = vunpack.c.l.b16 %v810
    %v5540 = vunpack.c.h.b16 %v810
    %v5541 = vunpack.c.l.b16 %v811
    %v5542 = vunpack.c.h.b16 %v811
    %v5543 = vunpack.c.l.b16 %v812
    %v5544 = vunpack.c.h.b16 %v812
    %v5545 = vunpack.c.l.b16 %v813
    %v5546 = vunpack.c.h.b16 %v813
    %v5547 = vunpack.c.l.b16 %v814
    %v5548 = vunpack.c.h.b16 %v814
    %v5549 = vunpack.c.l.b16 %v815
    %v5550 = vunpack.c.h.b16 %v815
    %v5551 = vunpack.c.l.b16 %v816
    %v5552 = vunpack.c.h.b16 %v816
    %v5553 = vunpack.c.l.b16 %v817
    %v5554 = vunpack.c.h.b16 %v817
    %v5555 = vunpack.c.l.b16 %v818
    %v5556 = vunpack.c.h.b16 %v818
    %v5557 = vunpack.c.l.b16 %v819
    %v5558 = vunpack.c.h.b16 %v819
    %v5559 = vunpack.c.l.b16 %v820
    %v5560 = vunpack.c.h.b16 %v820
    %v5561 = vunpack.c.l.b16 %v821
    %v5562 = vunpack.c.h.b16 %v821
    %v5563 = vunpack.c.l.b16 %v822
    %v5564 = vunpack.c.h.b16 %v822
    %v5565 = vunpack.c.l.b16 %v823
    %v5566 = vunpack.c.h.b16 %v823
    %v5567 = vunpack.c.l.b16 %v824
    %v5568 = vunpack.c.h.b16 %v824
    %v5569 = vunpack.c.l.b16 %v825
    %v5570 = vunpack.c.h.b16 %v825
    %v5571 = vunpack.c.l.b16 %v826
    %v5572 = vunpack.c.h.b16 %v826
    %v5573 = vunpack.c.l.b16 %v827
    %v5574 = vunpack.c.h.b16 %v827
    %v5575 = vunpack.c.l.b16 %v828
    %v5576 = vunpack.c.h.b16 %v828
    %v5577 = vunpack.c.l.b16 %v829
    %v5578 = vunpack.c.h.b16 %v829
    %v5579 = vunpack.c.l.b16 %v830
    %v5580 = vunpack.c.h.b16 %v830
    %v5581 = vunpack.c.l.b16 %v831
    %v5582 = vunpack.c.h.b16 %v831
    %v5583 = vunpack.c.l.b16 %v832
    %v5584 = vunpack.c.h.b16 %v832
    %v5585 = vunpack.c.l.b16 %v833
    %v5586 = vunpack.c.h.b16 %v833
    %v5587 = vunpack.c.l.b16 %v834
    %v5588 = vunpack.c.h.b16 %v834
    %v5589 = vunpack.c.l.b16 %v835
    %v5590 = vunpack.c.h.b16 %v835
    %v5591 = vunpack.c.l.b16 %v836
    %v5592 = vunpack.c.h.b16 %v836
    %v5593 = vunpack.c.l.b16 %v837
    %v5594 = vunpack.c.h.b16 %v837
    %v5595 = vunpack.c.l.b16 %v838
    %v5596 = vunpack.c.h.b16 %v838
    %v5597 = vunpack.c.l.b16 %v839
    %v5598 = vunpack.c.h.b16 %v839
    %v5599 = vunpack.c.l.b16 %v840
    %v5600 = vunpack.c.h.b16 %v840
    %v5601 = vpack.c.b16 %v5097, %v5089
    %v5602 = vpack.c.b16 %v5098, %v5090
    %v5603 = vpack.c.b16 %v5099, %v5091
    %v5604 = vpack.c.b16 %v5100, %v5092
    %v5605 = vpack.c.b16 %v5101, %v5093
    %v5606 = vpack.c.b16 %v5102, %v5094
    %v5607 = vpack.c.b16 %v5103, %v5095
    %v5608 = vpack.c.b16 %v5104, %v5096
    %v5609 = vpack.c.b16 %v5113, %v5105
    %v5610 = vpack.c.b16 %v5114, %v5106
    %v5611 = vpack.c.b16 %v5115, %v5107
    %v5612 = vpack.c.b16 %v5116, %v5108
    %v5613 = vpack.c.b16 %v5117, %v5109
    %v5614 = vpack.c.b16 %v5118, %v5110
    %v5615 = vpack.c.b16 %v5119, %v5111
    %v5616 = vpack.c.b16 %v5120, %v5112
    %v5617 = vpack.c.b16 %v5129, %v5121
    %v5618 = vpack.c.b16 %v5130, %v5122
    %v5619 = vpack.c.b16 %v5131, %v5123
    %v5620 = vpack.c.b16 %v5132, %v5124
    %v5621 = vpack.c.b16 %v5133, %v5125
    %v5622 = vpack.c.b16 %v5134, %v5126
    %v5623 = vpack.c.b16 %v5135, %v5127
    %v5624 = vpack.c.b16 %v5136, %v5128
    %v5625 = vpack.c.b16 %v5145, %v5137
    %v5626 = vpack.c.b16 %v5146, %v5138
    %v5627 = vpack.c.b16 %v5147, %v5139
    %v5628 = vpack.c.b16 %v5148, %v5140
    %v5629 = vpack.c.b16 %v5149, %v5141
    %v5630 = vpack.c.b16 %v5150, %v5142
    %v5631 = vpack.c.b16 %v5151, %v5143
    %v5632 = vpack.c.b16 %v5152, %v5144
    %v5633 = vpack.c.b16 %v5161, %v5153
    %v5634 = vpack.c.b16 %v5162, %v5154
    %v5635 = vpack.c.b16 %v5163, %v5155
    %v5636 = vpack.c.b16 %v5164, %v5156
    %v5637 = vpack.c.b16 %v5165, %v5157
    %v5638 = vpack.c.b16 %v5166, %v5158
    %v5639 = vpack.c.b16 %v5167, %v5159
    %v5640 = vpack.c.b16 %v5168, %v5160
    %v5641 = vpack.c.b16 %v5177, %v5169
    %v5642 = vpack.c.b16 %v5178, %v5170
    %v5643 = vpack.c.b16 %v5179, %v5171
    %v5644 = vpack.c.b16 %v5180, %v5172
    %v5645 = vpack.c.b16 %v5181, %v5173
    %v5646 = vpack.c.b16 %v5182, %v5174
    %v5647 = vpack.c.b16 %v5183, %v5175
    %v5648 = vpack.c.b16 %v5184, %v5176
    %v5649 = vpack.c.b16 %v5193, %v5185
    %v5650 = vpack.c.b16 %v5194, %v5186
    %v5651 = vpack.c.b16 %v5195, %v5187
    %v5652 = vpack.c.b16 %v5196, %v5188
    %v5653 = vpack.c.b16 %v5197, %v5189
    %v5654 = vpack.c.b16 %v5198, %v5190
    %v5655 = vpack.c.b16 %v5199, %v5191
    %v5656 = vpack.c.b16 %v5200, %v5192
    %v5657 = vpack.c.b16 %v5209, %v5201
    %v5658 = vpack.c.b16 %v5210, %v5202
    %v5659 = vpack.c.b16 %v5211, %v5203
    %v5660 = vpack.c.b16 %v5212, %v5204
    %v5661 = vpack.c.b16 %v5213, %v5205
    %v5662 = vpack.c.b16 %v5214, %v5206
    %v5663 = vpack.c.b16 %v5215, %v5207
    %v5664 = vpack.c.b16 %v5216, %v5208
    %v5665 = vpack.c.b16 %v5225, %v5217
    %v5666 = vpack.c.b16 %v5226, %v5218
    %v5667 = vpack.c.b16 %v5227, %v5219
    %v5668 = vpack.c.b16 %v5228, %v5220
    %v5669 = vpack.c.b16 %v5229, %v5221
    %v5670 = vpack.c.b16 %v5230, %v5222
    %v5671 = vpack.c.b16 %v5231, %v5223
    %v5672 = vpack.c.b16 %v5232, %v5224
    %v5673 = vpack.c.b16 %v5241, %v5233
    %v5674 = vpack.c.b16 %v5242, %v5234
    %v5675 = vpack.c.b16 %v5243, %v5235
    %v5676 = vpack.c.b16 %v5244, %v5236
    %v5677 = vpack.c.b16 %v5245, %v5237
    %v5678 = vpack.c.b16 %v5246, %v5238
    %v5679 = vpack.c.b16 %v5247, %v5239
    %v5680 = vpack.c.b16 %v5248, %v5240
    %v5681 = vpack.c.b16 %v5257, %v5249
    %v5682 = vpack.c.b16 %v5258, %v5250
    %v5683 = vpack.c.b16 %v5259, %v5251
    %v5684 = vpack.c.b16 %v5260, %v5252
    %v5685 = vpack.c.b16 %v5261, %v5253
    %v5686 = vpack.c.b16 %v5262, %v5254
    %v5687 = vpack.c.b16 %v5263, %v5255
    %v5688 = vpack.c.b16 %v5264, %v5256
    %v5689 = vpack.c.b16 %v5273, %v5265
    %v5690 = vpack.c.b16 %v5274, %v5266
    %v5691 = vpack.c.b16 %v5275, %v5267
    %v5692 = vpack.c.b16 %v5276, %v5268
    %v5693 = vpack.c.b16 %v5277, %v5269
    %v5694 = vpack.c.b16 %v5278, %v5270
    %v5695 = vpack.c.b16 %v5279, %v5271
    %v5696 = vpack.c.b16 %v5280, %v5272
    %v5697 = vpack.c.b16 %v5289, %v5281
    %v5698 = vpack.c.b16 %v5290, %v5282
    %v5699 = vpack.c.b16 %v5291, %v5283
    %v5700 = vpack.c.b16 %v5292, %v5284
    %v5701 = vpack.c.b16 %v5293, %v5285
    %v5702 = vpack.c.b16 %v5294, %v5286
    %v5703 = vpack.c.b16 %v5295, %v5287
    %v5704 = vpack.c.b16 %v5296, %v5288
    %v5705 = vpack.c.b16 %v5305, %v5297
    %v5706 = vpack.c.b16 %v5306, %v5298
    %v5707 = vpack.c.b16 %v5307, %v5299
    %v5708 = vpack.c.b16 %v5308, %v5300
    %v5709 = vpack.c.b16 %v5309, %v5301
    %v5710 = vpack.c.b16 %v5310, %v5302
    %v5711 = vpack.c.b16 %v5311, %v5303
    %v5712 = vpack.c.b16 %v5312, %v5304
    %v5713 = vpack.c.b16 %v5321, %v5313
    %v5714 = vpack.c.b16 %v5322, %v5314
    %v5715 = vpack.c.b16 %v5323, %v5315
    %v5716 = vpack.c.b16 %v5324, %v5316
    %v5717 = vpack.c.b16 %v5325, %v5317
    %v5718 = vpack.c.b16 %v5326, %v5318
    %v5719 = vpack.c.b16 %v5327, %v5319
    %v5720 = vpack.c.b16 %v5328, %v5320
    %v5721 = vpack.c.b16 %v5337, %v5329
    %v5722 = vpack.c.b16 %v5338, %v5330
    %v5723 = vpack.c.b16 %v5339, %v5331
    %v5724 = vpack.c.b16 %v5340, %v5332
    %v5725 = vpack.c.b16 %v5341, %v5333
    %v5726 = vpack.c.b16 %v5342, %v5334
    %v5727 = vpack.c.b16 %v5343, %v5335
    %v5728 = vpack.c.b16 %v5344, %v5336
    %v5729 = vpack.c.b16 %v5353, %v5345
    %v5730 = vpack.c.b16 %v5354, %v5346
    %v5731 = vpack.c.b16 %v5355, %v5347
    %v5732 = vpack.c.b16 %v5356, %v5348
    %v5733 = vpack.c.b16 %v5357, %v5349
    %v5734 = vpack.c.b16 %v5358, %v5350
    %v5735 = vpack.c.b16 %v5359, %v5351
    %v5736 = vpack.c.b16 %v5360, %v5352
    %v5737 = vpack.c.b16 %v5369, %v5361
    %v5738 = vpack.c.b16 %v5370, %v5362
    %v5739 = vpack.c.b16 %v5371, %v5363
    %v5740 = vpack.c.b16 %v5372, %v5364
    %v5741 = vpack.c.b16 %v5373, %v5365
    %v5742 = vpack.c.b16 %v5374, %v5366
    %v5743 = vpack.c.b16 %v5375, %v5367
    %v5744 = vpack.c.b16 %v5376, %v5368
    %v5745 = vpack.c.b16 %v5385, %v5377
    %v5746 = vpack.c.b16 %v5386, %v5378
    %v5747 = vpack.c.b16 %v5387, %v5379
    %v5748 = vpack.c.b16 %v5388, %v5380
    %v5749 = vpack.c.b16 %v5389, %v5381
    %v5750 = vpack.c.b16 %v5390, %v5382
    %v5751 = vpack.c.b16 %v5391, %v5383
    %v5752 = vpack.c.b16 %v5392, %v5384
    %v5753 = vpack.c.b16 %v5401, %v5393
    %v5754 = vpack.c.b16 %v5402, %v5394
    %v5755 = vpack.c.b16 %v5403, %v5395
    %v5756 = vpack.c.b16 %v5404, %v5396
    %v5757 = vpack.c.b16 %v5405, %v5397
    %v5758 = vpack.c.b16 %v5406, %v5398
    %v5759 = vpack.c.b16 %v5407, %v5399
    %v5760 = vpack.c.b16 %v5408, %v5400
    %v5761 = vpack.c.b16 %v5417, %v5409
    %v5762 = vpack.c.b16 %v5418, %v5410
    %v5763 = vpack.c.b16 %v5419, %v5411
    %v5764 = vpack.c.b16 %v5420, %v5412
    %v5765 = vpack.c.b16 %v5421, %v5413
    %v5766 = vpack.c.b16 %v5422, %v5414
    %v5767 = vpack.c.b16 %v5423, %v5415
    %v5768 = vpack.c.b16 %v5424, %v5416
    %v5769 = vpack.c.b16 %v5433, %v5425
    %v5770 = vpack.c.b16 %v5434, %v5426
    %v5771 = vpack.c.b16 %v5435, %v5427
    %v5772 = vpack.c.b16 %v5436, %v5428
    %v5773 = vpack.c.b16 %v5437, %v5429
    %v5774 = vpack.c.b16 %v5438, %v5430
    %v5775 = vpack.c.b16 %v5439, %v5431
    %v5776 = vpack.c.b16 %v5440, %v5432
    %v5777 = vpack.c.b16 %v5449, %v5441
    %v5778 = vpack.c.b16 %v5450, %v5442
    %v5779 = vpack.c.b16 %v5451, %v5443
    %v5780 = vpack.c.b16 %v5452, %v5444
    %v5781 = vpack.c.b16 %v5453, %v5445
    %v5782 = vpack.c.b16 %v5454, %v5446
    %v5783 = vpack.c.b16 %v5455, %v5447
    %v5784 = vpack.c.b16 %v5456, %v5448
    %v5785 = vpack.c.b16 %v5465, %v5457
    %v5786 = vpack.c.b16 %v5466, %v5458
    %v5787 = vpack.c.b16 %v5467, %v5459
    %v5788 = vpack.c.b16 %v5468, %v5460
    %v5789 = vpack.c.b16 %v5469, %v5461
    %v5790 = vpack.c.b16 %v5470, %v5462
    %v5791 = vpack.c.b16 %v5471, %v5463
    %v5792 = vpack.c.b16 %v5472, %v5464
    %v5793 = vpack.c.b16 %v5481, %v5473
    %v5794 = vpack.c.b16 %v5482, %v5474
    %v5795 = vpack.c.b16 %v5483, %v5475
    %v5796 = vpack.c.b16 %v5484, %v5476
    %v5797 = vpack.c.b16 %v5485, %v5477
    %v5798 = vpack.c.b16 %v5486, %v5478
    %v5799 = vpack.c.b16 %v5487, %v5479
    %v5800 = vpack.c.b16 %v5488, %v5480
    %v5801 = vpack.c.b16 %v5497, %v5489
    %v5802 = vpack.c.b16 %v5498, %v5490
    %v5803 = vpack.c.b16 %v5499, %v5491
    %v5804 = vpack.c.b16 %v5500, %v5492
    %v5805 = vpack.c.b16 %v5501, %v5493
    %v5806 = vpack.c.b16 %v5502, %v5494
    %v5807 = vpack.c.b16 %v5503, %v5495
    %v5808 = vpack.c.b16 %v5504, %v5496
    %v5809 = vpack.c.b16 %v5513, %v5505
    %v5810 = vpack.c.b16 %v5514, %v5506
    %v5811 = vpack.c.b16 %v5515, %v5507
    %v5812 = vpack.c.b16 %v5516, %v5508
    %v5813 = vpack.c.b16 %v5517, %v5509
    %v5814 = vpack.c.b16 %v5518, %v5510
    %v5815 = vpack.c.b16 %v5519, %v5511
    %v5816 = vpack.c.b16 %v5520, %v5512
    %v5817 = vpack.c.b16 %v5529, %v5521
    %v5818 = vpack.c.b16 %v5530, %v5522
    %v5819 = vpack.c.b16 %v5531, %v5523
    %v5820 = vpack.c.b16 %v5532, %v5524
    %v5821 = vpack.c.b16 %v5533, %v5525
    %v5822 = vpack.c.b16 %v5534, %v5526
    %v5823 = vpack.c.b16 %v5535, %v5527
    %v5824 = vpack.c.b16 %v5536, %v5528
    %v5825 = vpack.c.b16 %v5545, %v5537
    %v5826 = vpack.c.b16 %v5546, %v5538
    %v5827 = vpack.c.b16 %v5547, %v5539
    %v5828 = vpack.c.b16 %v5548, %v5540
    %v5829 = vpack.c.b16 %v5549, %v5541
    %v5830 = vpack.c.b16 %v5550, %v5542
    %v5831 = vpack.c.b16 %v5551, %v5543
    %v5832 = vpack.c.b16 %v5552, %v5544
    %v5833 = vpack.c.b16 %v5561, %v5553
    %v5834 = vpack.c.b16 %v5562, %v5554
    %v5835 = vpack.c.b16 %v5563, %v5555
    %v5836 = vpack.c.b16 %v5564, %v5556
    %v5837 = vpack.c.b16 %v5565, %v5557
    %v5838 = vpack.c.b16 %v5566, %v5558
    %v5839 = vpack.c.b16 %v5567, %v5559
    %v5840 = vpack.c.b16 %v5568, %v5560
    %v5841 = vpack.c.b16 %v5577, %v5569
    %v5842 = vpack.c.b16 %v5578, %v5570
    %v5843 = vpack.c.b16 %v5579, %v5571
    %v5844 = vpack.c.b16 %v5580, %v5572
    %v5845 = vpack.c.b16 %v5581, %v5573
    %v5846 = vpack.c.b16 %v5582, %v5574
    %v5847 = vpack.c.b16 %v5583, %v5575
    %v5848 = vpack.c.b16 %v5584, %v5576
    %v5849 = vpack.c.b16 %v5593, %v5585
    %v5850 = vpack.c.b16 %v5594, %v5586
    %v5851 = vpack.c.b16 %v5595, %v5587
    %v5852 = vpack.c.b16 %v5596, %v5588
    %v5853 = vpack.c.b16 %v5597, %v5589
    %v5854 = vpack.c.b16 %v5598, %v5590
    %v5855 = vpack.c.b16 %v5599, %v5591
    %v5856 = vpack.c.b16 %v5600, %v5592
    %6113 = vmatprep.subr.bf16.mxu0 %v5658
    %6114 = vmatpush1.bf16.msra.mxu0 %v5657
    %6115 = vmatprep.subr.bf16.mxu0 %v5650
    %6116 = vmatpush1.bf16.msra.mxu0 %v5649
    %6117 = vmatprep.subr.bf16.mxu0 %v5642
    %6118 = vmatpush1.bf16.msra.mxu0 %v5641
    %6119 = vmatprep.subr.bf16.mxu0 %v5634
    %6120 = vmatpush1.bf16.msra.mxu0 %v5633
    %6121 = vmatprep.subr.bf16.mxu0 %v5626
    %6122 = vmatpush1.bf16.msra.mxu0 %v5625
    %6123 = vmatprep.subr.bf16.mxu0 %v5618
    %6124 = vmatpush1.bf16.msra.mxu0 %v5617
    %6125 = vmatprep.subr.bf16.mxu0 %v5610
    %6126 = vmatpush1.bf16.msra.mxu0 %v5609
    %6127 = vmatprep.subr.bf16.mxu0 %v5602
    %6128 = vmatpush1.bf16.msra.mxu0 %v5601
    %6129 = vmatprep.subr.bf16.mxu0 %v5722
    %6130 = vmatpush2.bf16.msra.mxu0 %v5721
    %6131 = vmatprep.subr.bf16.mxu0 %v5714
    %6132 = vmatpush2.bf16.msra.mxu0 %v5713
    %6133 = vmatprep.subr.bf16.mxu0 %v5706
    %6134 = vmatpush2.bf16.msra.mxu0 %v5705
    %6135 = vmatprep.subr.bf16.mxu0 %v5698
    %6136 = vmatpush2.bf16.msra.mxu0 %v5697
    %6137 = vmatprep.subr.bf16.mxu0 %v5690
    %6138 = vmatpush2.bf16.msra.mxu0 %v5689
    %6139 = vmatprep.subr.bf16.mxu0 %v5682
    %6140 = vmatpush2.bf16.msra.mxu0 %v5681
    %6141 = vmatprep.subr.bf16.mxu0 %v5674
    %6142 = vmatpush2.bf16.msra.mxu0 %v5673
    %6143 = vmatprep.subr.bf16.mxu0 %v5666
    %6144 = vmatpush2.bf16.msra.mxu0 %v5665
    %6145 = vmatprep.mubr.bf16.mxu0 %v4785
    %6146 = vmatmul.mubr.bf16.gmra.mxu0 %v4784
    %v6147 = vpop.f32.mrf.mxu0
    %v6148 = vadd.f32 %v4796, %v6147
    %v6149 = vpop.f32.mrf.mxu0
    %v6150 = vadd.f32 %v4800, %v6149
    %v6151 = vpop.f32.mrf.mxu0
    %v6152 = vadd.f32 %v4796, %v6151
    %v6153 = vpop.f32.mrf.mxu0
    %v6154 = vadd.f32 %v4800, %v6153
    %6155 = vmatprep.mubr.bf16.mxu0 %v4789
    %6156 = vmatmul.mubr.bf16.gmra.mxu0 %v4788
    %v6157 = vpop.f32.mrf.mxu0
    %v6158 = vadd.f32 %v4796, %v6157
    %v6159 = vpop.f32.mrf.mxu0
    %v6160 = vadd.f32 %v4800, %v6159
    %v6161 = vpop.f32.mrf.mxu0
    %v6162 = vadd.f32 %v4796, %v6161
    %v6163 = vpop.f32.mrf.mxu0
    %v6164 = vadd.f32 %v4800, %v6163
    %6165 = vdwg.mxu0
    %6166 = vmatprep.subr.bf16.mxu0 %v5786
    %6167 = vmatpush1.bf16.msra.mxu0 %v5785
    %6168 = vmatprep.subr.bf16.mxu0 %v5778
    %6169 = vmatpush1.bf16.msra.mxu0 %v5777
    %6170 = vmatprep.subr.bf16.mxu0 %v5770
    %6171 = vmatpush1.bf16.msra.mxu0 %v5769
    %6172 = vmatprep.subr.bf16.mxu0 %v5762
    %6173 = vmatpush1.bf16.msra.mxu0 %v5761
    %6174 = vmatprep.subr.bf16.mxu0 %v5754
    %6175 = vmatpush1.bf16.msra.mxu0 %v5753
    %6176 = vmatprep.subr.bf16.mxu0 %v5746
    %6177 = vmatpush1.bf16.msra.mxu0 %v5745
    %6178 = vmatprep.subr.bf16.mxu0 %v5738
    %6179 = vmatpush1.bf16.msra.mxu0 %v5737
    %6180 = vmatprep.subr.bf16.mxu0 %v5730
    %6181 = vmatpush1.bf16.msra.mxu0 %v5729
    %6182 = vmatprep.subr.bf16.mxu0 %v5850
    %6183 = vmatpush2.bf16.msra.mxu0 %v5849
    %6184 = vmatprep.subr.bf16.mxu0 %v5842
    %6185 = vmatpush2.bf16.msra.mxu0 %v5841
    %6186 = vmatprep.subr.bf16.mxu0 %v5834
    %6187 = vmatpush2.bf16.msra.mxu0 %v5833
    %6188 = vmatprep.subr.bf16.mxu0 %v5826
    %6189 = vmatpush2.bf16.msra.mxu0 %v5825
    %6190 = vmatprep.subr.bf16.mxu0 %v5818
    %6191 = vmatpush2.bf16.msra.mxu0 %v5817
    %6192 = vmatprep.subr.bf16.mxu0 %v5810
    %6193 = vmatpush2.bf16.msra.mxu0 %v5809
    %6194 = vmatprep.subr.bf16.mxu0 %v5802
    %6195 = vmatpush2.bf16.msra.mxu0 %v5801
    %6196 = vmatprep.subr.bf16.mxu0 %v5794
    %6197 = vmatpush2.bf16.msra.mxu0 %v5793
    %6198 = vmatprep.mubr.bf16.mxu0 %v4787
    %6199 = vmatmul.mubr.bf16.gmra.mxu0 %v4786
    %v6200 = vpop.f32.mrf.mxu0
    %v6201 = vadd.f32 %v6148, %v6200
    %v6202 = vpop.f32.mrf.mxu0
    %v6203 = vadd.f32 %v6150, %v6202
    %v6204 = vpop.f32.mrf.mxu0
    %v6205 = vadd.f32 %v6152, %v6204
    %v6206 = vpop.f32.mrf.mxu0
    %v6207 = vadd.f32 %v6154, %v6206
    %6208 = vmatprep.mubr.bf16.mxu0 %v4791
    %6209 = vmatmul.mubr.bf16.gmra.mxu0 %v4790
    %v6210 = vpop.f32.mrf.mxu0
    %v6211 = vadd.f32 %v6158, %v6210
    %v6212 = vpop.f32.mrf.mxu0
    %v6213 = vadd.f32 %v6160, %v6212
    %v6214 = vpop.f32.mrf.mxu0
    %v6215 = vadd.f32 %v6162, %v6214
    %v6216 = vpop.f32.mrf.mxu0
    %v6217 = vadd.f32 %v6164, %v6216
    %6218 = vdwg.mxu0
    %6219 = vmatprep.subr.bf16.mxu0 %v5660
    %6220 = vmatpush1.bf16.msra.mxu0 %v5659
    %6221 = vmatprep.subr.bf16.mxu0 %v5652
    %6222 = vmatpush1.bf16.msra.mxu0 %v5651
    %6223 = vmatprep.subr.bf16.mxu0 %v5644
    %6224 = vmatpush1.bf16.msra.mxu0 %v5643
    %6225 = vmatprep.subr.bf16.mxu0 %v5636
    %6226 = vmatpush1.bf16.msra.mxu0 %v5635
    %6227 = vmatprep.subr.bf16.mxu0 %v5628
    %6228 = vmatpush1.bf16.msra.mxu0 %v5627
    %6229 = vmatprep.subr.bf16.mxu0 %v5620
    %6230 = vmatpush1.bf16.msra.mxu0 %v5619
    %6231 = vmatprep.subr.bf16.mxu0 %v5612
    %6232 = vmatpush1.bf16.msra.mxu0 %v5611
    %6233 = vmatprep.subr.bf16.mxu0 %v5604
    %6234 = vmatpush1.bf16.msra.mxu0 %v5603
    %6235 = vmatprep.subr.bf16.mxu0 %v5724
    %6236 = vmatpush2.bf16.msra.mxu0 %v5723
    %6237 = vmatprep.subr.bf16.mxu0 %v5716
    %6238 = vmatpush2.bf16.msra.mxu0 %v5715
    %6239 = vmatprep.subr.bf16.mxu0 %v5708
    %6240 = vmatpush2.bf16.msra.mxu0 %v5707
    %6241 = vmatprep.subr.bf16.mxu0 %v5700
    %6242 = vmatpush2.bf16.msra.mxu0 %v5699
    %6243 = vmatprep.subr.bf16.mxu0 %v5692
    %6244 = vmatpush2.bf16.msra.mxu0 %v5691
    %6245 = vmatprep.subr.bf16.mxu0 %v5684
    %6246 = vmatpush2.bf16.msra.mxu0 %v5683
    %6247 = vmatprep.subr.bf16.mxu0 %v5676
    %6248 = vmatpush2.bf16.msra.mxu0 %v5675
    %6249 = vmatprep.subr.bf16.mxu0 %v5668
    %6250 = vmatpush2.bf16.msra.mxu0 %v5667
    %6251 = vmatprep.mubr.bf16.mxu0 %v4785
    %6252 = vmatmul.mubr.bf16.gmra.mxu0 %v4784
    %v6253 = vpop.f32.mrf.mxu0
    %v6254 = vadd.f32 %v4804, %v6253
    %v6255 = vpop.f32.mrf.mxu0
    %v6256 = vadd.f32 %v4808, %v6255
    %v6257 = vpop.f32.mrf.mxu0
    %v6258 = vadd.f32 %v4804, %v6257
    %v6259 = vpop.f32.mrf.mxu0
    %v6260 = vadd.f32 %v4808, %v6259
    %6261 = vmatprep.mubr.bf16.mxu0 %v4789
    %6262 = vmatmul.mubr.bf16.gmra.mxu0 %v4788
    %v6263 = vpop.f32.mrf.mxu0
    %v6264 = vadd.f32 %v4804, %v6263
    %v6265 = vpop.f32.mrf.mxu0
    %v6266 = vadd.f32 %v4808, %v6265
    %v6267 = vpop.f32.mrf.mxu0
    %v6268 = vadd.f32 %v4804, %v6267
    %v6269 = vpop.f32.mrf.mxu0
    %v6270 = vadd.f32 %v4808, %v6269
    %6271 = vdwg.mxu0
    %6272 = vmatprep.subr.bf16.mxu0 %v5788
    %6273 = vmatpush1.bf16.msra.mxu0 %v5787
    %6274 = vmatprep.subr.bf16.mxu0 %v5780
    %6275 = vmatpush1.bf16.msra.mxu0 %v5779
    %6276 = vmatprep.subr.bf16.mxu0 %v5772
    %6277 = vmatpush1.bf16.msra.mxu0 %v5771
    %6278 = vmatprep.subr.bf16.mxu0 %v5764
    %6279 = vmatpush1.bf16.msra.mxu0 %v5763
    %6280 = vmatprep.subr.bf16.mxu0 %v5756
    %6281 = vmatpush1.bf16.msra.mxu0 %v5755
    %6282 = vmatprep.subr.bf16.mxu0 %v5748
    %6283 = vmatpush1.bf16.msra.mxu0 %v5747
    %6284 = vmatprep.subr.bf16.mxu0 %v5740
    %6285 = vmatpush1.bf16.msra.mxu0 %v5739
    %6286 = vmatprep.subr.bf16.mxu0 %v5732
    %6287 = vmatpush1.bf16.msra.mxu0 %v5731
    %6288 = vmatprep.subr.bf16.mxu0 %v5852
    %6289 = vmatpush2.bf16.msra.mxu0 %v5851
    %6290 = vmatprep.subr.bf16.mxu0 %v5844
    %6291 = vmatpush2.bf16.msra.mxu0 %v5843
    %6292 = vmatprep.subr.bf16.mxu0 %v5836
    %6293 = vmatpush2.bf16.msra.mxu0 %v5835
    %6294 = vmatprep.subr.bf16.mxu0 %v5828
    %6295 = vmatpush2.bf16.msra.mxu0 %v5827
    %6296 = vmatprep.subr.bf16.mxu0 %v5820
    %6297 = vmatpush2.bf16.msra.mxu0 %v5819
    %6298 = vmatprep.subr.bf16.mxu0 %v5812
    %6299 = vmatpush2.bf16.msra.mxu0 %v5811
    %6300 = vmatprep.subr.bf16.mxu0 %v5804
    %6301 = vmatpush2.bf16.msra.mxu0 %v5803
    %6302 = vmatprep.subr.bf16.mxu0 %v5796
    %6303 = vmatpush2.bf16.msra.mxu0 %v5795
    %6304 = vmatprep.mubr.bf16.mxu0 %v4787
    %6305 = vmatmul.mubr.bf16.gmra.mxu0 %v4786
    %v6306 = vpop.f32.mrf.mxu0
    %v6307 = vadd.f32 %v6254, %v6306
    %v6308 = vpop.f32.mrf.mxu0
    %v6309 = vadd.f32 %v6256, %v6308
    %v6310 = vpop.f32.mrf.mxu0
    %v6311 = vadd.f32 %v6258, %v6310
    %v6312 = vpop.f32.mrf.mxu0
    %v6313 = vadd.f32 %v6260, %v6312
    %6314 = vmatprep.mubr.bf16.mxu0 %v4791
    %6315 = vmatmul.mubr.bf16.gmra.mxu0 %v4790
    %v6316 = vpop.f32.mrf.mxu0
    %v6317 = vadd.f32 %v6264, %v6316
    %v6318 = vpop.f32.mrf.mxu0
    %v6319 = vadd.f32 %v6266, %v6318
    %v6320 = vpop.f32.mrf.mxu0
    %v6321 = vadd.f32 %v6268, %v6320
    %v6322 = vpop.f32.mrf.mxu0
    %v6323 = vadd.f32 %v6270, %v6322
    %6324 = vdwg.mxu0
    %6325 = vmatprep.subr.bf16.mxu0 %v5662
    %6326 = vmatpush1.bf16.msra.mxu0 %v5661
    %6327 = vmatprep.subr.bf16.mxu0 %v5654
    %6328 = vmatpush1.bf16.msra.mxu0 %v5653
    %6329 = vmatprep.subr.bf16.mxu0 %v5646
    %6330 = vmatpush1.bf16.msra.mxu0 %v5645
    %6331 = vmatprep.subr.bf16.mxu0 %v5638
    %6332 = vmatpush1.bf16.msra.mxu0 %v5637
    %6333 = vmatprep.subr.bf16.mxu0 %v5630
    %6334 = vmatpush1.bf16.msra.mxu0 %v5629
    %6335 = vmatprep.subr.bf16.mxu0 %v5622
    %6336 = vmatpush1.bf16.msra.mxu0 %v5621
    %6337 = vmatprep.subr.bf16.mxu0 %v5614
    %6338 = vmatpush1.bf16.msra.mxu0 %v5613
    %6339 = vmatprep.subr.bf16.mxu0 %v5606
    %6340 = vmatpush1.bf16.msra.mxu0 %v5605
    %6341 = vmatprep.subr.bf16.mxu0 %v5726
    %6342 = vmatpush2.bf16.msra.mxu0 %v5725
    %6343 = vmatprep.subr.bf16.mxu0 %v5718
    %6344 = vmatpush2.bf16.msra.mxu0 %v5717
    %6345 = vmatprep.subr.bf16.mxu0 %v5710
    %6346 = vmatpush2.bf16.msra.mxu0 %v5709
    %6347 = vmatprep.subr.bf16.mxu0 %v5702
    %6348 = vmatpush2.bf16.msra.mxu0 %v5701
    %6349 = vmatprep.subr.bf16.mxu0 %v5694
    %6350 = vmatpush2.bf16.msra.mxu0 %v5693
    %6351 = vmatprep.subr.bf16.mxu0 %v5686
    %6352 = vmatpush2.bf16.msra.mxu0 %v5685
    %6353 = vmatprep.subr.bf16.mxu0 %v5678
    %6354 = vmatpush2.bf16.msra.mxu0 %v5677
    %6355 = vmatprep.subr.bf16.mxu0 %v5670
    %6356 = vmatpush2.bf16.msra.mxu0 %v5669
    %6357 = vmatprep.mubr.bf16.mxu0 %v4785
    %6358 = vmatmul.mubr.bf16.gmra.mxu0 %v4784
    %v6359 = vpop.f32.mrf.mxu0
    %v6360 = vadd.f32 %v4812, %v6359
    %v6361 = vpop.f32.mrf.mxu0
    %v6362 = vadd.f32 %v4816, %v6361
    %v6363 = vpop.f32.mrf.mxu0
    %v6364 = vadd.f32 %v4812, %v6363
    %v6365 = vpop.f32.mrf.mxu0
    %v6366 = vadd.f32 %v4816, %v6365
    %6367 = vmatprep.mubr.bf16.mxu0 %v4789
    %6368 = vmatmul.mubr.bf16.gmra.mxu0 %v4788
    %v6369 = vpop.f32.mrf.mxu0
    %v6370 = vadd.f32 %v4812, %v6369
    %v6371 = vpop.f32.mrf.mxu0
    %v6372 = vadd.f32 %v4816, %v6371
    %v6373 = vpop.f32.mrf.mxu0
    %v6374 = vadd.f32 %v4812, %v6373
    %v6375 = vpop.f32.mrf.mxu0
    %v6376 = vadd.f32 %v4816, %v6375
    %6377 = vdwg.mxu0
    %6378 = vmatprep.subr.bf16.mxu0 %v5790
    %6379 = vmatpush1.bf16.msra.mxu0 %v5789
    %6380 = vmatprep.subr.bf16.mxu0 %v5782
    %6381 = vmatpush1.bf16.msra.mxu0 %v5781
    %6382 = vmatprep.subr.bf16.mxu0 %v5774
    %6383 = vmatpush1.bf16.msra.mxu0 %v5773
    %6384 = vmatprep.subr.bf16.mxu0 %v5766
    %6385 = vmatpush1.bf16.msra.mxu0 %v5765
    %6386 = vmatprep.subr.bf16.mxu0 %v5758
    %6387 = vmatpush1.bf16.msra.mxu0 %v5757
    %6388 = vmatprep.subr.bf16.mxu0 %v5750
    %6389 = vmatpush1.bf16.msra.mxu0 %v5749
    %6390 = vmatprep.subr.bf16.mxu0 %v5742
    %6391 = vmatpush1.bf16.msra.mxu0 %v5741
    %6392 = vmatprep.subr.bf16.mxu0 %v5734
    %6393 = vmatpush1.bf16.msra.mxu0 %v5733
    %6394 = vmatprep.subr.bf16.mxu0 %v5854
    %6395 = vmatpush2.bf16.msra.mxu0 %v5853
    %6396 = vmatprep.subr.bf16.mxu0 %v5846
    %6397 = vmatpush2.bf16.msra.mxu0 %v5845
    %6398 = vmatprep.subr.bf16.mxu0 %v5838
    %6399 = vmatpush2.bf16.msra.mxu0 %v5837
    %6400 = vmatprep.subr.bf16.mxu0 %v5830
    %6401 = vmatpush2.bf16.msra.mxu0 %v5829
    %6402 = vmatprep.subr.bf16.mxu0 %v5822
    %6403 = vmatpush2.bf16.msra.mxu0 %v5821
    %6404 = vmatprep.subr.bf16.mxu0 %v5814
    %6405 = vmatpush2.bf16.msra.mxu0 %v5813
    %6406 = vmatprep.subr.bf16.mxu0 %v5806
    %6407 = vmatpush2.bf16.msra.mxu0 %v5805
    %6408 = vmatprep.subr.bf16.mxu0 %v5798
    %6409 = vmatpush2.bf16.msra.mxu0 %v5797
    %6410 = vmatprep.mubr.bf16.mxu0 %v4787
    %6411 = vmatmul.mubr.bf16.gmra.mxu0 %v4786
    %v6412 = vpop.f32.mrf.mxu0
    %v6413 = vadd.f32 %v6360, %v6412
    %v6414 = vpop.f32.mrf.mxu0
    %v6415 = vadd.f32 %v6362, %v6414
    %v6416 = vpop.f32.mrf.mxu0
    %v6417 = vadd.f32 %v6364, %v6416
    %v6418 = vpop.f32.mrf.mxu0
    %v6419 = vadd.f32 %v6366, %v6418
    %6420 = vmatprep.mubr.bf16.mxu0 %v4791
    %6421 = vmatmul.mubr.bf16.gmra.mxu0 %v4790
    %v6422 = vpop.f32.mrf.mxu0
    %v6423 = vadd.f32 %v6370, %v6422
    %v6424 = vpop.f32.mrf.mxu0
    %v6425 = vadd.f32 %v6372, %v6424
    %v6426 = vpop.f32.mrf.mxu0
    %v6427 = vadd.f32 %v6374, %v6426
    %v6428 = vpop.f32.mrf.mxu0
    %v6429 = vadd.f32 %v6376, %v6428
    %6430 = vdwg.mxu0
    %6431 = vmatprep.subr.bf16.mxu0 %v5664
    %6432 = vmatpush1.bf16.msra.mxu0 %v5663
    %6433 = vmatprep.subr.bf16.mxu0 %v5656
    %6434 = vmatpush1.bf16.msra.mxu0 %v5655
    %6435 = vmatprep.subr.bf16.mxu0 %v5648
    %6436 = vmatpush1.bf16.msra.mxu0 %v5647
    %6437 = vmatprep.subr.bf16.mxu0 %v5640
    %6438 = vmatpush1.bf16.msra.mxu0 %v5639
    %6439 = vmatprep.subr.bf16.mxu0 %v5632
    %6440 = vmatpush1.bf16.msra.mxu0 %v5631
    %6441 = vmatprep.subr.bf16.mxu0 %v5624
    %6442 = vmatpush1.bf16.msra.mxu0 %v5623
    %6443 = vmatprep.subr.bf16.mxu0 %v5616
    %6444 = vmatpush1.bf16.msra.mxu0 %v5615
    %6445 = vmatprep.subr.bf16.mxu0 %v5608
    %6446 = vmatpush1.bf16.msra.mxu0 %v5607
    %6447 = vmatprep.subr.bf16.mxu0 %v5728
    %6448 = vmatpush2.bf16.msra.mxu0 %v5727
    %6449 = vmatprep.subr.bf16.mxu0 %v5720
    %6450 = vmatpush2.bf16.msra.mxu0 %v5719
    %6451 = vmatprep.subr.bf16.mxu0 %v5712
    %6452 = vmatpush2.bf16.msra.mxu0 %v5711
    %6453 = vmatprep.subr.bf16.mxu0 %v5704
    %6454 = vmatpush2.bf16.msra.mxu0 %v5703
    %6455 = vmatprep.subr.bf16.mxu0 %v5696
    %6456 = vmatpush2.bf16.msra.mxu0 %v5695
    %6457 = vmatprep.subr.bf16.mxu0 %v5688
    %6458 = vmatpush2.bf16.msra.mxu0 %v5687
    %6459 = vmatprep.subr.bf16.mxu0 %v5680
    %6460 = vmatpush2.bf16.msra.mxu0 %v5679
    %6461 = vmatprep.subr.bf16.mxu0 %v5672
    %6462 = vmatpush2.bf16.msra.mxu0 %v5671
    %6463 = vmatprep.mubr.bf16.mxu0 %v4785
    %6464 = vmatmul.mubr.bf16.gmra.mxu0 %v4784
    %v6465 = vpop.f32.mrf.mxu0
    %v6466 = vadd.f32 %v4820, %v6465
    %v6467 = vpop.f32.mrf.mxu0
    %v6468 = vadd.f32 %v4824, %v6467
    %v6469 = vpop.f32.mrf.mxu0
    %v6470 = vadd.f32 %v4820, %v6469
    %v6471 = vpop.f32.mrf.mxu0
    %v6472 = vadd.f32 %v4824, %v6471
    %6473 = vmatprep.mubr.bf16.mxu0 %v4789
    %6474 = vmatmul.mubr.bf16.gmra.mxu0 %v4788
    %v6475 = vpop.f32.mrf.mxu0
    %v6476 = vadd.f32 %v4820, %v6475
    %v6477 = vpop.f32.mrf.mxu0
    %v6478 = vadd.f32 %v4824, %v6477
    %v6479 = vpop.f32.mrf.mxu0
    %v6480 = vadd.f32 %v4820, %v6479
    %v6481 = vpop.f32.mrf.mxu0
    %v6482 = vadd.f32 %v4824, %v6481
    %6483 = vdwg.mxu0
    %6484 = vmatprep.subr.bf16.mxu0 %v5792
    %6485 = vmatpush1.bf16.msra.mxu0 %v5791
    %6486 = vmatprep.subr.bf16.mxu0 %v5784
    %6487 = vmatpush1.bf16.msra.mxu0 %v5783
    %6488 = vmatprep.subr.bf16.mxu0 %v5776
    %6489 = vmatpush1.bf16.msra.mxu0 %v5775
    %6490 = vmatprep.subr.bf16.mxu0 %v5768
    %6491 = vmatpush1.bf16.msra.mxu0 %v5767
    %6492 = vmatprep.subr.bf16.mxu0 %v5760
    %6493 = vmatpush1.bf16.msra.mxu0 %v5759
    %6494 = vmatprep.subr.bf16.mxu0 %v5752
    %6495 = vmatpush1.bf16.msra.mxu0 %v5751
    %6496 = vmatprep.subr.bf16.mxu0 %v5744
    %6497 = vmatpush1.bf16.msra.mxu0 %v5743
    %6498 = vmatprep.subr.bf16.mxu0 %v5736
    %6499 = vmatpush1.bf16.msra.mxu0 %v5735
    %6500 = vmatprep.subr.bf16.mxu0 %v5856
    %6501 = vmatpush2.bf16.msra.mxu0 %v5855
    %6502 = vmatprep.subr.bf16.mxu0 %v5848
    %6503 = vmatpush2.bf16.msra.mxu0 %v5847
    %6504 = vmatprep.subr.bf16.mxu0 %v5840
    %6505 = vmatpush2.bf16.msra.mxu0 %v5839
    %6506 = vmatprep.subr.bf16.mxu0 %v5832
    %6507 = vmatpush2.bf16.msra.mxu0 %v5831
    %6508 = vmatprep.subr.bf16.mxu0 %v5824
    %6509 = vmatpush2.bf16.msra.mxu0 %v5823
    %6510 = vmatprep.subr.bf16.mxu0 %v5816
    %6511 = vmatpush2.bf16.msra.mxu0 %v5815
    %6512 = vmatprep.subr.bf16.mxu0 %v5808
    %6513 = vmatpush2.bf16.msra.mxu0 %v5807
    %6514 = vmatprep.subr.bf16.mxu0 %v5800
    %6515 = vmatpush2.bf16.msra.mxu0 %v5799
    %6516 = vmatprep.mubr.bf16.mxu0 %v4787
    %6517 = vmatmul.mubr.bf16.gmra.mxu0 %v4786
    %v6518 = vpop.f32.mrf.mxu0
    %v6519 = vadd.f32 %v6466, %v6518
    %v6520 = vpop.f32.mrf.mxu0
    %v6521 = vadd.f32 %v6468, %v6520
    %v6522 = vpop.f32.mrf.mxu0
    %v6523 = vadd.f32 %v6470, %v6522
    %v6524 = vpop.f32.mrf.mxu0
    %v6525 = vadd.f32 %v6472, %v6524
    %6526 = vmatprep.mubr.bf16.mxu0 %v4791
    %6527 = vmatmul.mubr.bf16.gmra.mxu0 %v4790
    %v6528 = vpop.f32.mrf.mxu0
    %v6529 = vadd.f32 %v6476, %v6528
    %v6530 = vpop.f32.mrf.mxu0
    %v6531 = vadd.f32 %v6478, %v6530
    %v6532 = vpop.f32.mrf.mxu0
    %v6533 = vadd.f32 %v6480, %v6532
    %v6534 = vpop.f32.mrf.mxu0
    %v6535 = vadd.f32 %v6482, %v6534
    %6536 = vdwg.mxu0
    %v6537 = vxor.u32 %v6413, 2147483648
    %v6538 = vxor.u32 %v6415, 2147483648
    %v6539 = vxor.u32 %v6519, 2147483648
    %v6540 = vxor.u32 %v6521, 2147483648
    %v6541 = vxor.u32 %v6417, 2147483648
    %v6542 = vxor.u32 %v6419, 2147483648
    %v6543 = vxor.u32 %v6523, 2147483648
    %v6544 = vxor.u32 %v6525, 2147483648
    %v6545 = vxor.u32 %v6423, 2147483648
    %v6546 = vxor.u32 %v6425, 2147483648
    %v6547 = vxor.u32 %v6529, 2147483648
    %v6548 = vxor.u32 %v6531, 2147483648
    %v6549 = vxor.u32 %v6427, 2147483648
    %v6550 = vxor.u32 %v6429, 2147483648
    %v6551 = vxor.u32 %v6533, 2147483648
    %v6552 = vxor.u32 %v6535, 2147483648
    %v6553 = vmul.f32 %v6537, 1.442695
    %v6554 = vpow.pop %v6553
    %v6555 = vmul.f32 %v6538, 1.442695
    %v6556 = vpow.pop %v6555
    %v6557 = vmul.f32 %v6539, 1.442695
    %v6558 = vpow.pop %v6557
    %v6559 = vmul.f32 %v6540, 1.442695
    %v6560 = vpow.pop %v6559
    %v6561 = vmul.f32 %v6541, 1.442695
    %v6562 = vpow.pop %v6561
    %v6563 = vmul.f32 %v6542, 1.442695
    %v6564 = vpow.pop %v6563
    %v6565 = vmul.f32 %v6543, 1.442695
    %v6566 = vpow.pop %v6565
    %v6567 = vmul.f32 %v6544, 1.442695
    %v6568 = vpow.pop %v6567
    %v6569 = vmul.f32 %v6545, 1.442695
    %v6570 = vpow.pop %v6569
    %v6571 = vmul.f32 %v6546, 1.442695
    %v6572 = vpow.pop %v6571
    %v6573 = vmul.f32 %v6547, 1.442695
    %v6574 = vpow.pop %v6573
    %v6575 = vmul.f32 %v6548, 1.442695
    %v6576 = vpow.pop %v6575
    %v6577 = vmul.f32 %v6549, 1.442695
    %v6578 = vpow.pop %v6577
    %v6579 = vmul.f32 %v6550, 1.442695
    %v6580 = vpow.pop %v6579
    %v6581 = vmul.f32 %v6551, 1.442695
    %v6582 = vpow.pop %v6581
    %v6583 = vmul.f32 %v6552, 1.442695
    %v6584 = vpow.pop %v6583
    %v6585 = vadd.f32 %v6554, 1.0
    %v6586 = vadd.f32 %v6556, 1.0
    %v6587 = vadd.f32 %v6558, 1.0
    %v6588 = vadd.f32 %v6560, 1.0
    %v6589 = vadd.f32 %v6562, 1.0
    %v6590 = vadd.f32 %v6564, 1.0
    %v6591 = vadd.f32 %v6566, 1.0
    %v6592 = vadd.f32 %v6568, 1.0
    %v6593 = vadd.f32 %v6570, 1.0
    %v6594 = vadd.f32 %v6572, 1.0
    %v6595 = vadd.f32 %v6574, 1.0
    %v6596 = vadd.f32 %v6576, 1.0
    %v6597 = vadd.f32 %v6578, 1.0
    %v6598 = vadd.f32 %v6580, 1.0
    %v6599 = vadd.f32 %v6582, 1.0
    %v6600 = vadd.f32 %v6584, 1.0
    %v6601 = vrcp.pop %v6585
    %v6602 = vmul.f32 1.0, %v6601
    %v6603 = vrcp.pop %v6586
    %v6604 = vmul.f32 1.0, %v6603
    %v6605 = vrcp.pop %v6587
    %v6606 = vmul.f32 1.0, %v6605
    %v6607 = vrcp.pop %v6588
    %v6608 = vmul.f32 1.0, %v6607
    %v6609 = vrcp.pop %v6589
    %v6610 = vmul.f32 1.0, %v6609
    %v6611 = vrcp.pop %v6590
    %v6612 = vmul.f32 1.0, %v6611
    %v6613 = vrcp.pop %v6591
    %v6614 = vmul.f32 1.0, %v6613
    %v6615 = vrcp.pop %v6592
    %v6616 = vmul.f32 1.0, %v6615
    %v6617 = vrcp.pop %v6593
    %v6618 = vmul.f32 1.0, %v6617
    %v6619 = vrcp.pop %v6594
    %v6620 = vmul.f32 1.0, %v6619
    %v6621 = vrcp.pop %v6595
    %v6622 = vmul.f32 1.0, %v6621
    %v6623 = vrcp.pop %v6596
    %v6624 = vmul.f32 1.0, %v6623
    %v6625 = vrcp.pop %v6597
    %v6626 = vmul.f32 1.0, %v6625
    %v6627 = vrcp.pop %v6598
    %v6628 = vmul.f32 1.0, %v6627
    %v6629 = vrcp.pop %v6599
    %v6630 = vmul.f32 1.0, %v6629
    %v6631 = vrcp.pop %v6600
    %v6632 = vmul.f32 1.0, %v6631
    %v6633 = vmul.f32 %v6201, %v6602
    %v6634 = vmul.f32 %v6203, %v6604
    %v6635 = vmul.f32 %v6307, %v6606
    %v6636 = vmul.f32 %v6309, %v6608
    %v6637 = vmul.f32 %v6205, %v6610
    %v6638 = vmul.f32 %v6207, %v6612
    %v6639 = vmul.f32 %v6311, %v6614
    %v6640 = vmul.f32 %v6313, %v6616
    %v6641 = vmul.f32 %v6211, %v6618
    %v6642 = vmul.f32 %v6213, %v6620
    %v6643 = vmul.f32 %v6317, %v6622
    %v6644 = vmul.f32 %v6319, %v6624
    %v6645 = vmul.f32 %v6215, %v6626
    %v6646 = vmul.f32 %v6217, %v6628
    %v6647 = vmul.f32 %v6321, %v6630
    %v6648 = vmul.f32 %v6323, %v6632
    %v6649 = vpack.c.bf16 %v6637, %v6633
    %v6650 = vpack.c.bf16 %v6638, %v6634
    %v6651 = vpack.c.bf16 %v6639, %v6635
    %v6652 = vpack.c.bf16 %v6640, %v6636
    %v6653 = vpack.c.bf16 %v6645, %v6641
    %v6654 = vpack.c.bf16 %v6646, %v6642
    %v6655 = vpack.c.bf16 %v6647, %v6643
    %v6656 = vpack.c.bf16 %v6648, %v6644
    %v6658 = vlaneseq
    %v6659 = vshrl.u32 %v6658, 7
    %v6660 = vsub.s32 0, %v6659
    %v6661 = vrot.slane %v910, %v6660
    %v6727 = vunpack.c.l.b16 %v841
    %v6728 = vunpack.c.l.b16 %v842
    %v6729 = vunpack.c.l.b16 %v843
    %v6730 = vunpack.c.l.b16 %v844
    %v6731 = vunpack.c.l.b16 %v845
    %v6732 = vunpack.c.l.b16 %v846
    %v6733 = vunpack.c.l.b16 %v847
    %v6734 = vunpack.c.l.b16 %v848
    %v6735 = vunpack.c.l.b16 %v849
    %v6736 = vunpack.c.l.b16 %v850
    %v6737 = vunpack.c.l.b16 %v851
    %v6738 = vunpack.c.l.b16 %v852
    %v6739 = vunpack.c.l.b16 %v853
    %v6740 = vunpack.c.l.b16 %v854
    %v6741 = vunpack.c.l.b16 %v855
    %v6742 = vunpack.c.l.b16 %v856
    %v6743 = vunpack.c.l.b16 %v857
    %v6744 = vunpack.c.l.b16 %v858
    %v6745 = vunpack.c.l.b16 %v859
    %v6746 = vunpack.c.l.b16 %v860
    %v6747 = vunpack.c.l.b16 %v861
    %v6748 = vunpack.c.l.b16 %v862
    %v6749 = vunpack.c.l.b16 %v863
    %v6750 = vunpack.c.l.b16 %v864
    %v6751 = vunpack.c.l.b16 %v865
    %v6752 = vunpack.c.l.b16 %v866
    %v6753 = vunpack.c.l.b16 %v867
    %v6754 = vunpack.c.l.b16 %v868
    %v6755 = vunpack.c.l.b16 %v869
    %v6756 = vunpack.c.l.b16 %v870
    %v6757 = vunpack.c.l.b16 %v871
    %v6758 = vunpack.c.l.b16 %v872
    %v6759 = vunpack.c.l.b16 %v873
    %v6760 = vunpack.c.l.b16 %v874
    %v6761 = vunpack.c.l.b16 %v875
    %v6762 = vunpack.c.l.b16 %v876
    %v6763 = vunpack.c.l.b16 %v877
    %v6764 = vunpack.c.l.b16 %v878
    %v6765 = vunpack.c.l.b16 %v879
    %v6766 = vunpack.c.l.b16 %v880
    %v6767 = vunpack.c.l.b16 %v881
    %v6768 = vunpack.c.l.b16 %v882
    %v6769 = vunpack.c.l.b16 %v883
    %v6770 = vunpack.c.l.b16 %v884
    %v6771 = vunpack.c.l.b16 %v885
    %v6772 = vunpack.c.l.b16 %v886
    %v6773 = vunpack.c.l.b16 %v887
    %v6774 = vunpack.c.l.b16 %v888
    %v6775 = vunpack.c.l.b16 %v889
    %v6776 = vunpack.c.l.b16 %v890
    %v6777 = vunpack.c.l.b16 %v891
    %v6778 = vunpack.c.l.b16 %v892
    %v6779 = vunpack.c.l.b16 %v893
    %v6780 = vunpack.c.l.b16 %v894
    %v6781 = vunpack.c.l.b16 %v895
    %v6782 = vunpack.c.l.b16 %v896
    %v6783 = vunpack.c.l.b16 %v897
    %v6784 = vunpack.c.l.b16 %v898
    %v6785 = vunpack.c.l.b16 %v899
    %v6786 = vunpack.c.l.b16 %v900
    %v6787 = vunpack.c.l.b16 %v901
    %v6788 = vunpack.c.l.b16 %v902
    %v6789 = vunpack.c.l.b16 %v903
    %v6790 = vunpack.c.l.b16 %v904
    %v6791 = vpack.c.b16 %v6728, %v6727
    %v6792 = vpack.c.b16 %v6730, %v6729
    %v6793 = vpack.c.b16 %v6732, %v6731
    %v6794 = vpack.c.b16 %v6734, %v6733
    %v6795 = vpack.c.b16 %v6736, %v6735
    %v6796 = vpack.c.b16 %v6738, %v6737
    %v6797 = vpack.c.b16 %v6740, %v6739
    %v6798 = vpack.c.b16 %v6742, %v6741
    %v6799 = vpack.c.b16 %v6744, %v6743
    %v6800 = vpack.c.b16 %v6746, %v6745
    %v6801 = vpack.c.b16 %v6748, %v6747
    %v6802 = vpack.c.b16 %v6750, %v6749
    %v6803 = vpack.c.b16 %v6752, %v6751
    %v6804 = vpack.c.b16 %v6754, %v6753
    %v6805 = vpack.c.b16 %v6756, %v6755
    %v6806 = vpack.c.b16 %v6758, %v6757
    %v6807 = vpack.c.b16 %v6760, %v6759
    %v6808 = vpack.c.b16 %v6762, %v6761
    %v6809 = vpack.c.b16 %v6764, %v6763
    %v6810 = vpack.c.b16 %v6766, %v6765
    %v6811 = vpack.c.b16 %v6768, %v6767
    %v6812 = vpack.c.b16 %v6770, %v6769
    %v6813 = vpack.c.b16 %v6772, %v6771
    %v6814 = vpack.c.b16 %v6774, %v6773
    %v6815 = vpack.c.b16 %v6776, %v6775
    %v6816 = vpack.c.b16 %v6778, %v6777
    %v6817 = vpack.c.b16 %v6780, %v6779
    %v6818 = vpack.c.b16 %v6782, %v6781
    %v6819 = vpack.c.b16 %v6784, %v6783
    %v6820 = vpack.c.b16 %v6786, %v6785
    %v6821 = vpack.c.b16 %v6788, %v6787
    %v6822 = vpack.c.b16 %v6790, %v6789
    %6855 = vmatprep.subr.bf16.mxu0 0
    %6856 = vmatpush1.bf16.msra.mxu0 %v6798
    %6857 = vmatprep.subr.bf16.mxu0 0
    %6858 = vmatpush1.bf16.msra.mxu0 %v6797
    %6859 = vmatprep.subr.bf16.mxu0 0
    %6860 = vmatpush1.bf16.msra.mxu0 %v6796
    %6861 = vmatprep.subr.bf16.mxu0 0
    %6862 = vmatpush1.bf16.msra.mxu0 %v6795
    %6863 = vmatprep.subr.bf16.mxu0 0
    %6864 = vmatpush1.bf16.msra.mxu0 %v6794
    %6865 = vmatprep.subr.bf16.mxu0 0
    %6866 = vmatpush1.bf16.msra.mxu0 %v6793
    %6867 = vmatprep.subr.bf16.mxu0 0
    %6868 = vmatpush1.bf16.msra.mxu0 %v6792
    %6869 = vmatprep.subr.bf16.mxu0 0
    %6870 = vmatpush1.bf16.msra.mxu0 %v6791
    %6871 = vmatprep.subr.bf16.mxu0 0
    %6872 = vmatpush2.bf16.msra.mxu0 %v6806
    %6873 = vmatprep.subr.bf16.mxu0 0
    %6874 = vmatpush2.bf16.msra.mxu0 %v6805
    %6875 = vmatprep.subr.bf16.mxu0 0
    %6876 = vmatpush2.bf16.msra.mxu0 %v6804
    %6877 = vmatprep.subr.bf16.mxu0 0
    %6878 = vmatpush2.bf16.msra.mxu0 %v6803
    %6879 = vmatprep.subr.bf16.mxu0 0
    %6880 = vmatpush2.bf16.msra.mxu0 %v6802
    %6881 = vmatprep.subr.bf16.mxu0 0
    %6882 = vmatpush2.bf16.msra.mxu0 %v6801
    %6883 = vmatprep.subr.bf16.mxu0 0
    %6884 = vmatpush2.bf16.msra.mxu0 %v6800
    %6885 = vmatprep.subr.bf16.mxu0 0
    %6886 = vmatpush2.bf16.msra.mxu0 %v6799
    %6887 = vmatprep.mubr.bf16.mxu0 %v6650
    %6888 = vmatmul.mubr.bf16.gmra.mxu0 %v6649
    %v6889 = vpop.f32.mrf.mxu0
    %v6890 = vadd.f32 %v6661, %v6889
    %v6891 = vpop.f32.mrf.mxu0
    %v6892 = vpop.f32.mrf.mxu0
    %v6893 = vadd.f32 %v6661, %v6892
    %v6894 = vpop.f32.mrf.mxu0
    %6895 = vmatprep.mubr.bf16.mxu0 %v6654
    %6896 = vmatmul.mubr.bf16.gmra.mxu0 %v6653
    %v6897 = vpop.f32.mrf.mxu0
    %v6898 = vadd.f32 %v6661, %v6897
    %v6899 = vpop.f32.mrf.mxu0
    %v6900 = vpop.f32.mrf.mxu0
    %v6901 = vadd.f32 %v6661, %v6900
    %v6902 = vpop.f32.mrf.mxu0
    %6903 = vdwg.mxu0
    %6904 = vmatprep.subr.bf16.mxu0 0
    %6905 = vmatpush1.bf16.msra.mxu0 %v6814
    %6906 = vmatprep.subr.bf16.mxu0 0
    %6907 = vmatpush1.bf16.msra.mxu0 %v6813
    %6908 = vmatprep.subr.bf16.mxu0 0
    %6909 = vmatpush1.bf16.msra.mxu0 %v6812
    %6910 = vmatprep.subr.bf16.mxu0 0
    %6911 = vmatpush1.bf16.msra.mxu0 %v6811
    %6912 = vmatprep.subr.bf16.mxu0 0
    %6913 = vmatpush1.bf16.msra.mxu0 %v6810
    %6914 = vmatprep.subr.bf16.mxu0 0
    %6915 = vmatpush1.bf16.msra.mxu0 %v6809
    %6916 = vmatprep.subr.bf16.mxu0 0
    %6917 = vmatpush1.bf16.msra.mxu0 %v6808
    %6918 = vmatprep.subr.bf16.mxu0 0
    %6919 = vmatpush1.bf16.msra.mxu0 %v6807
    %6920 = vmatprep.subr.bf16.mxu0 0
    %6921 = vmatpush2.bf16.msra.mxu0 %v6822
    %6922 = vmatprep.subr.bf16.mxu0 0
    %6923 = vmatpush2.bf16.msra.mxu0 %v6821
    %6924 = vmatprep.subr.bf16.mxu0 0
    %6925 = vmatpush2.bf16.msra.mxu0 %v6820
    %6926 = vmatprep.subr.bf16.mxu0 0
    %6927 = vmatpush2.bf16.msra.mxu0 %v6819
    %6928 = vmatprep.subr.bf16.mxu0 0
    %6929 = vmatpush2.bf16.msra.mxu0 %v6818
    %6930 = vmatprep.subr.bf16.mxu0 0
    %6931 = vmatpush2.bf16.msra.mxu0 %v6817
    %6932 = vmatprep.subr.bf16.mxu0 0
    %6933 = vmatpush2.bf16.msra.mxu0 %v6816
    %6934 = vmatprep.subr.bf16.mxu0 0
    %6935 = vmatpush2.bf16.msra.mxu0 %v6815
    %6936 = vmatprep.mubr.bf16.mxu0 %v6652
    %6937 = vmatmul.mubr.bf16.gmra.mxu0 %v6651
    %v6938 = vpop.f32.mrf.mxu0
    %v6939 = vadd.f32 %v6890, %v6938
    %v6940 = vpop.f32.mrf.mxu0
    %v6941 = vpop.f32.mrf.mxu0
    %v6942 = vadd.f32 %v6893, %v6941
    %v6943 = vpop.f32.mrf.mxu0
    %6944 = vmatprep.mubr.bf16.mxu0 %v6656
    %6945 = vmatmul.mubr.bf16.gmra.mxu0 %v6655
    %v6946 = vpop.f32.mrf.mxu0
    %v6947 = vadd.f32 %v6898, %v6946
    %v6948 = vpop.f32.mrf.mxu0
    %v6949 = vpop.f32.mrf.mxu0
    %v6950 = vadd.f32 %v6901, %v6949
    %v6951 = vpop.f32.mrf.mxu0
    %6952 = vdwg.mxu0
    %v6953 = vadd.f32 %v6939, %v6942
    %v6954 = vrot.slane %v6953, 4
    %v6955 = vadd.f32 %v6953, %v6954
    %v6956 = vrot.slane %v6955, 2
    %v6957 = vadd.f32 %v6955, %v6956
    %v6958 = vrot.slane %v6957, 1
    %v6959 = vadd.f32 %v6957, %v6958
    %v6960 = vadd.f32 %v6947, %v6950
    %v6961 = vrot.slane %v6960, 4
    %v6962 = vadd.f32 %v6960, %v6961
    %v6963 = vrot.slane %v6962, 2
    %v6964 = vadd.f32 %v6962, %v6963
    %v6965 = vrot.slane %v6964, 1
    %v6966 = vadd.f32 %v6964, %v6965
    %v6967 = vrcp.pop 16.0
    %v6968 = vmul.f32 %v6959, %v6967
    %v6969 = vmul.f32 %v6966, %v6967
    %vm6972 = vcmask 1041409
    %v6973 = vsel %vm6972, %v6969, %v6968
    %6975 = vst [vmem:[#allocation13] sm:$0x3] %v6973
    // Predicated region
    $region50: #{tpu_custom_call.1} parent=1 // pred_check
      _
    $region51: #{tpu_custom_call.1} parent=1 // pred_check_branch
      %6977 = sbr.rel (0) target = $region53
    $region52: #{tpu_custom_call.1} parent=1 // pred_region
      %s6979 = ssub.s32 32, 32
      %6980 = vsyncadd [#allocation4], %s6979
      %s6982 = sshll.u32 [#allocation13], 4
      %s6983 = int_to_ptr.vmem [resolvable:$true] %s6982
      %6985 = dma.vmem_to_hbm [thread:$0]  %s6983, 32, %s6, [#allocation4]
    $region53: #{tpu_custom_call.1} parent=1 // pred_fallthru
      _
    // Predicated region
    $region54: #{tpu_custom_call.1} parent=1 // pred_check
      _
    $region55: #{tpu_custom_call.1} parent=1 // pred_check_branch
      %6987 = sbr.rel (0) target = $region57
    $region56: #{tpu_custom_call.1} parent=1 // pred_region
      %6988 = dma.done [#allocation4], 32
    $region57: #{tpu_custom_call.1} parent=1 // pred_fallthru
      _
    %6989 = vsyncpa [#allocation3], 1
    %6990 = vsyncpa [#allocation6], 1
    %6991 = vsyncpa [#allocation9], 1
    %6992 = vsyncpa [#allocation12], 1
    %6993 = vsyncpa [#allocation4], 1

</llo_original>
